<compile_context>
chip_gen: v7x
topology: tpu7x:2x2x1
jax: 0.10.0
libtpu: 0.0.40
codegen_flags: <defaults>
</compile_context>

<pallas_src>
import functools
import math

import jax
import jax.numpy as jnp
from jax import lax
from jax.experimental import pallas as pl
from jax.experimental.pallas import tpu as pltpu

F32 = jnp.float32
ACT_DTYPE = jnp.bfloat16          # inter-kernel residual-stream dtype
NEG_INF = -1e9


def _pick_tile(dim, pref):
    """Largest divisor of `dim` that is <= pref (never a whole-array fallback)."""
    if dim <= pref:
        return dim
    for t in range(pref, 0, -1):
        if dim % t == 0:
            return t
    return dim


def _nbytes(shape, dtype):
    return math.prod(shape) * jnp.dtype(dtype).itemsize


def _vmem_limit(block_bytes):
    # 2x for double buffering + headroom; floor 32 MiB (safe on every chip),
    # soft cap below v5e/v6e physical VMEM. Demo shapes always hit the floor.
    return int(min(max(2 * block_bytes + (4 << 20), 32 << 20), 100 << 20))


def _layer_norm_f32(y, eps):
    mu = jnp.mean(y, axis=-1, keepdims=True)
    var = jnp.mean((y - mu) ** 2, axis=-1, keepdims=True)
    return (y - mu) * jax.lax.rsqrt(var + eps)


def _mha_heads(q, k, v, mask, ctx_ref, *, nhead, cdt):
    """Per-head softmax attention. q,k,v: [L*, D] in MXU dtype, mask additive f32.

    Head outputs are written straight into the VMEM scratch ctx_ref ([Lq, D] f32)
    instead of being concatenated on the lane axis.
    """
    D = q.shape[-1]
    Dh = D // nhead
    # TODO(synk): when Dh is not a multiple of 128 a head-major, 128-lane-padded
    # weight layout would remove the per-head lane-relayout on odd heads.
    for h in range(nhead):
        sl = slice(h * Dh, (h + 1) * Dh)
        # Contract axis 1 of both operands: no explicit K transpose (XLU free).
        s = lax.dot_general(q[:, sl], k[:, sl],
                            (((1,), (1,)), ((), ())),
                            preferred_element_type=F32)
        s = s + mask
        s = s - jnp.max(s, axis=-1, keepdims=True)
        p = jnp.exp(s)
        p = p * pl.reciprocal(jnp.sum(p, axis=-1, keepdims=True), approx=True)
        ctx_ref[:, sl] = jnp.dot(p.astype(cdt), v[:, sl],
                                 preferred_element_type=F32)


# ---------------------------------------------------------------------------
# Kernel 1: one-time linear projection (mem @ Wkv + b) for cross-attention K/V
# ---------------------------------------------------------------------------

def _linear_kernel(x_ref, w_ref, b_ref, o_ref):
    cdt = w_ref.dtype
    o_ref[...] = (jnp.dot(x_ref[...].astype(cdt), w_ref[...],
                          preferred_element_type=F32)
                  + b_ref[...]).astype(o_ref.dtype)


def project_kv(mem, wkv, bkv, *, out_dtype=ACT_DTYPE, tm_pref=512):
    """Layer-invariant K|V projection of a cross-attention memory. Run ONCE."""
    B, L, D = mem.shape
    D2 = wkv.shape[1]
    M = B * L
    tm = _pick_tile(M, tm_pref)
    const = lambda i: (0, 0)
    blk_bytes = (_nbytes((tm, D), mem.dtype) + _nbytes((D, D2), wkv.dtype)
                 + _nbytes((1, D2), F32) + _nbytes((tm, D2), out_dtype))
    out = pl.pallas_call(
        _linear_kernel,
        out_shape=jax.ShapeDtypeStruct((M, D2), out_dtype),
        grid=(M // tm,),
        in_specs=[pl.BlockSpec((tm, D), lambda i: (i, 0)),
                  pl.BlockSpec((D, D2), const),       # wkv (VMEM-resident)
                  pl.BlockSpec((1, D2), const)],      # bkv
        out_specs=pl.BlockSpec((tm, D2), lambda i: (i, 0)),
        compiler_params=pltpu.CompilerParams(
            dimension_semantics=("parallel",),
            vmem_limit_bytes=_vmem_limit(blk_bytes)),
    )(mem.reshape(M, D), wkv, bkv)
    return out.reshape(B, L, D2)


# ---------------------------------------------------------------------------
# Kernel 2: fused self-attention (QKV proj -> MHA -> out proj -> +res -> LN)
#            x is used both as query and memory (single DMA per grid step).
# ---------------------------------------------------------------------------

def _self_attn_ln_kernel(x_ref, mask_ref, wq_ref, bq_ref, wkv_ref, bkv_ref,
                         wo_ref, bo_ref, g_ref, beta_ref, o_ref, ctx_ref,
                         *, nhead, scale, eps):
    cdt = wq_ref.dtype                        # MXU compute dtype (bf16)
    x = x_ref[0]                              # [Lq, D] query == memory == residual
    mask = mask_ref[0].astype(F32)            # [Lq, Lq] additive target mask
    D = x.shape[-1]
    xc = x.astype(cdt)
    q = jnp.dot(xc, wq_ref[...], preferred_element_type=F32) + bq_ref[...]
    kv = jnp.dot(xc, wkv_ref[...], preferred_element_type=F32) + bkv_ref[...]
    q = (q * scale).astype(cdt)               # 1/sqrt(Dh) folded into q
    k = kv[:, :D].astype(cdt)
    v = kv[:, D:].astype(cdt)
    _mha_heads(q, k, v, mask, ctx_ref, nhead=nhead, cdt=cdt)
    attn = jnp.dot(ctx_ref[...].astype(cdt), wo_ref[...],
                   preferred_element_type=F32) + bo_ref[...]
    y = _layer_norm_f32(x.astype(F32) + attn, eps)
    o_ref[0] = (y * g_ref[...] + beta_ref[...]).astype(o_ref.dtype)


def fused_self_attn_ln(x, add_mask, p, ln_g, ln_b, *, nhead, eps=1e-5,
                       out_dtype=None):
    B, Lq, D = x.shape
    Dh = D // nhead
    scale = 1.0 / float(Dh) ** 0.5
    out_dtype = out_dtype or x.dtype
    _, Lm1, Lm2 = add_mask.shape
    const = lambda b: (0, 0)
    # TODO(synk): mark the constant-index weight specs pipeline_mode=pl.Buffered(1)
    # (single-buffered) once verified on the target jax version; saves a full
    # duplicate weight copy in VMEM at production D.
    in_specs = [
        pl.BlockSpec((1, Lq, D), lambda b: (b, 0, 0)),      # x
        pl.BlockSpec((1, Lm1, Lm2), lambda b: (0, 0, 0)),   # target mask (shared)
        pl.BlockSpec((D, D), const),                        # wq
        pl.BlockSpec((1, D), const),                        # bq
        pl.BlockSpec((D, 2 * D), const),                    # wkv
        pl.BlockSpec((1, 2 * D), const),                    # bkv
        pl.BlockSpec((D, D), const),                        # wo
        pl.BlockSpec((1, D), const),                        # bo
        pl.BlockSpec((1, D), const),                        # ln gamma
        pl.BlockSpec((1, D), const),                        # ln beta
    ]
    blk_bytes = (_nbytes((1, Lq, D), x.dtype) + _nbytes((1, Lq, D), out_dtype)
                 + _nbytes((1, Lm1, Lm2), add_mask.dtype)
                 + 2 * _nbytes((D, D), p["wq"].dtype)
                 + _nbytes((D, 2 * D), p["wkv"].dtype)
                 + 7 * _nbytes((1, 2 * D), F32)
                 + _nbytes((Lq, D), F32))
    return pl.pallas_call(
        functools.partial(_self_attn_ln_kernel, nhead=nhead, scale=scale, eps=eps),
        out_shape=jax.ShapeDtypeStruct((B, Lq, D), out_dtype),
        grid=(B,),
        in_specs=in_specs,
        out_specs=pl.BlockSpec((1, Lq, D), lambda b: (b, 0, 0)),
        scratch_shapes=[pltpu.VMEM((Lq, D), F32)],
        compiler_params=pltpu.CompilerParams(
            dimension_semantics=("parallel",),
            vmem_limit_bytes=_vmem_limit(blk_bytes)),
    )(x, add_mask, p["wq"], p["bq"], p["wkv"], p["bkv"], p["wo"], p["bo"],
      ln_g, ln_b)


# ---------------------------------------------------------------------------
# Kernel 3: fused cross-attention with PRECOMPUTED K|V
#            (Q proj -> MHA -> out proj -> +res -> LN)
# ---------------------------------------------------------------------------

def _cross_attn_ln_kernel(x_ref, kv_ref, mask_ref, wq_ref, bq_ref,
                          wo_ref, bo_ref, g_ref, beta_ref, o_ref, ctx_ref,
                          *, nhead, scale, eps):
    cdt = wq_ref.dtype
    x = x_ref[0]                              # [Lq, D]
    kv = kv_ref[0]                            # [Lk, 2D] precomputed (bf16)
    mask = mask_ref[0].astype(F32)            # [1, Lk] key-padding additive mask
    D = x.shape[-1]
    q = jnp.dot(x.astype(cdt), wq_ref[...], preferred_element_type=F32) + bq_ref[...]
    q = (q * scale).astype(cdt)
    k = kv[:, :D].astype(cdt)
    v = kv[:, D:].astype(cdt)
    _mha_heads(q, k, v, mask, ctx_ref, nhead=nhead, cdt=cdt)
    attn = jnp.dot(ctx_ref[...].astype(cdt), wo_ref[...],
                   preferred_element_type=F32) + bo_ref[...]
    y = _layer_norm_f32(x.astype(F32) + attn, eps)
    o_ref[0] = (y * g_ref[...] + beta_ref[...]).astype(o_ref.dtype)


def fused_cross_attn_ln(x, kv, add_mask, p, ln_g, ln_b, *, nhead, eps=1e-5,
                        out_dtype=None):
    B, Lq, D = x.shape
    _, Lk, D2 = kv.shape
    Dh = D // nhead
    scale = 1.0 / float(Dh) ** 0.5
    out_dtype = out_dtype or x.dtype
    _, Lm1, Lm2 = add_mask.shape
    const = lambda b: (0, 0)
    in_specs = [
        pl.BlockSpec((1, Lq, D), lambda b: (b, 0, 0)),      # x (query + residual)
        pl.BlockSpec((1, Lk, D2), lambda b: (b, 0, 0)),     # precomputed K|V
        pl.BlockSpec((1, Lm1, Lm2), lambda b: (b, 0, 0)),   # key-padding mask
        pl.BlockSpec((D, D), const),                        # wq
        pl.BlockSpec((1, D), const),                        # bq
        pl.BlockSpec((D, D), const),                        # wo
        pl.BlockSpec((1, D), const),                        # bo
        pl.BlockSpec((1, D), const),                        # ln gamma
        pl.BlockSpec((1, D), const),                        # ln beta
    ]
    blk_bytes = (_nbytes((1, Lq, D), x.dtype) + _nbytes((1, Lq, D), out_dtype)
                 + _nbytes((1, Lk, D2), kv.dtype)
                 + _nbytes((1, Lm1, Lm2), add_mask.dtype)
                 + 2 * _nbytes((D, D), p["wq"].dtype)
                 + 6 * _nbytes((1, D), F32)
                 + _nbytes((Lq, D), F32))
    return pl.pallas_call(
        functools.partial(_cross_attn_ln_kernel, nhead=nhead, scale=scale, eps=eps),
        out_shape=jax.ShapeDtypeStruct((B, Lq, D), out_dtype),
        grid=(B,),
        in_specs=in_specs,
        out_specs=pl.BlockSpec((1, Lq, D), lambda b: (b, 0, 0)),
        scratch_shapes=[pltpu.VMEM((Lq, D), F32)],
        compiler_params=pltpu.CompilerParams(
            dimension_semantics=("parallel",),
            vmem_limit_bytes=_vmem_limit(blk_bytes)),
    )(x, kv, add_mask, p["wq"], p["bq"], p["wo"], p["bo"], ln_g, ln_b)


# ---------------------------------------------------------------------------
# Kernel 4: fused FFN (+res +LN), row-tiled; optionally fuses the module-level
#            final LayerNorm for the last layer (no extra HBM round trip).
# ---------------------------------------------------------------------------

def _ffn_ln_kernel(x_ref, w1_ref, b1_ref, w2_ref, b2_ref, g_ref, beta_ref,
                   *rest, eps, with_final_ln):
    if with_final_ln:
        fg_ref, fb_ref, o_ref = rest
    else:
        (o_ref,) = rest
    cdt = w1_ref.dtype
    x = x_ref[...]                                            # [tm, D]
    h = jnp.dot(x.astype(cdt), w1_ref[...], preferred_element_type=F32) + b1_ref[...]
    h = jnp.maximum(h, 0.0)                                   # hidden stays in VMEM
    y = jnp.dot(h.astype(cdt), w2_ref[...], preferred_element_type=F32) + b2_ref[...]
    y = _layer_norm_f32(x.astype(F32) + y, eps) * g_ref[...] + beta_ref[...]
    if with_final_ln:                                         # fused module-level norm
        y = _layer_norm_f32(y, eps) * fg_ref[...] + fb_ref[...]
    o_ref[...] = y.astype(o_ref.dtype)


def fused_ffn_ln(x, p, ln_g, ln_b, *, final_norm=None, eps=1e-5, tm_pref=512,
                 out_dtype=None):
    B, L, D = x.shape
    M = B * L
    F = p["w_ff1"].shape[1]
    tm = _pick_tile(M, tm_pref)
    # TODO(synk): on v7x (64 MiB VMEM) shrink tm_pref to 256 or chunk the F
    # dimension so the [tm, F] f32 hidden stays within the scoped budget.
    out_dtype = out_dtype or x.dtype
    const = lambda i: (0, 0)
    in_specs = [
        pl.BlockSpec((tm, D), lambda i: (i, 0)),              # x rows
        pl.BlockSpec((D, F), const),                          # w1 (resident)
        pl.BlockSpec((1, F), const),                          # b1
        pl.BlockSpec((F, D), const),                          # w2 (resident)
        pl.BlockSpec((1, D), const),                          # b2
        pl.BlockSpec((1, D), const),                          # ln gamma
        pl.BlockSpec((1, D), const),                          # ln beta
    ]
    args = [x.reshape(M, D), p["w_ff1"], p["b_ff1"], p["w_ff2"], p["b_ff2"],
            ln_g, ln_b]
    if final_norm is not None:
        in_specs += [pl.BlockSpec((1, D), const), pl.BlockSpec((1, D), const)]
        args += [final_norm[0], final_norm[1]]
    blk_bytes = (_nbytes((tm, D), x.dtype) + _nbytes((tm, D), out_dtype)
                 + _nbytes((D, F), p["w_ff1"].dtype) + _nbytes((F, D), p["w_ff2"].dtype)
                 + _nbytes((tm, F), F32)                      # relu hidden
                 + _nbytes((1, F), F32) + 6 * _nbytes((1, D), F32))
    out = pl.pallas_call(
        functools.partial(_ffn_ln_kernel, eps=eps,
                          with_final_ln=final_norm is not None),
        out_shape=jax.ShapeDtypeStruct((M, D), out_dtype),
        grid=(M // tm,),
        in_specs=in_specs,
        out_specs=pl.BlockSpec((tm, D), lambda i: (i, 0)),
        compiler_params=pltpu.CompilerParams(
            dimension_semantics=("parallel",),
            vmem_limit_bytes=_vmem_limit(blk_bytes)),
    )(*args)
    return out.reshape(B, L, D)


# ---------------------------------------------------------------------------
# Model glue
# ---------------------------------------------------------------------------

def _to_additive(keep_mask):
    return jnp.where(keep_mask, 0.0, NEG_INF).astype(F32)


def gsum_decoder_forward(params, source, source_mask, guidance, guidance_mask,
                         target, target_mask, *, num_layers, nhead):
    """Mirrors GSumDecoder.forward (eval mode, shared layer weights).

    source:        [B, Ls, D]   source_mask:   [B, Ls] bool (True = keep)
    guidance:      [B, Lg, D]   guidance_mask: [B, Lg] bool (True = keep)
    target:        [B, Lt, D]   target_mask:   [Lt, Lt] bool (True = attend)
    """
    layer_p = params["layer"]                        # shared across all layers
    tgt_add = _to_additive(target_mask)[None]        # [1, Lt, Lt]
    src_add = _to_additive(source_mask)[:, None, :]  # [B, 1, Ls]
    gui_add = _to_additive(guidance_mask)[:, None, :]  # [B, 1, Lg]

    # Layer-invariant cross-attention K/V: shared weights + constant memories
    # => project ONCE and reuse in every layer.
    kv_src = project_kv(source, layer_p["src_attn"]["wkv"], layer_p["src_attn"]["bkv"])
    kv_gui = project_kv(guidance, layer_p["gui_attn"]["wkv"], layer_p["gui_attn"]["bkv"])

    out_dtype = target.dtype
    x = target.astype(ACT_DTYPE)                     # bf16 residual stream
    # TODO(synk): a whole-stack kernel (lax.fori_loop over layers with all
    # shared weights VMEM-resident) would also remove the per-layer activation
    # HBM round trips; needs v7x-specific weight streaming at production D/F.
    for li in range(num_layers):
        last = li == num_layers - 1
        x = fused_self_attn_ln(x, tgt_add, layer_p["self_attn"],
                               layer_p["ln1_g"], layer_p["ln1_b"],
                               nhead=nhead, out_dtype=ACT_DTYPE)
        x = fused_cross_attn_ln(x, kv_src, src_add, layer_p["src_attn"],
                                layer_p["ln2_g"], layer_p["ln2_b"],
                                nhead=nhead, out_dtype=ACT_DTYPE)
        x = fused_cross_attn_ln(x, kv_gui, gui_add, layer_p["gui_attn"],
                                layer_p["ln3_g"], layer_p["ln3_b"],
                                nhead=nhead, out_dtype=ACT_DTYPE)
        x = fused_ffn_ln(x, layer_p, layer_p["ln4_g"], layer_p["ln4_b"],
                         final_norm=(params["norm_g"], params["norm_b"]) if last else None,
                         out_dtype=out_dtype if last else ACT_DTYPE)
    return x


# ---------------------------------------------------------------------------
# Deterministic parameter init (weights bf16 for MXU, biases/LN params f32)
# ---------------------------------------------------------------------------

def _init_mha(key, d_model, wdtype):
    ks = jax.random.split(key, 4)
    s = 1.0 / float(d_model) ** 0.5
    wq = (jax.random.normal(ks[0], (d_model, d_model), F32) * s).astype(wdtype)
    wk = jax.random.normal(ks[1], (d_model, d_model), F32) * s
    wv = jax.random.normal(ks[2], (d_model, d_model), F32) * s
    wkv = jnp.concatenate([wk, wv], axis=1).astype(wdtype)       # fused K|V
    wo = (jax.random.normal(ks[3], (d_model, d_model), F32) * s).astype(wdtype)
    return {"wq": wq, "bq": jnp.zeros((1, d_model), F32),
            "wkv": wkv, "bkv": jnp.zeros((1, 2 * d_model), F32),
            "wo": wo, "bo": jnp.zeros((1, d_model), F32)}


def init_params(key, d_model, dim_ff, wdtype=jnp.bfloat16):
    # TODO(synk): fp8 weight storage (per-channel scales) on v7x / int8 on v6e
    # would halve weight footprint and raise MXU throughput.
    ks = jax.random.split(key, 5)
    ones = jnp.ones((1, d_model), F32)
    zeros = jnp.zeros((1, d_model), F32)
    layer = {
        "self_attn": _init_mha(ks[0], d_model, wdtype),
        "src_attn": _init_mha(ks[1], d_model, wdtype),
        "gui_attn": _init_mha(ks[2], d_model, wdtype),
        "w_ff1": (jax.random.normal(ks[3], (d_model, dim_ff), F32)
                  * (1.0 / float(d_model) ** 0.5)).astype(wdtype),
        "b_ff1": jnp.zeros((1, dim_ff), F32),
        "w_ff2": (jax.random.normal(ks[4], (dim_ff, d_model), F32)
                  * (1.0 / float(dim_ff) ** 0.5)).astype(wdtype),
        "b_ff2": zeros,
        "ln1_g": ones, "ln1_b": zeros,
        "ln2_g": ones, "ln2_b": zeros,
        "ln3_g": ones, "ln3_b": zeros,
        "ln4_g": ones, "ln4_b": zeros,
    }
    return {"layer": layer, "norm_g": ones, "norm_b": zeros}


# ---------------------------------------------------------------------------

if __name__ == "__main__":
    B, Lt, Ls, Lg = 2, 8, 16, 8
    d_model, nhead, dim_ff, num_layers = 32, 4, 64, 2

    root = jax.random.PRNGKey(0)
    k_src, k_gui, k_tgt, k_par = jax.random.split(root, 4)

    source = jax.random.normal(k_src, (B, Ls, d_model), jnp.float32)
    guidance = jax.random.normal(k_gui, (B, Lg, d_model), jnp.float32)
    target = jax.random.normal(k_tgt, (B, Lt, d_model), jnp.float32)

    # key-padding masks (True = valid token) and causal target mask
    src_lens = jnp.array([Ls, Ls - 4])
    gui_lens = jnp.array([Lg, Lg - 2])
    source_mask = jnp.arange(Ls)[None, :] < src_lens[:, None]        # [B, Ls]
    guidance_mask = jnp.arange(Lg)[None, :] < gui_lens[:, None]      # [B, Lg]
    target_mask = jnp.tril(jnp.ones((Lt, Lt), jnp.bool_))            # [Lt, Lt]

    params = init_params(k_par, d_model, dim_ff)

    fwd = jax.jit(functools.partial(gsum_decoder_forward,
                                    num_layers=num_layers, nhead=nhead))
    out = fwd(params, source, source_mask, guidance, guidance_mask,
              target, target_mask)
    out = jax.block_until_ready(out)

    assert out.shape == (B, Lt, d_model)
    assert jnp.all(jnp.isfinite(out))
    print("KERNEL_OK")
</pallas_src>

<mosaic_0001>
module attributes {stable_mosaic.version = 11 : i64} {
  func.func @_linear_kernel(%arg0: i32, %arg1: memref<16x32xf32, #tpu.memory_space<vmem>>, %arg2: memref<32x64xbf16, #tpu.memory_space<vmem>>, %arg3: memref<1x64xf32, #tpu.memory_space<vmem>>, %arg4: memref<16x64xbf16, #tpu.memory_space<vmem>>) attributes {dimension_semantics = [#tpu.dimension_semantics<parallel>], iteration_bounds = array<i64: 1>, scalar_prefetch = 0 : i64, scratch_operands = 0 : i64, tpu.core_type = #tpu.core_type<tc>, window_params = [{transform_indices = @transform_0, window_bounds = array<i64: 16, 32>}, {pipeline_mode = #tpu.pipeline_mode<synchronous>, transform_indices = @transform_1, window_bounds = array<i64: 32, 64>}, {pipeline_mode = #tpu.pipeline_mode<synchronous>, transform_indices = @transform_2, window_bounds = array<i64: 1, 64>}, {transform_indices = @transform_3, window_bounds = array<i64: 16, 64>}]} {
    %c0 = arith.constant 0 : index
    %c0_0 = arith.constant 0 : index
    %0 = vector.load %arg1[%c0, %c0_0] : memref<16x32xf32, #tpu.memory_space<vmem>>, vector<16x32xf32>
    %1 = arith.truncf %0 : vector<16x32xf32> to vector<16x32xbf16>
    %c0_1 = arith.constant 0 : index
    %c0_2 = arith.constant 0 : index
    %2 = vector.load %arg2[%c0_1, %c0_2] : memref<32x64xbf16, #tpu.memory_space<vmem>>, vector<32x64xbf16>
    %cst = arith.constant dense<0.000000e+00> : vector<16x64xf32>
    %3 = tpu.matmul %1, %2, %cst {dimension_numbers = #tpu.dot_dimension_numbers<[1], [0], [0], [1], [0, 0, 1, 1], [], []>} : vector<16x32xbf16>, vector<32x64xbf16>, vector<16x64xf32> -> vector<16x64xf32>
    %c0_3 = arith.constant 0 : index
    %c0_4 = arith.constant 0 : index
    %4 = vector.load %arg3[%c0_3, %c0_4] : memref<1x64xf32, #tpu.memory_space<vmem>>, vector<1x64xf32>
    %5 = vector.broadcast %4 : vector<1x64xf32> to vector<16x64xf32>
    %6 = arith.addf %3, %5 : vector<16x64xf32>
    %7 = arith.truncf %6 : vector<16x64xf32> to vector<16x64xbf16>
    %c0_5 = arith.constant 0 : index
    %c0_6 = arith.constant 0 : index
    %8 = vector.load %arg4[%c0_5, %c0_6] : memref<16x64xbf16, #tpu.memory_space<vmem>>, vector<16x64xbf16>
    tpu.vector_store %arg4[%c0_5, %c0_6], %7 {strides = array<i32>} : memref<16x64xbf16, #tpu.memory_space<vmem>>, vector<16x64xbf16>,
    return
  }
  func.func @transform_0(%arg0: i32) -> (i32, i32) {
    %c0_i32 = arith.constant 0 : i32
    %c0_i32_0 = arith.constant 0 : i32
    return %arg0, %c0_i32 : i32, i32
  }
  func.func @transform_1(%arg0: i32) -> (i32, i32) {
    %c0_i32 = arith.constant 0 : i32
    %c0_i32_0 = arith.constant 0 : i32
    %c0_i32_1 = arith.constant 0 : i32
    return %c0_i32, %c0_i32_0 : i32, i32
  }
  func.func @transform_2(%arg0: i32) -> (i32, i32) {
    %c0_i32 = arith.constant 0 : i32
    %c0_i32_0 = arith.constant 0 : i32
    %c0_i32_1 = arith.constant 0 : i32
    return %c0_i32, %c0_i32_0 : i32, i32
  }
  func.func @transform_3(%arg0: i32) -> (i32, i32) {
    %c0_i32 = arith.constant 0 : i32
    %c0_i32_0 = arith.constant 0 : i32
    return %arg0, %c0_i32 : i32, i32
  }
}

module attributes {stable_mosaic.version = 11 : i64} {
  func.func @_linear_kernel(%arg0: i32, %arg1: memref<32x32xf32, #tpu.memory_space<vmem>>, %arg2: memref<32x64xbf16, #tpu.memory_space<vmem>>, %arg3: memref<1x64xf32, #tpu.memory_space<vmem>>, %arg4: memref<32x64xbf16, #tpu.memory_space<vmem>>) attributes {dimension_semantics = [#tpu.dimension_semantics<parallel>], iteration_bounds = array<i64: 1>, scalar_prefetch = 0 : i64, scratch_operands = 0 : i64, tpu.core_type = #tpu.core_type<tc>, window_params = [{transform_indices = @transform_0, window_bounds = array<i64: 32, 32>}, {pipeline_mode = #tpu.pipeline_mode<synchronous>, transform_indices = @transform_1, window_bounds = array<i64: 32, 64>}, {pipeline_mode = #tpu.pipeline_mode<synchronous>, transform_indices = @transform_2, window_bounds = array<i64: 1, 64>}, {transform_indices = @transform_3, window_bounds = array<i64: 32, 64>}]} {
    %c0 = arith.constant 0 : index
    %c0_0 = arith.constant 0 : index
    %0 = vector.load %arg1[%c0, %c0_0] : memref<32x32xf32, #tpu.memory_space<vmem>>, vector<32x32xf32>
    %1 = arith.truncf %0 : vector<32x32xf32> to vector<32x32xbf16>
    %c0_1 = arith.constant 0 : index
    %c0_2 = arith.constant 0 : index
    %2 = vector.load %arg2[%c0_1, %c0_2] : memref<32x64xbf16, #tpu.memory_space<vmem>>, vector<32x64xbf16>
    %cst = arith.constant dense<0.000000e+00> : vector<32x64xf32>
    %3 = tpu.matmul %1, %2, %cst {dimension_numbers = #tpu.dot_dimension_numbers<[1], [0], [0], [1], [0, 0, 1, 1], [], []>} : vector<32x32xbf16>, vector<32x64xbf16>, vector<32x64xf32> -> vector<32x64xf32>
    %c0_3 = arith.constant 0 : index
    %c0_4 = arith.constant 0 : index
    %4 = vector.load %arg3[%c0_3, %c0_4] : memref<1x64xf32, #tpu.memory_space<vmem>>, vector<1x64xf32>
    %5 = vector.broadcast %4 : vector<1x64xf32> to vector<32x64xf32>
    %6 = arith.addf %3, %5 : vector<32x64xf32>
    %7 = arith.truncf %6 : vector<32x64xf32> to vector<32x64xbf16>
    %c0_5 = arith.constant 0 : index
    %c0_6 = arith.constant 0 : index
    %8 = vector.load %arg4[%c0_5, %c0_6] : memref<32x64xbf16, #tpu.memory_space<vmem>>, vector<32x64xbf16>
    tpu.vector_store %arg4[%c0_5, %c0_6], %7 {strides = array<i32>} : memref<32x64xbf16, #tpu.memory_space<vmem>>, vector<32x64xbf16>,
    return
  }
  func.func @transform_0(%arg0: i32) -> (i32, i32) {
    %c0_i32 = arith.constant 0 : i32
    %c0_i32_0 = arith.constant 0 : i32
    return %arg0, %c0_i32 : i32, i32
  }
  func.func @transform_1(%arg0: i32) -> (i32, i32) {
    %c0_i32 = arith.constant 0 : i32
    %c0_i32_0 = arith.constant 0 : i32
    %c0_i32_1 = arith.constant 0 : i32
    return %c0_i32, %c0_i32_0 : i32, i32
  }
  func.func @transform_2(%arg0: i32) -> (i32, i32) {
    %c0_i32 = arith.constant 0 : i32
    %c0_i32_0 = arith.constant 0 : i32
    %c0_i32_1 = arith.constant 0 : i32
    return %c0_i32, %c0_i32_0 : i32, i32
  }
  func.func @transform_3(%arg0: i32) -> (i32, i32) {
    %c0_i32 = arith.constant 0 : i32
    %c0_i32_0 = arith.constant 0 : i32
    return %arg0, %c0_i32 : i32, i32
  }
}

module attributes {stable_mosaic.version = 11 : i64} {
  func.func @_cross_attn_ln_kernel(%arg0: i32, %arg1: memref<1x8x32xbf16, #tpu.memory_space<vmem>>, %arg2: memref<1x16x64xbf16, #tpu.memory_space<vmem>>, %arg3: memref<1x1x16xf32, #tpu.memory_space<vmem>>, %arg4: memref<32x32xbf16, #tpu.memory_space<vmem>>, %arg5: memref<1x32xf32, #tpu.memory_space<vmem>>, %arg6: memref<32x32xbf16, #tpu.memory_space<vmem>>, %arg7: memref<1x32xf32, #tpu.memory_space<vmem>>, %arg8: memref<1x32xf32, #tpu.memory_space<vmem>>, %arg9: memref<1x32xf32, #tpu.memory_space<vmem>>, %arg10: memref<1x8x32xbf16, #tpu.memory_space<vmem>>, %arg11: memref<8x32xf32, #tpu.memory_space<vmem>>) attributes {dimension_semantics = [#tpu.dimension_semantics<parallel>], iteration_bounds = array<i64: 2>, scalar_prefetch = 0 : i64, scratch_operands = 1 : i64, tpu.core_type = #tpu.core_type<tc>, window_params = [{transform_indices = @transform_0, window_bounds = array<i64: 1, 8, 32>}, {transform_indices = @transform_1, window_bounds = array<i64: 1, 16, 64>}, {transform_indices = @transform_2, window_bounds = array<i64: 1, 1, 16>}, {pipeline_mode = #tpu.pipeline_mode<synchronous>, transform_indices = @transform_3, window_bounds = array<i64: 32, 32>}, {pipeline_mode = #tpu.pipeline_mode<synchronous>, transform_indices = @transform_4, window_bounds = array<i64: 1, 32>}, {pipeline_mode = #tpu.pipeline_mode<synchronous>, transform_indices = @transform_5, window_bounds = array<i64: 32, 32>}, {pipeline_mode = #tpu.pipeline_mode<synchronous>, transform_indices = @transform_6, window_bounds = array<i64: 1, 32>}, {pipeline_mode = #tpu.pipeline_mode<synchronous>, transform_indices = @transform_7, window_bounds = array<i64: 1, 32>}, {pipeline_mode = #tpu.pipeline_mode<synchronous>, transform_indices = @transform_8, window_bounds = array<i64: 1, 32>}, {transform_indices = @transform_9, window_bounds = array<i64: 1, 8, 32>}]} {
    %c0 = arith.constant 0 : index
    %c0_0 = arith.constant 0 : index
    %c0_1 = arith.constant 0 : index
    %0 = vector.load %arg1[%c0, %c0_0, %c0_1] : memref<1x8x32xbf16, #tpu.memory_space<vmem>>, vector<1x8x32xbf16>
    %1 = vector.shape_cast %0 : vector<1x8x32xbf16> to vector<8x32xbf16>
    %c0_2 = arith.constant 0 : index
    %c0_3 = arith.constant 0 : index
    %c0_4 = arith.constant 0 : index
    %2 = vector.load %arg2[%c0_2, %c0_3, %c0_4] : memref<1x16x64xbf16, #tpu.memory_space<vmem>>, vector<1x16x64xbf16>
    %3 = vector.shape_cast %2 : vector<1x16x64xbf16> to vector<16x64xbf16>
    %c0_5 = arith.constant 0 : index
    %c0_6 = arith.constant 0 : index
    %c0_7 = arith.constant 0 : index
    %4 = vector.load %arg3[%c0_5, %c0_6, %c0_7] : memref<1x1x16xf32, #tpu.memory_space<vmem>>, vector<1x1x16xf32>
    %5 = vector.shape_cast %4 : vector<1x1x16xf32> to vector<1x16xf32>
    %c0_8 = arith.constant 0 : index
    %c0_9 = arith.constant 0 : index
    %6 = vector.load %arg4[%c0_8, %c0_9] : memref<32x32xbf16, #tpu.memory_space<vmem>>, vector<32x32xbf16>
    %cst = arith.constant dense<0.000000e+00> : vector<8x32xf32>
    %7 = tpu.matmul %1, %6, %cst {dimension_numbers = #tpu.dot_dimension_numbers<[1], [0], [0], [1], [0, 0, 1, 1], [], []>} : vector<8x32xbf16>, vector<32x32xbf16>, vector<8x32xf32> -> vector<8x32xf32>
    %c0_10 = arith.constant 0 : index
    %c0_11 = arith.constant 0 : index
    %8 = vector.load %arg5[%c0_10, %c0_11] : memref<1x32xf32, #tpu.memory_space<vmem>>, vector<1x32xf32>
    %9 = vector.broadcast %8 : vector<1x32xf32> to vector<8x32xf32>
    %10 = arith.addf %7, %9 : vector<8x32xf32>
    %cst_12 = arith.constant 0.353553385 : f32
    %11 = vector.broadcast %cst_12 : f32 to vector<8x32xf32>
    %12 = arith.mulf %10, %11 : vector<8x32xf32>
    %13 = arith.truncf %12 : vector<8x32xf32> to vector<8x32xbf16>
    %14 = vector.extract_strided_slice %3 {offsets = [0, 0], sizes = [16, 32], strides = [1, 1]} : vector<16x64xbf16> to vector<16x32xbf16>
    %15 = vector.extract_strided_slice %3 {offsets = [0, 32], sizes = [16, 32], strides = [1, 1]} : vector<16x64xbf16> to vector<16x32xbf16>
    %16 = vector.extract_strided_slice %13 {offsets = [0, 0], sizes = [8, 8], strides = [1, 1]} : vector<8x32xbf16> to vector<8x8xbf16>
    %17 = vector.extract_strided_slice %14 {offsets = [0, 0], sizes = [16, 8], strides = [1, 1]} : vector<16x32xbf16> to vector<16x8xbf16>
    %cst_13 = arith.constant dense<0.000000e+00> : vector<8x16xf32>
    %18 = tpu.matmul %16, %17, %cst_13 {dimension_numbers = #tpu.dot_dimension_numbers<[1], [1], [0], [0], [0, 0, 1, 0], [], []>} : vector<8x8xbf16>, vector<16x8xbf16>, vector<8x16xf32> -> vector<8x16xf32>
    %19 = vector.broadcast %5 : vector<1x16xf32> to vector<8x16xf32>
    %20 = arith.addf %18, %19 : vector<8x16xf32>
    %cst_14 = arith.constant dense<0xFF800000> : vector<8xf32>
    %21 = vector.multi_reduction <maximumf>, %20, %cst_14 [1] : vector<8x16xf32> to vector<8xf32>
    %22 = vector.shape_cast %21 : vector<8xf32> to vector<8x1xf32>
    %23 = vector.broadcast %22 : vector<8x1xf32> to vector<8x16xf32>
    %24 = arith.subf %20, %23 : vector<8x16xf32>
    %25 = math.exp %24 : vector<8x16xf32>
    %cst_15 = arith.constant dense<0.000000e+00> : vector<8xf32>
    %26 = vector.multi_reduction <add>, %25, %cst_15 [1] : vector<8x16xf32> to vector<8xf32>
    %27 = vector.shape_cast %26 : vector<8xf32> to vector<8x1xf32>
    %28 = tpu.reciprocal %27 {approx = true} : vector<8x1xf32> -> vector<8x1xf32>
    %29 = vector.broadcast %28 : vector<8x1xf32> to vector<8x16xf32>
    %30 = arith.mulf %25, %29 : vector<8x16xf32>
    %31 = arith.truncf %30 : vector<8x16xf32> to vector<8x16xbf16>
    %32 = vector.extract_strided_slice %15 {offsets = [0, 0], sizes = [16, 8], strides = [1, 1]} : vector<16x32xbf16> to vector<16x8xbf16>
    %cst_16 = arith.constant dense<0.000000e+00> : vector<8x8xf32>
    %33 = tpu.matmul %31, %32, %cst_16 {dimension_numbers = #tpu.dot_dimension_numbers<[1], [0], [0], [1], [0, 0, 1, 1], [], []>} : vector<8x16xbf16>, vector<16x8xbf16>, vector<8x8xf32> -> vector<8x8xf32>
    %c0_17 = arith.constant 0 : index
    %c0_18 = arith.constant 0 : index
    %34 = vector.load %arg11[%c0_17, %c0_18] : memref<8x32xf32, #tpu.memory_space<vmem>>, vector<8x8xf32>
    tpu.vector_store %arg11[%c0_17, %c0_18], %33 {strides = array<i32>} : memref<8x32xf32, #tpu.memory_space<vmem>>, vector<8x8xf32>,
    %35 = vector.extract_strided_slice %13 {offsets = [0, 8], sizes = [8, 8], strides = [1, 1]} : vector<8x32xbf16> to vector<8x8xbf16>
    %36 = vector.extract_strided_slice %14 {offsets = [0, 8], sizes = [16, 8], strides = [1, 1]} : vector<16x32xbf16> to vector<16x8xbf16>
    %cst_19 = arith.constant dense<0.000000e+00> : vector<8x16xf32>
    %37 = tpu.matmul %35, %36, %cst_19 {dimension_numbers = #tpu.dot_dimension_numbers<[1], [1], [0], [0], [0, 0, 1, 0], [], []>} : vector<8x8xbf16>, vector<16x8xbf16>, vector<8x16xf32> -> vector<8x16xf32>
    %38 = vector.broadcast %5 : vector<1x16xf32> to vector<8x16xf32>
    %39 = arith.addf %37, %38 : vector<8x16xf32>
    %cst_20 = arith.constant dense<0xFF800000> : vector<8xf32>
    %40 = vector.multi_reduction <maximumf>, %39, %cst_20 [1] : vector<8x16xf32> to vector<8xf32>
    %41 = vector.shape_cast %40 : vector<8xf32> to vector<8x1xf32>
    %42 = vector.broadcast %41 : vector<8x1xf32> to vector<8x16xf32>
    %43 = arith.subf %39, %42 : vector<8x16xf32>
    %44 = math.exp %43 : vector<8x16xf32>
    %cst_21 = arith.constant dense<0.000000e+00> : vector<8xf32>
    %45 = vector.multi_reduction <add>, %44, %cst_21 [1] : vector<8x16xf32> to vector<8xf32>
    %46 = vector.shape_cast %45 : vector<8xf32> to vector<8x1xf32>
    %47 = tpu.reciprocal %46 {approx = true} : vector<8x1xf32> -> vector<8x1xf32>
    %48 = vector.broadcast %47 : vector<8x1xf32> to vector<8x16xf32>
    %49 = arith.mulf %44, %48 : vector<8x16xf32>
    %50 = arith.truncf %49 : vector<8x16xf32> to vector<8x16xbf16>
    %51 = vector.extract_strided_slice %15 {offsets = [0, 8], sizes = [16, 8], strides = [1, 1]} : vector<16x32xbf16> to vector<16x8xbf16>
    %cst_22 = arith.constant dense<0.000000e+00> : vector<8x8xf32>
    %52 = tpu.matmul %50, %51, %cst_22 {dimension_numbers = #tpu.dot_dimension_numbers<[1], [0], [0], [1], [0, 0, 1, 1], [], []>} : vector<8x16xbf16>, vector<16x8xbf16>, vector<8x8xf32> -> vector<8x8xf32>
    %c0_23 = arith.constant 0 : index
    %c8 = arith.constant 8 : index
    %53 = vector.load %arg11[%c0_23, %c8] : memref<8x32xf32, #tpu.memory_space<vmem>>, vector<8x8xf32>
    tpu.vector_store %arg11[%c0_23, %c8], %52 {strides = array<i32>} : memref<8x32xf32, #tpu.memory_space<vmem>>, vector<8x8xf32>,
    %54 = vector.extract_strided_slice %13 {offsets = [0, 16], sizes = [8, 8], strides = [1, 1]} : vector<8x32xbf16> to vector<8x8xbf16>
    %55 = vector.extract_strided_slice %14 {offsets = [0, 16], sizes = [16, 8], strides = [1, 1]} : vector<16x32xbf16> to vector<16x8xbf16>
    %cst_24 = arith.constant dense<0.000000e+00> : vector<8x16xf32>
    %56 = tpu.matmul %54, %55, %cst_24 {dimension_numbers = #tpu.dot_dimension_numbers<[1], [1], [0], [0], [0, 0, 1, 0], [], []>} : vector<8x8xbf16>, vector<16x8xbf16>, vector<8x16xf32> -> vector<8x16xf32>
    %57 = vector.broadcast %5 : vector<1x16xf32> to vector<8x16xf32>
    %58 = arith.addf %56, %57 : vector<8x16xf32>
    %cst_25 = arith.constant dense<0xFF800000> : vector<8xf32>
    %59 = vector.multi_reduction <maximumf>, %58, %cst_25 [1] : vector<8x16xf32> to vector<8xf32>
    %60 = vector.shape_cast %59 : vector<8xf32> to vector<8x1xf32>
    %61 = vector.broadcast %60 : vector<8x1xf32> to vector<8x16xf32>
    %62 = arith.subf %58, %61 : vector<8x16xf32>
    %63 = math.exp %62 : vector<8x16xf32>
    %cst_26 = arith.constant dense<0.000000e+00> : vector<8xf32>
    %64 = vector.multi_reduction <add>, %63, %cst_26 [1] : vector<8x16xf32> to vector<8xf32>
    %65 = vector.shape_cast %64 : vector<8xf32> to vector<8x1xf32>
    %66 = tpu.reciprocal %65 {approx = true} : vector<8x1xf32> -> vector<8x1xf32>
    %67 = vector.broadcast %66 : vector<8x1xf32> to vector<8x16xf32>
    %68 = arith.mulf %63, %67 : vector<8x16xf32>
    %69 = arith.truncf %68 : vector<8x16xf32> to vector<8x16xbf16>
    %70 = vector.extract_strided_slice %15 {offsets = [0, 16], sizes = [16, 8], strides = [1, 1]} : vector<16x32xbf16> to vector<16x8xbf16>
    %cst_27 = arith.constant dense<0.000000e+00> : vector<8x8xf32>
    %71 = tpu.matmul %69, %70, %cst_27 {dimension_numbers = #tpu.dot_dimension_numbers<[1], [0], [0], [1], [0, 0, 1, 1], [], []>} : vector<8x16xbf16>, vector<16x8xbf16>, vector<8x8xf32> -> vector<8x8xf32>
    %c0_28 = arith.constant 0 : index
    %c16 = arith.constant 16 : index
    %72 = vector.load %arg11[%c0_28, %c16] : memref<8x32xf32, #tpu.memory_space<vmem>>, vector<8x8xf32>
    tpu.vector_store %arg11[%c0_28, %c16], %71 {strides = array<i32>} : memref<8x32xf32, #tpu.memory_space<vmem>>, vector<8x8xf32>,
    %73 = vector.extract_strided_slice %13 {offsets = [0, 24], sizes = [8, 8], strides = [1, 1]} : vector<8x32xbf16> to vector<8x8xbf16>
    %74 = vector.extract_strided_slice %14 {offsets = [0, 24], sizes = [16, 8], strides = [1, 1]} : vector<16x32xbf16> to vector<16x8xbf16>
    %cst_29 = arith.constant dense<0.000000e+00> : vector<8x16xf32>
    %75 = tpu.matmul %73, %74, %cst_29 {dimension_numbers = #tpu.dot_dimension_numbers<[1], [1], [0], [0], [0, 0, 1, 0], [], []>} : vector<8x8xbf16>, vector<16x8xbf16>, vector<8x16xf32> -> vector<8x16xf32>
    %76 = vector.broadcast %5 : vector<1x16xf32> to vector<8x16xf32>
    %77 = arith.addf %75, %76 : vector<8x16xf32>
    %cst_30 = arith.constant dense<0xFF800000> : vector<8xf32>
    %78 = vector.multi_reduction <maximumf>, %77, %cst_30 [1] : vector<8x16xf32> to vector<8xf32>
    %79 = vector.shape_cast %78 : vector<8xf32> to vector<8x1xf32>
    %80 = vector.broadcast %79 : vector<8x1xf32> to vector<8x16xf32>
    %81 = arith.subf %77, %80 : vector<8x16xf32>
    %82 = math.exp %81 : vector<8x16xf32>
    %cst_31 = arith.constant dense<0.000000e+00> : vector<8xf32>
    %83 = vector.multi_reduction <add>, %82, %cst_31 [1] : vector<8x16xf32> to vector<8xf32>
    %84 = vector.shape_cast %83 : vector<8xf32> to vector<8x1xf32>
    %85 = tpu.reciprocal %84 {approx = true} : vector<8x1xf32> -> vector<8x1xf32>
    %86 = vector.broadcast %85 : vector<8x1xf32> to vector<8x16xf32>
    %87 = arith.mulf %82, %86 : vector<8x16xf32>
    %88 = arith.truncf %87 : vector<8x16xf32> to vector<8x16xbf16>
    %89 = vector.extract_strided_slice %15 {offsets = [0, 24], sizes = [16, 8], strides = [1, 1]} : vector<16x32xbf16> to vector<16x8xbf16>
    %cst_32 = arith.constant dense<0.000000e+00> : vector<8x8xf32>
    %90 = tpu.matmul %88, %89, %cst_32 {dimension_numbers = #tpu.dot_dimension_numbers<[1], [0], [0], [1], [0, 0, 1, 1], [], []>} : vector<8x16xbf16>, vector<16x8xbf16>, vector<8x8xf32> -> vector<8x8xf32>
    %c0_33 = arith.constant 0 : index
    %c24 = arith.constant 24 : index
    %91 = vector.load %arg11[%c0_33, %c24] : memref<8x32xf32, #tpu.memory_space<vmem>>, vector<8x8xf32>
    tpu.vector_store %arg11[%c0_33, %c24], %90 {strides = array<i32>} : memref<8x32xf32, #tpu.memory_space<vmem>>, vector<8x8xf32>,
    %c0_34 = arith.constant 0 : index
    %c0_35 = arith.constant 0 : index
    %92 = vector.load %arg11[%c0_34, %c0_35] : memref<8x32xf32, #tpu.memory_space<vmem>>, vector<8x32xf32>
    %93 = arith.truncf %92 : vector<8x32xf32> to vector<8x32xbf16>
    %c0_36 = arith.constant 0 : index
    %c0_37 = arith.constant 0 : index
    %94 = vector.load %arg6[%c0_36, %c0_37] : memref<32x32xbf16, #tpu.memory_space<vmem>>, vector<32x32xbf16>
    %cst_38 = arith.constant dense<0.000000e+00> : vector<8x32xf32>
    %95 = tpu.matmul %93, %94, %cst_38 {dimension_numbers = #tpu.dot_dimension_numbers<[1], [0], [0], [1], [0, 0, 1, 1], [], []>} : vector<8x32xbf16>, vector<32x32xbf16>, vector<8x32xf32> -> vector<8x32xf32>
    %c0_39 = arith.constant 0 : index
    %c0_40 = arith.constant 0 : index
    %96 = vector.load %arg7[%c0_39, %c0_40] : memref<1x32xf32, #tpu.memory_space<vmem>>, vector<1x32xf32>
    %97 = vector.broadcast %96 : vector<1x32xf32> to vector<8x32xf32>
    %98 = arith.addf %95, %97 : vector<8x32xf32>
    %99 = arith.extf %1 : vector<8x32xbf16> to vector<8x32xf32>
    %100 = arith.addf %99, %98 : vector<8x32xf32>
    %cst_41 = arith.constant dense<0.000000e+00> : vector<8xf32>
    %101 = vector.multi_reduction <add>, %100, %cst_41 [1] : vector<8x32xf32> to vector<8xf32>
    %102 = vector.shape_cast %101 : vector<8xf32> to vector<8x1xf32>
    %cst_42 = arith.constant 3.200000e+01 : f32
    %103 = vector.broadcast %cst_42 : f32 to vector<8x1xf32>
    %104 = arith.divf %102, %103 : vector<8x1xf32>
    %105 = vector.broadcast %104 : vector<8x1xf32> to vector<8x32xf32>
    %106 = arith.subf %100, %105 : vector<8x32xf32>
    %107 = arith.mulf %106, %106 : vector<8x32xf32>
    %cst_43 = arith.constant dense<0.000000e+00> : vector<8xf32>
    %108 = vector.multi_reduction <add>, %107, %cst_43 [1] : vector<8x32xf32> to vector<8xf32>
    %109 = vector.shape_cast %108 : vector<8xf32> to vector<8x1xf32>
    %cst_44 = arith.constant 3.200000e+01 : f32
    %110 = vector.broadcast %cst_44 : f32 to vector<8x1xf32>
    %111 = arith.divf %109, %110 : vector<8x1xf32>
    %112 = vector.broadcast %104 : vector<8x1xf32> to vector<8x32xf32>
    %113 = arith.subf %100, %112 : vector<8x32xf32>
    %cst_45 = arith.constant 9.99999974E-6 : f32
    %114 = vector.broadcast %cst_45 : f32 to vector<8x1xf32>
    %115 = arith.addf %111, %114 : vector<8x1xf32>
    %116 = math.rsqrt %115 : vector<8x1xf32>
    %117 = vector.broadcast %116 : vector<8x1xf32> to vector<8x32xf32>
    %118 = arith.mulf %113, %117 : vector<8x32xf32>
    %c0_46 = arith.constant 0 : index
    %c0_47 = arith.constant 0 : index
    %119 = vector.load %arg8[%c0_46, %c0_47] : memref<1x32xf32, #tpu.memory_space<vmem>>, vector<1x32xf32>
    %120 = vector.broadcast %119 : vector<1x32xf32> to vector<8x32xf32>
    %121 = arith.mulf %118, %120 : vector<8x32xf32>
    %c0_48 = arith.constant 0 : index
    %c0_49 = arith.constant 0 : index
    %122 = vector.load %arg9[%c0_48, %c0_49] : memref<1x32xf32, #tpu.memory_space<vmem>>, vector<1x32xf32>
    %123 = vector.broadcast %122 : vector<1x32xf32> to vector<8x32xf32>
    %124 = arith.addf %121, %123 : vector<8x32xf32>
    %125 = arith.truncf %124 : vector<8x32xf32> to vector<8x32xbf16>
    %c0_50 = arith.constant 0 : index
    %c0_51 = arith.constant 0 : index
    %c0_52 = arith.constant 0 : index
    %126 = vector.load %arg10[%c0_50, %c0_51, %c0_52] : memref<1x8x32xbf16, #tpu.memory_space<vmem>>, vector<1x8x32xbf16>
    %127 = vector.shape_cast %126 : vector<1x8x32xbf16> to vector<8x32xbf16>
    %128 = vector.shape_cast %125 : vector<8x32xbf16> to vector<1x8x32xbf16>
    tpu.vector_store %arg10[%c0_50, %c0_51, %c0_52], %128 {strides = array<i32>} : memref<1x8x32xbf16, #tpu.memory_space<vmem>>, vector<1x8x32xbf16>,
    return
  }
  func.func @transform_0(%arg0: i32) -> (i32, i32, i32) {
    %c0_i32 = arith.constant 0 : i32
    %c0_i32_0 = arith.constant 0 : i32
    %c0_i32_1 = arith.constant 0 : i32
    return %arg0, %c0_i32, %c0_i32_0 : i32, i32, i32
  }
  func.func @transform_1(%arg0: i32) -> (i32, i32, i32) {
    %c0_i32 = arith.constant 0 : i32
    %c0_i32_0 = arith.constant 0 : i32
    %c0_i32_1 = arith.constant 0 : i32
    return %arg0, %c0_i32, %c0_i32_0 : i32, i32, i32
  }
  func.func @transform_2(%arg0: i32) -> (i32, i32, i32) {
    %c0_i32 = arith.constant 0 : i32
    %c0_i32_0 = arith.constant 0 : i32
    %c0_i32_1 = arith.constant 0 : i32
    return %arg0, %c0_i32, %c0_i32_0 : i32, i32, i32
  }
  func.func @transform_3(%arg0: i32) -> (i32, i32) {
    %c0_i32 = arith.constant 0 : i32
    %c0_i32_0 = arith.constant 0 : i32
    %c0_i32_1 = arith.constant 0 : i32
    return %c0_i32, %c0_i32_0 : i32, i32
  }
  func.func @transform_4(%arg0: i32) -> (i32, i32) {
    %c0_i32 = arith.constant 0 : i32
    %c0_i32_0 = arith.constant 0 : i32
    %c0_i32_1 = arith.constant 0 : i32
    return %c0_i32, %c0_i32_0 : i32, i32
  }
  func.func @transform_5(%arg0: i32) -> (i32, i32) {
    %c0_i32 = arith.constant 0 : i32
    %c0_i32_0 = arith.constant 0 : i32
    %c0_i32_1 = arith.constant 0 : i32
    return %c0_i32, %c0_i32_0 : i32, i32
  }
  func.func @transform_6(%arg0: i32) -> (i32, i32) {
    %c0_i32 = arith.constant 0 : i32
    %c0_i32_0 = arith.constant 0 : i32
    %c0_i32_1 = arith.constant 0 : i32
    return %c0_i32, %c0_i32_0 : i32, i32
  }
  func.func @transform_7(%arg0: i32) -> (i32, i32) {
    %c0_i32 = arith.constant 0 : i32
    %c0_i32_0 = arith.constant 0 : i32
    %c0_i32_1 = arith.constant 0 : i32
    return %c0_i32, %c0_i32_0 : i32, i32
  }
  func.func @transform_8(%arg0: i32) -> (i32, i32) {
    %c0_i32 = arith.constant 0 : i32
    %c0_i32_0 = arith.constant 0 : i32
    %c0_i32_1 = arith.constant 0 : i32
    return %c0_i32, %c0_i32_0 : i32, i32
  }
  func.func @transform_9(%arg0: i32) -> (i32, i32, i32) {
    %c0_i32 = arith.constant 0 : i32
    %c0_i32_0 = arith.constant 0 : i32
    %c0_i32_1 = arith.constant 0 : i32
    return %arg0, %c0_i32, %c0_i32_0 : i32, i32, i32
  }
}

module attributes {stable_mosaic.version = 11 : i64} {
  func.func @_self_attn_ln_kernel(%arg0: i32, %arg1: memref<1x8x32xbf16, #tpu.memory_space<vmem>>, %arg2: memref<1x8x8xf32, #tpu.memory_space<vmem>>, %arg3: memref<32x32xbf16, #tpu.memory_space<vmem>>, %arg4: memref<1x32xf32, #tpu.memory_space<vmem>>, %arg5: memref<32x64xbf16, #tpu.memory_space<vmem>>, %arg6: memref<1x64xf32, #tpu.memory_space<vmem>>, %arg7: memref<32x32xbf16, #tpu.memory_space<vmem>>, %arg8: memref<1x32xf32, #tpu.memory_space<vmem>>, %arg9: memref<1x32xf32, #tpu.memory_space<vmem>>, %arg10: memref<1x32xf32, #tpu.memory_space<vmem>>, %arg11: memref<1x8x32xbf16, #tpu.memory_space<vmem>>, %arg12: memref<8x32xf32, #tpu.memory_space<vmem>>) attributes {dimension_semantics = [#tpu.dimension_semantics<parallel>], iteration_bounds = array<i64: 2>, scalar_prefetch = 0 : i64, scratch_operands = 1 : i64, tpu.core_type = #tpu.core_type<tc>, window_params = [{transform_indices = @transform_0, window_bounds = array<i64: 1, 8, 32>}, {pipeline_mode = #tpu.pipeline_mode<synchronous>, transform_indices = @transform_1, window_bounds = array<i64: 1, 8, 8>}, {pipeline_mode = #tpu.pipeline_mode<synchronous>, transform_indices = @transform_2, window_bounds = array<i64: 32, 32>}, {pipeline_mode = #tpu.pipeline_mode<synchronous>, transform_indices = @transform_3, window_bounds = array<i64: 1, 32>}, {pipeline_mode = #tpu.pipeline_mode<synchronous>, transform_indices = @transform_4, window_bounds = array<i64: 32, 64>}, {pipeline_mode = #tpu.pipeline_mode<synchronous>, transform_indices = @transform_5, window_bounds = array<i64: 1, 64>}, {pipeline_mode = #tpu.pipeline_mode<synchronous>, transform_indices = @transform_6, window_bounds = array<i64: 32, 32>}, {pipeline_mode = #tpu.pipeline_mode<synchronous>, transform_indices = @transform_7, window_bounds = array<i64: 1, 32>}, {pipeline_mode = #tpu.pipeline_mode<synchronous>, transform_indices = @transform_8, window_bounds = array<i64: 1, 32>}, {pipeline_mode = #tpu.pipeline_mode<synchronous>, transform_indices = @transform_9, window_bounds = array<i64: 1, 32>}, {transform_indices = @transform_10, window_bounds = array<i64: 1, 8, 32>}]} {
    %c0 = arith.constant 0 : index
    %c0_0 = arith.constant 0 : index
    %c0_1 = arith.constant 0 : index
    %0 = vector.load %arg1[%c0, %c0_0, %c0_1] : memref<1x8x32xbf16, #tpu.memory_space<vmem>>, vector<1x8x32xbf16>
    %1 = vector.shape_cast %0 : vector<1x8x32xbf16> to vector<8x32xbf16>
    %c0_2 = arith.constant 0 : index
    %c0_3 = arith.constant 0 : index
    %c0_4 = arith.constant 0 : index
    %2 = vector.load %arg2[%c0_2, %c0_3, %c0_4] : memref<1x8x8xf32, #tpu.memory_space<vmem>>, vector<1x8x8xf32>
    %3 = vector.shape_cast %2 : vector<1x8x8xf32> to vector<8x8xf32>
    %c0_5 = arith.constant 0 : index
    %c0_6 = arith.constant 0 : index
    %4 = vector.load %arg3[%c0_5, %c0_6] : memref<32x32xbf16, #tpu.memory_space<vmem>>, vector<32x32xbf16>
    %cst = arith.constant dense<0.000000e+00> : vector<8x32xf32>
    %5 = tpu.matmul %1, %4, %cst {dimension_numbers = #tpu.dot_dimension_numbers<[1], [0], [0], [1], [0, 0, 1, 1], [], []>} : vector<8x32xbf16>, vector<32x32xbf16>, vector<8x32xf32> -> vector<8x32xf32>
    %c0_7 = arith.constant 0 : index
    %c0_8 = arith.constant 0 : index
    %6 = vector.load %arg4[%c0_7, %c0_8] : memref<1x32xf32, #tpu.memory_space<vmem>>, vector<1x32xf32>
    %7 = vector.broadcast %6 : vector<1x32xf32> to vector<8x32xf32>
    %8 = arith.addf %5, %7 : vector<8x32xf32>
    %c0_9 = arith.constant 0 : index
    %c0_10 = arith.constant 0 : index
    %9 = vector.load %arg5[%c0_9, %c0_10] : memref<32x64xbf16, #tpu.memory_space<vmem>>, vector<32x64xbf16>
    %cst_11 = arith.constant dense<0.000000e+00> : vector<8x64xf32>
    %10 = tpu.matmul %1, %9, %cst_11 {dimension_numbers = #tpu.dot_dimension_numbers<[1], [0], [0], [1], [0, 0, 1, 1], [], []>} : vector<8x32xbf16>, vector<32x64xbf16>, vector<8x64xf32> -> vector<8x64xf32>
    %c0_12 = arith.constant 0 : index
    %c0_13 = arith.constant 0 : index
    %11 = vector.load %arg6[%c0_12, %c0_13] : memref<1x64xf32, #tpu.memory_space<vmem>>, vector<1x64xf32>
    %12 = vector.broadcast %11 : vector<1x64xf32> to vector<8x64xf32>
    %13 = arith.addf %10, %12 : vector<8x64xf32>
    %cst_14 = arith.constant 0.353553385 : f32
    %14 = vector.broadcast %cst_14 : f32 to vector<8x32xf32>
    %15 = arith.mulf %8, %14 : vector<8x32xf32>
    %16 = arith.truncf %15 : vector<8x32xf32> to vector<8x32xbf16>
    %17 = vector.extract_strided_slice %13 {offsets = [0, 0], sizes = [8, 32], strides = [1, 1]} : vector<8x64xf32> to vector<8x32xf32>
    %18 = arith.truncf %17 : vector<8x32xf32> to vector<8x32xbf16>
    %19 = vector.extract_strided_slice %13 {offsets = [0, 32], sizes = [8, 32], strides = [1, 1]} : vector<8x64xf32> to vector<8x32xf32>
    %20 = arith.truncf %19 : vector<8x32xf32> to vector<8x32xbf16>
    %21 = vector.extract_strided_slice %16 {offsets = [0, 0], sizes = [8, 8], strides = [1, 1]} : vector<8x32xbf16> to vector<8x8xbf16>
    %22 = vector.extract_strided_slice %18 {offsets = [0, 0], sizes = [8, 8], strides = [1, 1]} : vector<8x32xbf16> to vector<8x8xbf16>
    %cst_15 = arith.constant dense<0.000000e+00> : vector<8x8xf32>
    %23 = tpu.matmul %21, %22, %cst_15 {dimension_numbers = #tpu.dot_dimension_numbers<[1], [1], [0], [0], [0, 0, 1, 0], [], []>} : vector<8x8xbf16>, vector<8x8xbf16>, vector<8x8xf32> -> vector<8x8xf32>
    %24 = arith.addf %23, %3 : vector<8x8xf32>
    %cst_16 = arith.constant dense<0xFF800000> : vector<8xf32>
    %25 = vector.multi_reduction <maximumf>, %24, %cst_16 [1] : vector<8x8xf32> to vector<8xf32>
    %26 = vector.shape_cast %25 : vector<8xf32> to vector<8x1xf32>
    %27 = vector.broadcast %26 : vector<8x1xf32> to vector<8x8xf32>
    %28 = arith.subf %24, %27 : vector<8x8xf32>
    %29 = math.exp %28 : vector<8x8xf32>
    %cst_17 = arith.constant dense<0.000000e+00> : vector<8xf32>
    %30 = vector.multi_reduction <add>, %29, %cst_17 [1] : vector<8x8xf32> to vector<8xf32>
    %31 = vector.shape_cast %30 : vector<8xf32> to vector<8x1xf32>
    %32 = tpu.reciprocal %31 {approx = true} : vector<8x1xf32> -> vector<8x1xf32>
    %33 = vector.broadcast %32 : vector<8x1xf32> to vector<8x8xf32>
    %34 = arith.mulf %29, %33 : vector<8x8xf32>
    %35 = arith.truncf %34 : vector<8x8xf32> to vector<8x8xbf16>
    %36 = vector.extract_strided_slice %20 {offsets = [0, 0], sizes = [8, 8], strides = [1, 1]} : vector<8x32xbf16> to vector<8x8xbf16>
    %cst_18 = arith.constant dense<0.000000e+00> : vector<8x8xf32>
    %37 = tpu.matmul %35, %36, %cst_18 {dimension_numbers = #tpu.dot_dimension_numbers<[1], [0], [0], [1], [0, 0, 1, 1], [], []>} : vector<8x8xbf16>, vector<8x8xbf16>, vector<8x8xf32> -> vector<8x8xf32>
    %c0_19 = arith.constant 0 : index
    %c0_20 = arith.constant 0 : index
    %38 = vector.load %arg12[%c0_19, %c0_20] : memref<8x32xf32, #tpu.memory_space<vmem>>, vector<8x8xf32>
    tpu.vector_store %arg12[%c0_19, %c0_20], %37 {strides = array<i32>} : memref<8x32xf32, #tpu.memory_space<vmem>>, vector<8x8xf32>,
    %39 = vector.extract_strided_slice %16 {offsets = [0, 8], sizes = [8, 8], strides = [1, 1]} : vector<8x32xbf16> to vector<8x8xbf16>
    %40 = vector.extract_strided_slice %18 {offsets = [0, 8], sizes = [8, 8], strides = [1, 1]} : vector<8x32xbf16> to vector<8x8xbf16>
    %cst_21 = arith.constant dense<0.000000e+00> : vector<8x8xf32>
    %41 = tpu.matmul %39, %40, %cst_21 {dimension_numbers = #tpu.dot_dimension_numbers<[1], [1], [0], [0], [0, 0, 1, 0], [], []>} : vector<8x8xbf16>, vector<8x8xbf16>, vector<8x8xf32> -> vector<8x8xf32>
    %42 = arith.addf %41, %3 : vector<8x8xf32>
    %cst_22 = arith.constant dense<0xFF800000> : vector<8xf32>
    %43 = vector.multi_reduction <maximumf>, %42, %cst_22 [1] : vector<8x8xf32> to vector<8xf32>
    %44 = vector.shape_cast %43 : vector<8xf32> to vector<8x1xf32>
    %45 = vector.broadcast %44 : vector<8x1xf32> to vector<8x8xf32>
    %46 = arith.subf %42, %45 : vector<8x8xf32>
    %47 = math.exp %46 : vector<8x8xf32>
    %cst_23 = arith.constant dense<0.000000e+00> : vector<8xf32>
    %48 = vector.multi_reduction <add>, %47, %cst_23 [1] : vector<8x8xf32> to vector<8xf32>
    %49 = vector.shape_cast %48 : vector<8xf32> to vector<8x1xf32>
    %50 = tpu.reciprocal %49 {approx = true} : vector<8x1xf32> -> vector<8x1xf32>
    %51 = vector.broadcast %50 : vector<8x1xf32> to vector<8x8xf32>
    %52 = arith.mulf %47, %51 : vector<8x8xf32>
    %53 = arith.truncf %52 : vector<8x8xf32> to vector<8x8xbf16>
    %54 = vector.extract_strided_slice %20 {offsets = [0, 8], sizes = [8, 8], strides = [1, 1]} : vector<8x32xbf16> to vector<8x8xbf16>
    %cst_24 = arith.constant dense<0.000000e+00> : vector<8x8xf32>
    %55 = tpu.matmul %53, %54, %cst_24 {dimension_numbers = #tpu.dot_dimension_numbers<[1], [0], [0], [1], [0, 0, 1, 1], [], []>} : vector<8x8xbf16>, vector<8x8xbf16>, vector<8x8xf32> -> vector<8x8xf32>
    %c0_25 = arith.constant 0 : index
    %c8 = arith.constant 8 : index
    %56 = vector.load %arg12[%c0_25, %c8] : memref<8x32xf32, #tpu.memory_space<vmem>>, vector<8x8xf32>
    tpu.vector_store %arg12[%c0_25, %c8], %55 {strides = array<i32>} : memref<8x32xf32, #tpu.memory_space<vmem>>, vector<8x8xf32>,
    %57 = vector.extract_strided_slice %16 {offsets = [0, 16], sizes = [8, 8], strides = [1, 1]} : vector<8x32xbf16> to vector<8x8xbf16>
    %58 = vector.extract_strided_slice %18 {offsets = [0, 16], sizes = [8, 8], strides = [1, 1]} : vector<8x32xbf16> to vector<8x8xbf16>
    %cst_26 = arith.constant dense<0.000000e+00> : vector<8x8xf32>
    %59 = tpu.matmul %57, %58, %cst_26 {dimension_numbers = #tpu.dot_dimension_numbers<[1], [1], [0], [0], [0, 0, 1, 0], [], []>} : vector<8x8xbf16>, vector<8x8xbf16>, vector<8x8xf32> -> vector<8x8xf32>
    %60 = arith.addf %59, %3 : vector<8x8xf32>
    %cst_27 = arith.constant dense<0xFF800000> : vector<8xf32>
    %61 = vector.multi_reduction <maximumf>, %60, %cst_27 [1] : vector<8x8xf32> to vector<8xf32>
    %62 = vector.shape_cast %61 : vector<8xf32> to vector<8x1xf32>
    %63 = vector.broadcast %62 : vector<8x1xf32> to vector<8x8xf32>
    %64 = arith.subf %60, %63 : vector<8x8xf32>
    %65 = math.exp %64 : vector<8x8xf32>
    %cst_28 = arith.constant dense<0.000000e+00> : vector<8xf32>
    %66 = vector.multi_reduction <add>, %65, %cst_28 [1] : vector<8x8xf32> to vector<8xf32>
    %67 = vector.shape_cast %66 : vector<8xf32> to vector<8x1xf32>
    %68 = tpu.reciprocal %67 {approx = true} : vector<8x1xf32> -> vector<8x1xf32>
    %69 = vector.broadcast %68 : vector<8x1xf32> to vector<8x8xf32>
    %70 = arith.mulf %65, %69 : vector<8x8xf32>
    %71 = arith.truncf %70 : vector<8x8xf32> to vector<8x8xbf16>
    %72 = vector.extract_strided_slice %20 {offsets = [0, 16], sizes = [8, 8], strides = [1, 1]} : vector<8x32xbf16> to vector<8x8xbf16>
    %cst_29 = arith.constant dense<0.000000e+00> : vector<8x8xf32>
    %73 = tpu.matmul %71, %72, %cst_29 {dimension_numbers = #tpu.dot_dimension_numbers<[1], [0], [0], [1], [0, 0, 1, 1], [], []>} : vector<8x8xbf16>, vector<8x8xbf16>, vector<8x8xf32> -> vector<8x8xf32>
    %c0_30 = arith.constant 0 : index
    %c16 = arith.constant 16 : index
    %74 = vector.load %arg12[%c0_30, %c16] : memref<8x32xf32, #tpu.memory_space<vmem>>, vector<8x8xf32>
    tpu.vector_store %arg12[%c0_30, %c16], %73 {strides = array<i32>} : memref<8x32xf32, #tpu.memory_space<vmem>>, vector<8x8xf32>,
    %75 = vector.extract_strided_slice %16 {offsets = [0, 24], sizes = [8, 8], strides = [1, 1]} : vector<8x32xbf16> to vector<8x8xbf16>
    %76 = vector.extract_strided_slice %18 {offsets = [0, 24], sizes = [8, 8], strides = [1, 1]} : vector<8x32xbf16> to vector<8x8xbf16>
    %cst_31 = arith.constant dense<0.000000e+00> : vector<8x8xf32>
    %77 = tpu.matmul %75, %76, %cst_31 {dimension_numbers = #tpu.dot_dimension_numbers<[1], [1], [0], [0], [0, 0, 1, 0], [], []>} : vector<8x8xbf16>, vector<8x8xbf16>, vector<8x8xf32> -> vector<8x8xf32>
    %78 = arith.addf %77, %3 : vector<8x8xf32>
    %cst_32 = arith.constant dense<0xFF800000> : vector<8xf32>
    %79 = vector.multi_reduction <maximumf>, %78, %cst_32 [1] : vector<8x8xf32> to vector<8xf32>
    %80 = vector.shape_cast %79 : vector<8xf32> to vector<8x1xf32>
    %81 = vector.broadcast %80 : vector<8x1xf32> to vector<8x8xf32>
    %82 = arith.subf %78, %81 : vector<8x8xf32>
    %83 = math.exp %82 : vector<8x8xf32>
    %cst_33 = arith.constant dense<0.000000e+00> : vector<8xf32>
    %84 = vector.multi_reduction <add>, %83, %cst_33 [1] : vector<8x8xf32> to vector<8xf32>
    %85 = vector.shape_cast %84 : vector<8xf32> to vector<8x1xf32>
    %86 = tpu.reciprocal %85 {approx = true} : vector<8x1xf32> -> vector<8x1xf32>
    %87 = vector.broadcast %86 : vector<8x1xf32> to vector<8x8xf32>
    %88 = arith.mulf %83, %87 : vector<8x8xf32>
    %89 = arith.truncf %88 : vector<8x8xf32> to vector<8x8xbf16>
    %90 = vector.extract_strided_slice %20 {offsets = [0, 24], sizes = [8, 8], strides = [1, 1]} : vector<8x32xbf16> to vector<8x8xbf16>
    %cst_34 = arith.constant dense<0.000000e+00> : vector<8x8xf32>
    %91 = tpu.matmul %89, %90, %cst_34 {dimension_numbers = #tpu.dot_dimension_numbers<[1], [0], [0], [1], [0, 0, 1, 1], [], []>} : vector<8x8xbf16>, vector<8x8xbf16>, vector<8x8xf32> -> vector<8x8xf32>
    %c0_35 = arith.constant 0 : index
    %c24 = arith.constant 24 : index
    %92 = vector.load %arg12[%c0_35, %c24] : memref<8x32xf32, #tpu.memory_space<vmem>>, vector<8x8xf32>
    tpu.vector_store %arg12[%c0_35, %c24], %91 {strides = array<i32>} : memref<8x32xf32, #tpu.memory_space<vmem>>, vector<8x8xf32>,
    %c0_36 = arith.constant 0 : index
    %c0_37 = arith.constant 0 : index
    %93 = vector.load %arg12[%c0_36, %c0_37] : memref<8x32xf32, #tpu.memory_space<vmem>>, vector<8x32xf32>
    %94 = arith.truncf %93 : vector<8x32xf32> to vector<8x32xbf16>
    %c0_38 = arith.constant 0 : index
    %c0_39 = arith.constant 0 : index
    %95 = vector.load %arg7[%c0_38, %c0_39] : memref<32x32xbf16, #tpu.memory_space<vmem>>, vector<32x32xbf16>
    %cst_40 = arith.constant dense<0.000000e+00> : vector<8x32xf32>
    %96 = tpu.matmul %94, %95, %cst_40 {dimension_numbers = #tpu.dot_dimension_numbers<[1], [0], [0], [1], [0, 0, 1, 1], [], []>} : vector<8x32xbf16>, vector<32x32xbf16>, vector<8x32xf32> -> vector<8x32xf32>
    %c0_41 = arith.constant 0 : index
    %c0_42 = arith.constant 0 : index
    %97 = vector.load %arg8[%c0_41, %c0_42] : memref<1x32xf32, #tpu.memory_space<vmem>>, vector<1x32xf32>
    %98 = vector.broadcast %97 : vector<1x32xf32> to vector<8x32xf32>
    %99 = arith.addf %96, %98 : vector<8x32xf32>
    %100 = arith.extf %1 : vector<8x32xbf16> to vector<8x32xf32>
    %101 = arith.addf %100, %99 : vector<8x32xf32>
    %cst_43 = arith.constant dense<0.000000e+00> : vector<8xf32>
    %102 = vector.multi_reduction <add>, %101, %cst_43 [1] : vector<8x32xf32> to vector<8xf32>
    %103 = vector.shape_cast %102 : vector<8xf32> to vector<8x1xf32>
    %cst_44 = arith.constant 3.200000e+01 : f32
    %104 = vector.broadcast %cst_44 : f32 to vector<8x1xf32>
    %105 = arith.divf %103, %104 : vector<8x1xf32>
    %106 = vector.broadcast %105 : vector<8x1xf32> to vector<8x32xf32>
    %107 = arith.subf %101, %106 : vector<8x32xf32>
    %108 = arith.mulf %107, %107 : vector<8x32xf32>
    %cst_45 = arith.constant dense<0.000000e+00> : vector<8xf32>
    %109 = vector.multi_reduction <add>, %108, %cst_45 [1] : vector<8x32xf32> to vector<8xf32>
    %110 = vector.shape_cast %109 : vector<8xf32> to vector<8x1xf32>
    %cst_46 = arith.constant 3.200000e+01 : f32
    %111 = vector.broadcast %cst_46 : f32 to vector<8x1xf32>
    %112 = arith.divf %110, %111 : vector<8x1xf32>
    %113 = vector.broadcast %105 : vector<8x1xf32> to vector<8x32xf32>
    %114 = arith.subf %101, %113 : vector<8x32xf32>
    %cst_47 = arith.constant 9.99999974E-6 : f32
    %115 = vector.broadcast %cst_47 : f32 to vector<8x1xf32>
    %116 = arith.addf %112, %115 : vector<8x1xf32>
    %117 = math.rsqrt %116 : vector<8x1xf32>
    %118 = vector.broadcast %117 : vector<8x1xf32> to vector<8x32xf32>
    %119 = arith.mulf %114, %118 : vector<8x32xf32>
    %c0_48 = arith.constant 0 : index
    %c0_49 = arith.constant 0 : index
    %120 = vector.load %arg9[%c0_48, %c0_49] : memref<1x32xf32, #tpu.memory_space<vmem>>, vector<1x32xf32>
    %121 = vector.broadcast %120 : vector<1x32xf32> to vector<8x32xf32>
    %122 = arith.mulf %119, %121 : vector<8x32xf32>
    %c0_50 = arith.constant 0 : index
    %c0_51 = arith.constant 0 : index
    %123 = vector.load %arg10[%c0_50, %c0_51] : memref<1x32xf32, #tpu.memory_space<vmem>>, vector<1x32xf32>
    %124 = vector.broadcast %123 : vector<1x32xf32> to vector<8x32xf32>
    %125 = arith.addf %122, %124 : vector<8x32xf32>
    %126 = arith.truncf %125 : vector<8x32xf32> to vector<8x32xbf16>
    %c0_52 = arith.constant 0 : index
    %c0_53 = arith.constant 0 : index
    %c0_54 = arith.constant 0 : index
    %127 = vector.load %arg11[%c0_52, %c0_53, %c0_54] : memref<1x8x32xbf16, #tpu.memory_space<vmem>>, vector<1x8x32xbf16>
    %128 = vector.shape_cast %127 : vector<1x8x32xbf16> to vector<8x32xbf16>
    %129 = vector.shape_cast %126 : vector<8x32xbf16> to vector<1x8x32xbf16>
    tpu.vector_store %arg11[%c0_52, %c0_53, %c0_54], %129 {strides = array<i32>} : memref<1x8x32xbf16, #tpu.memory_space<vmem>>, vector<1x8x32xbf16>,
    return
  }
  func.func @transform_0(%arg0: i32) -> (i32, i32, i32) {
    %c0_i32 = arith.constant 0 : i32
    %c0_i32_0 = arith.constant 0 : i32
    %c0_i32_1 = arith.constant 0 : i32
    return %arg0, %c0_i32, %c0_i32_0 : i32, i32, i32
  }
  func.func @transform_1(%arg0: i32) -> (i32, i32, i32) {
    %c0_i32 = arith.constant 0 : i32
    %c0_i32_0 = arith.constant 0 : i32
    %c0_i32_1 = arith.constant 0 : i32
    %c0_i32_2 = arith.constant 0 : i32
    return %c0_i32, %c0_i32_0, %c0_i32_1 : i32, i32, i32
  }
  func.func @transform_2(%arg0: i32) -> (i32, i32) {
    %c0_i32 = arith.constant 0 : i32
    %c0_i32_0 = arith.constant 0 : i32
    %c0_i32_1 = arith.constant 0 : i32
    return %c0_i32, %c0_i32_0 : i32, i32
  }
  func.func @transform_3(%arg0: i32) -> (i32, i32) {
    %c0_i32 = arith.constant 0 : i32
    %c0_i32_0 = arith.constant 0 : i32
    %c0_i32_1 = arith.constant 0 : i32
    return %c0_i32, %c0_i32_0 : i32, i32
  }
  func.func @transform_4(%arg0: i32) -> (i32, i32) {
    %c0_i32 = arith.constant 0 : i32
    %c0_i32_0 = arith.constant 0 : i32
    %c0_i32_1 = arith.constant 0 : i32
    return %c0_i32, %c0_i32_0 : i32, i32
  }
  func.func @transform_5(%arg0: i32) -> (i32, i32) {
    %c0_i32 = arith.constant 0 : i32
    %c0_i32_0 = arith.constant 0 : i32
    %c0_i32_1 = arith.constant 0 : i32
    return %c0_i32, %c0_i32_0 : i32, i32
  }
  func.func @transform_6(%arg0: i32) -> (i32, i32) {
    %c0_i32 = arith.constant 0 : i32
    %c0_i32_0 = arith.constant 0 : i32
    %c0_i32_1 = arith.constant 0 : i32
    return %c0_i32, %c0_i32_0 : i32, i32
  }
  func.func @transform_7(%arg0: i32) -> (i32, i32) {
    %c0_i32 = arith.constant 0 : i32
    %c0_i32_0 = arith.constant 0 : i32
    %c0_i32_1 = arith.constant 0 : i32
    return %c0_i32, %c0_i32_0 : i32, i32
  }
  func.func @transform_8(%arg0: i32) -> (i32, i32) {
    %c0_i32 = arith.constant 0 : i32
    %c0_i32_0 = arith.constant 0 : i32
    %c0_i32_1 = arith.constant 0 : i32
    return %c0_i32, %c0_i32_0 : i32, i32
  }
  func.func @transform_9(%arg0: i32) -> (i32, i32) {
    %c0_i32 = arith.constant 0 : i32
    %c0_i32_0 = arith.constant 0 : i32
    %c0_i32_1 = arith.constant 0 : i32
    return %c0_i32, %c0_i32_0 : i32, i32
  }
  func.func @transform_10(%arg0: i32) -> (i32, i32, i32) {
    %c0_i32 = arith.constant 0 : i32
    %c0_i32_0 = arith.constant 0 : i32
    %c0_i32_1 = arith.constant 0 : i32
    return %arg0, %c0_i32, %c0_i32_0 : i32, i32, i32
  }
}

module attributes {stable_mosaic.version = 11 : i64} {
  func.func @_cross_attn_ln_kernel(%arg0: i32, %arg1: memref<1x8x32xbf16, #tpu.memory_space<vmem>>, %arg2: memref<1x8x64xbf16, #tpu.memory_space<vmem>>, %arg3: memref<1x1x8xf32, #tpu.memory_space<vmem>>, %arg4: memref<32x32xbf16, #tpu.memory_space<vmem>>, %arg5: memref<1x32xf32, #tpu.memory_space<vmem>>, %arg6: memref<32x32xbf16, #tpu.memory_space<vmem>>, %arg7: memref<1x32xf32, #tpu.memory_space<vmem>>, %arg8: memref<1x32xf32, #tpu.memory_space<vmem>>, %arg9: memref<1x32xf32, #tpu.memory_space<vmem>>, %arg10: memref<1x8x32xbf16, #tpu.memory_space<vmem>>, %arg11: memref<8x32xf32, #tpu.memory_space<vmem>>) attributes {dimension_semantics = [#tpu.dimension_semantics<parallel>], iteration_bounds = array<i64: 2>, scalar_prefetch = 0 : i64, scratch_operands = 1 : i64, tpu.core_type = #tpu.core_type<tc>, window_params = [{transform_indices = @transform_0, window_bounds = array<i64: 1, 8, 32>}, {transform_indices = @transform_1, window_bounds = array<i64: 1, 8, 64>}, {transform_indices = @transform_2, window_bounds = array<i64: 1, 1, 8>}, {pipeline_mode = #tpu.pipeline_mode<synchronous>, transform_indices = @transform_3, window_bounds = array<i64: 32, 32>}, {pipeline_mode = #tpu.pipeline_mode<synchronous>, transform_indices = @transform_4, window_bounds = array<i64: 1, 32>}, {pipeline_mode = #tpu.pipeline_mode<synchronous>, transform_indices = @transform_5, window_bounds = array<i64: 32, 32>}, {pipeline_mode = #tpu.pipeline_mode<synchronous>, transform_indices = @transform_6, window_bounds = array<i64: 1, 32>}, {pipeline_mode = #tpu.pipeline_mode<synchronous>, transform_indices = @transform_7, window_bounds = array<i64: 1, 32>}, {pipeline_mode = #tpu.pipeline_mode<synchronous>, transform_indices = @transform_8, window_bounds = array<i64: 1, 32>}, {transform_indices = @transform_9, window_bounds = array<i64: 1, 8, 32>}]} {
    %c0 = arith.constant 0 : index
    %c0_0 = arith.constant 0 : index
    %c0_1 = arith.constant 0 : index
    %0 = vector.load %arg1[%c0, %c0_0, %c0_1] : memref<1x8x32xbf16, #tpu.memory_space<vmem>>, vector<1x8x32xbf16>
    %1 = vector.shape_cast %0 : vector<1x8x32xbf16> to vector<8x32xbf16>
    %c0_2 = arith.constant 0 : index
    %c0_3 = arith.constant 0 : index
    %c0_4 = arith.constant 0 : index
    %2 = vector.load %arg2[%c0_2, %c0_3, %c0_4] : memref<1x8x64xbf16, #tpu.memory_space<vmem>>, vector<1x8x64xbf16>
    %3 = vector.shape_cast %2 : vector<1x8x64xbf16> to vector<8x64xbf16>
    %c0_5 = arith.constant 0 : index
    %c0_6 = arith.constant 0 : index
    %c0_7 = arith.constant 0 : index
    %4 = vector.load %arg3[%c0_5, %c0_6, %c0_7] : memref<1x1x8xf32, #tpu.memory_space<vmem>>, vector<1x1x8xf32>
    %5 = vector.shape_cast %4 : vector<1x1x8xf32> to vector<1x8xf32>
    %c0_8 = arith.constant 0 : index
    %c0_9 = arith.constant 0 : index
    %6 = vector.load %arg4[%c0_8, %c0_9] : memref<32x32xbf16, #tpu.memory_space<vmem>>, vector<32x32xbf16>
    %cst = arith.constant dense<0.000000e+00> : vector<8x32xf32>
    %7 = tpu.matmul %1, %6, %cst {dimension_numbers = #tpu.dot_dimension_numbers<[1], [0], [0], [1], [0, 0, 1, 1], [], []>} : vector<8x32xbf16>, vector<32x32xbf16>, vector<8x32xf32> -> vector<8x32xf32>
    %c0_10 = arith.constant 0 : index
    %c0_11 = arith.constant 0 : index
    %8 = vector.load %arg5[%c0_10, %c0_11] : memref<1x32xf32, #tpu.memory_space<vmem>>, vector<1x32xf32>
    %9 = vector.broadcast %8 : vector<1x32xf32> to vector<8x32xf32>
    %10 = arith.addf %7, %9 : vector<8x32xf32>
    %cst_12 = arith.constant 0.353553385 : f32
    %11 = vector.broadcast %cst_12 : f32 to vector<8x32xf32>
    %12 = arith.mulf %10, %11 : vector<8x32xf32>
    %13 = arith.truncf %12 : vector<8x32xf32> to vector<8x32xbf16>
    %14 = vector.extract_strided_slice %3 {offsets = [0, 0], sizes = [8, 32], strides = [1, 1]} : vector<8x64xbf16> to vector<8x32xbf16>
    %15 = vector.extract_strided_slice %3 {offsets = [0, 32], sizes = [8, 32], strides = [1, 1]} : vector<8x64xbf16> to vector<8x32xbf16>
    %16 = vector.extract_strided_slice %13 {offsets = [0, 0], sizes = [8, 8], strides = [1, 1]} : vector<8x32xbf16> to vector<8x8xbf16>
    %17 = vector.extract_strided_slice %14 {offsets = [0, 0], sizes = [8, 8], strides = [1, 1]} : vector<8x32xbf16> to vector<8x8xbf16>
    %cst_13 = arith.constant dense<0.000000e+00> : vector<8x8xf32>
    %18 = tpu.matmul %16, %17, %cst_13 {dimension_numbers = #tpu.dot_dimension_numbers<[1], [1], [0], [0], [0, 0, 1, 0], [], []>} : vector<8x8xbf16>, vector<8x8xbf16>, vector<8x8xf32> -> vector<8x8xf32>
    %19 = vector.broadcast %5 : vector<1x8xf32> to vector<8x8xf32>
    %20 = arith.addf %18, %19 : vector<8x8xf32>
    %cst_14 = arith.constant dense<0xFF800000> : vector<8xf32>
    %21 = vector.multi_reduction <maximumf>, %20, %cst_14 [1] : vector<8x8xf32> to vector<8xf32>
    %22 = vector.shape_cast %21 : vector<8xf32> to vector<8x1xf32>
    %23 = vector.broadcast %22 : vector<8x1xf32> to vector<8x8xf32>
    %24 = arith.subf %20, %23 : vector<8x8xf32>
    %25 = math.exp %24 : vector<8x8xf32>
    %cst_15 = arith.constant dense<0.000000e+00> : vector<8xf32>
    %26 = vector.multi_reduction <add>, %25, %cst_15 [1] : vector<8x8xf32> to vector<8xf32>
    %27 = vector.shape_cast %26 : vector<8xf32> to vector<8x1xf32>
    %28 = tpu.reciprocal %27 {approx = true} : vector<8x1xf32> -> vector<8x1xf32>
    %29 = vector.broadcast %28 : vector<8x1xf32> to vector<8x8xf32>
    %30 = arith.mulf %25, %29 : vector<8x8xf32>
    %31 = arith.truncf %30 : vector<8x8xf32> to vector<8x8xbf16>
    %32 = vector.extract_strided_slice %15 {offsets = [0, 0], sizes = [8, 8], strides = [1, 1]} : vector<8x32xbf16> to vector<8x8xbf16>
    %cst_16 = arith.constant dense<0.000000e+00> : vector<8x8xf32>
    %33 = tpu.matmul %31, %32, %cst_16 {dimension_numbers = #tpu.dot_dimension_numbers<[1], [0], [0], [1], [0, 0, 1, 1], [], []>} : vector<8x8xbf16>, vector<8x8xbf16>, vector<8x8xf32> -> vector<8x8xf32>
    %c0_17 = arith.constant 0 : index
    %c0_18 = arith.constant 0 : index
    %34 = vector.load %arg11[%c0_17, %c0_18] : memref<8x32xf32, #tpu.memory_space<vmem>>, vector<8x8xf32>
    tpu.vector_store %arg11[%c0_17, %c0_18], %33 {strides = array<i32>} : memref<8x32xf32, #tpu.memory_space<vmem>>, vector<8x8xf32>,
    %35 = vector.extract_strided_slice %13 {offsets = [0, 8], sizes = [8, 8], strides = [1, 1]} : vector<8x32xbf16> to vector<8x8xbf16>
    %36 = vector.extract_strided_slice %14 {offsets = [0, 8], sizes = [8, 8], strides = [1, 1]} : vector<8x32xbf16> to vector<8x8xbf16>
    %cst_19 = arith.constant dense<0.000000e+00> : vector<8x8xf32>
    %37 = tpu.matmul %35, %36, %cst_19 {dimension_numbers = #tpu.dot_dimension_numbers<[1], [1], [0], [0], [0, 0, 1, 0], [], []>} : vector<8x8xbf16>, vector<8x8xbf16>, vector<8x8xf32> -> vector<8x8xf32>
    %38 = vector.broadcast %5 : vector<1x8xf32> to vector<8x8xf32>
    %39 = arith.addf %37, %38 : vector<8x8xf32>
    %cst_20 = arith.constant dense<0xFF800000> : vector<8xf32>
    %40 = vector.multi_reduction <maximumf>, %39, %cst_20 [1] : vector<8x8xf32> to vector<8xf32>
    %41 = vector.shape_cast %40 : vector<8xf32> to vector<8x1xf32>
    %42 = vector.broadcast %41 : vector<8x1xf32> to vector<8x8xf32>
    %43 = arith.subf %39, %42 : vector<8x8xf32>
    %44 = math.exp %43 : vector<8x8xf32>
    %cst_21 = arith.constant dense<0.000000e+00> : vector<8xf32>
    %45 = vector.multi_reduction <add>, %44, %cst_21 [1] : vector<8x8xf32> to vector<8xf32>
    %46 = vector.shape_cast %45 : vector<8xf32> to vector<8x1xf32>
    %47 = tpu.reciprocal %46 {approx = true} : vector<8x1xf32> -> vector<8x1xf32>
    %48 = vector.broadcast %47 : vector<8x1xf32> to vector<8x8xf32>
    %49 = arith.mulf %44, %48 : vector<8x8xf32>
    %50 = arith.truncf %49 : vector<8x8xf32> to vector<8x8xbf16>
    %51 = vector.extract_strided_slice %15 {offsets = [0, 8], sizes = [8, 8], strides = [1, 1]} : vector<8x32xbf16> to vector<8x8xbf16>
    %cst_22 = arith.constant dense<0.000000e+00> : vector<8x8xf32>
    %52 = tpu.matmul %50, %51, %cst_22 {dimension_numbers = #tpu.dot_dimension_numbers<[1], [0], [0], [1], [0, 0, 1, 1], [], []>} : vector<8x8xbf16>, vector<8x8xbf16>, vector<8x8xf32> -> vector<8x8xf32>
    %c0_23 = arith.constant 0 : index
    %c8 = arith.constant 8 : index
    %53 = vector.load %arg11[%c0_23, %c8] : memref<8x32xf32, #tpu.memory_space<vmem>>, vector<8x8xf32>
    tpu.vector_store %arg11[%c0_23, %c8], %52 {strides = array<i32>} : memref<8x32xf32, #tpu.memory_space<vmem>>, vector<8x8xf32>,
    %54 = vector.extract_strided_slice %13 {offsets = [0, 16], sizes = [8, 8], strides = [1, 1]} : vector<8x32xbf16> to vector<8x8xbf16>
    %55 = vector.extract_strided_slice %14 {offsets = [0, 16], sizes = [8, 8], strides = [1, 1]} : vector<8x32xbf16> to vector<8x8xbf16>
    %cst_24 = arith.constant dense<0.000000e+00> : vector<8x8xf32>
    %56 = tpu.matmul %54, %55, %cst_24 {dimension_numbers = #tpu.dot_dimension_numbers<[1], [1], [0], [0], [0, 0, 1, 0], [], []>} : vector<8x8xbf16>, vector<8x8xbf16>, vector<8x8xf32> -> vector<8x8xf32>
    %57 = vector.broadcast %5 : vector<1x8xf32> to vector<8x8xf32>
    %58 = arith.addf %56, %57 : vector<8x8xf32>
    %cst_25 = arith.constant dense<0xFF800000> : vector<8xf32>
    %59 = vector.multi_reduction <maximumf>, %58, %cst_25 [1] : vector<8x8xf32> to vector<8xf32>
    %60 = vector.shape_cast %59 : vector<8xf32> to vector<8x1xf32>
    %61 = vector.broadcast %60 : vector<8x1xf32> to vector<8x8xf32>
    %62 = arith.subf %58, %61 : vector<8x8xf32>
    %63 = math.exp %62 : vector<8x8xf32>
    %cst_26 = arith.constant dense<0.000000e+00> : vector<8xf32>
    %64 = vector.multi_reduction <add>, %63, %cst_26 [1] : vector<8x8xf32> to vector<8xf32>
    %65 = vector.shape_cast %64 : vector<8xf32> to vector<8x1xf32>
    %66 = tpu.reciprocal %65 {approx = true} : vector<8x1xf32> -> vector<8x1xf32>
    %67 = vector.broadcast %66 : vector<8x1xf32> to vector<8x8xf32>
    %68 = arith.mulf %63, %67 : vector<8x8xf32>
    %69 = arith.truncf %68 : vector<8x8xf32> to vector<8x8xbf16>
    %70 = vector.extract_strided_slice %15 {offsets = [0, 16], sizes = [8, 8], strides = [1, 1]} : vector<8x32xbf16> to vector<8x8xbf16>
    %cst_27 = arith.constant dense<0.000000e+00> : vector<8x8xf32>
    %71 = tpu.matmul %69, %70, %cst_27 {dimension_numbers = #tpu.dot_dimension_numbers<[1], [0], [0], [1], [0, 0, 1, 1], [], []>} : vector<8x8xbf16>, vector<8x8xbf16>, vector<8x8xf32> -> vector<8x8xf32>
    %c0_28 = arith.constant 0 : index
    %c16 = arith.constant 16 : index
    %72 = vector.load %arg11[%c0_28, %c16] : memref<8x32xf32, #tpu.memory_space<vmem>>, vector<8x8xf32>
    tpu.vector_store %arg11[%c0_28, %c16], %71 {strides = array<i32>} : memref<8x32xf32, #tpu.memory_space<vmem>>, vector<8x8xf32>,
    %73 = vector.extract_strided_slice %13 {offsets = [0, 24], sizes = [8, 8], strides = [1, 1]} : vector<8x32xbf16> to vector<8x8xbf16>
    %74 = vector.extract_strided_slice %14 {offsets = [0, 24], sizes = [8, 8], strides = [1, 1]} : vector<8x32xbf16> to vector<8x8xbf16>
    %cst_29 = arith.constant dense<0.000000e+00> : vector<8x8xf32>
    %75 = tpu.matmul %73, %74, %cst_29 {dimension_numbers = #tpu.dot_dimension_numbers<[1], [1], [0], [0], [0, 0, 1, 0], [], []>} : vector<8x8xbf16>, vector<8x8xbf16>, vector<8x8xf32> -> vector<8x8xf32>
    %76 = vector.broadcast %5 : vector<1x8xf32> to vector<8x8xf32>
    %77 = arith.addf %75, %76 : vector<8x8xf32>
    %cst_30 = arith.constant dense<0xFF800000> : vector<8xf32>
    %78 = vector.multi_reduction <maximumf>, %77, %cst_30 [1] : vector<8x8xf32> to vector<8xf32>
    %79 = vector.shape_cast %78 : vector<8xf32> to vector<8x1xf32>
    %80 = vector.broadcast %79 : vector<8x1xf32> to vector<8x8xf32>
    %81 = arith.subf %77, %80 : vector<8x8xf32>
    %82 = math.exp %81 : vector<8x8xf32>
    %cst_31 = arith.constant dense<0.000000e+00> : vector<8xf32>
    %83 = vector.multi_reduction <add>, %82, %cst_31 [1] : vector<8x8xf32> to vector<8xf32>
    %84 = vector.shape_cast %83 : vector<8xf32> to vector<8x1xf32>
    %85 = tpu.reciprocal %84 {approx = true} : vector<8x1xf32> -> vector<8x1xf32>
    %86 = vector.broadcast %85 : vector<8x1xf32> to vector<8x8xf32>
    %87 = arith.mulf %82, %86 : vector<8x8xf32>
    %88 = arith.truncf %87 : vector<8x8xf32> to vector<8x8xbf16>
    %89 = vector.extract_strided_slice %15 {offsets = [0, 24], sizes = [8, 8], strides = [1, 1]} : vector<8x32xbf16> to vector<8x8xbf16>
    %cst_32 = arith.constant dense<0.000000e+00> : vector<8x8xf32>
    %90 = tpu.matmul %88, %89, %cst_32 {dimension_numbers = #tpu.dot_dimension_numbers<[1], [0], [0], [1], [0, 0, 1, 1], [], []>} : vector<8x8xbf16>, vector<8x8xbf16>, vector<8x8xf32> -> vector<8x8xf32>
    %c0_33 = arith.constant 0 : index
    %c24 = arith.constant 24 : index
    %91 = vector.load %arg11[%c0_33, %c24] : memref<8x32xf32, #tpu.memory_space<vmem>>, vector<8x8xf32>
    tpu.vector_store %arg11[%c0_33, %c24], %90 {strides = array<i32>} : memref<8x32xf32, #tpu.memory_space<vmem>>, vector<8x8xf32>,
    %c0_34 = arith.constant 0 : index
    %c0_35 = arith.constant 0 : index
    %92 = vector.load %arg11[%c0_34, %c0_35] : memref<8x32xf32, #tpu.memory_space<vmem>>, vector<8x32xf32>
    %93 = arith.truncf %92 : vector<8x32xf32> to vector<8x32xbf16>
    %c0_36 = arith.constant 0 : index
    %c0_37 = arith.constant 0 : index
    %94 = vector.load %arg6[%c0_36, %c0_37] : memref<32x32xbf16, #tpu.memory_space<vmem>>, vector<32x32xbf16>
    %cst_38 = arith.constant dense<0.000000e+00> : vector<8x32xf32>
    %95 = tpu.matmul %93, %94, %cst_38 {dimension_numbers = #tpu.dot_dimension_numbers<[1], [0], [0], [1], [0, 0, 1, 1], [], []>} : vector<8x32xbf16>, vector<32x32xbf16>, vector<8x32xf32> -> vector<8x32xf32>
    %c0_39 = arith.constant 0 : index
    %c0_40 = arith.constant 0 : index
    %96 = vector.load %arg7[%c0_39, %c0_40] : memref<1x32xf32, #tpu.memory_space<vmem>>, vector<1x32xf32>
    %97 = vector.broadcast %96 : vector<1x32xf32> to vector<8x32xf32>
    %98 = arith.addf %95, %97 : vector<8x32xf32>
    %99 = arith.extf %1 : vector<8x32xbf16> to vector<8x32xf32>
    %100 = arith.addf %99, %98 : vector<8x32xf32>
    %cst_41 = arith.constant dense<0.000000e+00> : vector<8xf32>
    %101 = vector.multi_reduction <add>, %100, %cst_41 [1] : vector<8x32xf32> to vector<8xf32>
    %102 = vector.shape_cast %101 : vector<8xf32> to vector<8x1xf32>
    %cst_42 = arith.constant 3.200000e+01 : f32
    %103 = vector.broadcast %cst_42 : f32 to vector<8x1xf32>
    %104 = arith.divf %102, %103 : vector<8x1xf32>
    %105 = vector.broadcast %104 : vector<8x1xf32> to vector<8x32xf32>
    %106 = arith.subf %100, %105 : vector<8x32xf32>
    %107 = arith.mulf %106, %106 : vector<8x32xf32>
    %cst_43 = arith.constant dense<0.000000e+00> : vector<8xf32>
    %108 = vector.multi_reduction <add>, %107, %cst_43 [1] : vector<8x32xf32> to vector<8xf32>
    %109 = vector.shape_cast %108 : vector<8xf32> to vector<8x1xf32>
    %cst_44 = arith.constant 3.200000e+01 : f32
    %110 = vector.broadcast %cst_44 : f32 to vector<8x1xf32>
    %111 = arith.divf %109, %110 : vector<8x1xf32>
    %112 = vector.broadcast %104 : vector<8x1xf32> to vector<8x32xf32>
    %113 = arith.subf %100, %112 : vector<8x32xf32>
    %cst_45 = arith.constant 9.99999974E-6 : f32
    %114 = vector.broadcast %cst_45 : f32 to vector<8x1xf32>
    %115 = arith.addf %111, %114 : vector<8x1xf32>
    %116 = math.rsqrt %115 : vector<8x1xf32>
    %117 = vector.broadcast %116 : vector<8x1xf32> to vector<8x32xf32>
    %118 = arith.mulf %113, %117 : vector<8x32xf32>
    %c0_46 = arith.constant 0 : index
    %c0_47 = arith.constant 0 : index
    %119 = vector.load %arg8[%c0_46, %c0_47] : memref<1x32xf32, #tpu.memory_space<vmem>>, vector<1x32xf32>
    %120 = vector.broadcast %119 : vector<1x32xf32> to vector<8x32xf32>
    %121 = arith.mulf %118, %120 : vector<8x32xf32>
    %c0_48 = arith.constant 0 : index
    %c0_49 = arith.constant 0 : index
    %122 = vector.load %arg9[%c0_48, %c0_49] : memref<1x32xf32, #tpu.memory_space<vmem>>, vector<1x32xf32>
    %123 = vector.broadcast %122 : vector<1x32xf32> to vector<8x32xf32>
    %124 = arith.addf %121, %123 : vector<8x32xf32>
    %125 = arith.truncf %124 : vector<8x32xf32> to vector<8x32xbf16>
    %c0_50 = arith.constant 0 : index
    %c0_51 = arith.constant 0 : index
    %c0_52 = arith.constant 0 : index
    %126 = vector.load %arg10[%c0_50, %c0_51, %c0_52] : memref<1x8x32xbf16, #tpu.memory_space<vmem>>, vector<1x8x32xbf16>
    %127 = vector.shape_cast %126 : vector<1x8x32xbf16> to vector<8x32xbf16>
    %128 = vector.shape_cast %125 : vector<8x32xbf16> to vector<1x8x32xbf16>
    tpu.vector_store %arg10[%c0_50, %c0_51, %c0_52], %128 {strides = array<i32>} : memref<1x8x32xbf16, #tpu.memory_space<vmem>>, vector<1x8x32xbf16>,
    return
  }
  func.func @transform_0(%arg0: i32) -> (i32, i32, i32) {
    %c0_i32 = arith.constant 0 : i32
    %c0_i32_0 = arith.constant 0 : i32
    %c0_i32_1 = arith.constant 0 : i32
    return %arg0, %c0_i32, %c0_i32_0 : i32, i32, i32
  }
  func.func @transform_1(%arg0: i32) -> (i32, i32, i32) {
    %c0_i32 = arith.constant 0 : i32
    %c0_i32_0 = arith.constant 0 : i32
    %c0_i32_1 = arith.constant 0 : i32
    return %arg0, %c0_i32, %c0_i32_0 : i32, i32, i32
  }
  func.func @transform_2(%arg0: i32) -> (i32, i32, i32) {
    %c0_i32 = arith.constant 0 : i32
    %c0_i32_0 = arith.constant 0 : i32
    %c0_i32_1 = arith.constant 0 : i32
    return %arg0, %c0_i32, %c0_i32_0 : i32, i32, i32
  }
  func.func @transform_3(%arg0: i32) -> (i32, i32) {
    %c0_i32 = arith.constant 0 : i32
    %c0_i32_0 = arith.constant 0 : i32
    %c0_i32_1 = arith.constant 0 : i32
    return %c0_i32, %c0_i32_0 : i32, i32
  }
  func.func @transform_4(%arg0: i32) -> (i32, i32) {
    %c0_i32 = arith.constant 0 : i32
    %c0_i32_0 = arith.constant 0 : i32
    %c0_i32_1 = arith.constant 0 : i32
    return %c0_i32, %c0_i32_0 : i32, i32
  }
  func.func @transform_5(%arg0: i32) -> (i32, i32) {
    %c0_i32 = arith.constant 0 : i32
    %c0_i32_0 = arith.constant 0 : i32
    %c0_i32_1 = arith.constant 0 : i32
    return %c0_i32, %c0_i32_0 : i32, i32
  }
  func.func @transform_6(%arg0: i32) -> (i32, i32) {
    %c0_i32 = arith.constant 0 : i32
    %c0_i32_0 = arith.constant 0 : i32
    %c0_i32_1 = arith.constant 0 : i32
    return %c0_i32, %c0_i32_0 : i32, i32
  }
  func.func @transform_7(%arg0: i32) -> (i32, i32) {
    %c0_i32 = arith.constant 0 : i32
    %c0_i32_0 = arith.constant 0 : i32
    %c0_i32_1 = arith.constant 0 : i32
    return %c0_i32, %c0_i32_0 : i32, i32
  }
  func.func @transform_8(%arg0: i32) -> (i32, i32) {
    %c0_i32 = arith.constant 0 : i32
    %c0_i32_0 = arith.constant 0 : i32
    %c0_i32_1 = arith.constant 0 : i32
    return %c0_i32, %c0_i32_0 : i32, i32
  }
  func.func @transform_9(%arg0: i32) -> (i32, i32, i32) {
    %c0_i32 = arith.constant 0 : i32
    %c0_i32_0 = arith.constant 0 : i32
    %c0_i32_1 = arith.constant 0 : i32
    return %arg0, %c0_i32, %c0_i32_0 : i32, i32, i32
  }
}

module attributes {stable_mosaic.version = 11 : i64} {
  func.func @_ffn_ln_kernel(%arg0: i32, %arg1: memref<16x32xbf16, #tpu.memory_space<vmem>>, %arg2: memref<32x64xbf16, #tpu.memory_space<vmem>>, %arg3: memref<1x64xf32, #tpu.memory_space<vmem>>, %arg4: memref<64x32xbf16, #tpu.memory_space<vmem>>, %arg5: memref<1x32xf32, #tpu.memory_space<vmem>>, %arg6: memref<1x32xf32, #tpu.memory_space<vmem>>, %arg7: memref<1x32xf32, #tpu.memory_space<vmem>>, %arg8: memref<16x32xbf16, #tpu.memory_space<vmem>>) attributes {dimension_semantics = [#tpu.dimension_semantics<parallel>], iteration_bounds = array<i64: 1>, scalar_prefetch = 0 : i64, scratch_operands = 0 : i64, tpu.core_type = #tpu.core_type<tc>, window_params = [{transform_indices = @transform_0, window_bounds = array<i64: 16, 32>}, {pipeline_mode = #tpu.pipeline_mode<synchronous>, transform_indices = @transform_1, window_bounds = array<i64: 32, 64>}, {pipeline_mode = #tpu.pipeline_mode<synchronous>, transform_indices = @transform_2, window_bounds = array<i64: 1, 64>}, {pipeline_mode = #tpu.pipeline_mode<synchronous>, transform_indices = @transform_3, window_bounds = array<i64: 64, 32>}, {pipeline_mode = #tpu.pipeline_mode<synchronous>, transform_indices = @transform_4, window_bounds = array<i64: 1, 32>}, {pipeline_mode = #tpu.pipeline_mode<synchronous>, transform_indices = @transform_5, window_bounds = array<i64: 1, 32>}, {pipeline_mode = #tpu.pipeline_mode<synchronous>, transform_indices = @transform_6, window_bounds = array<i64: 1, 32>}, {transform_indices = @transform_7, window_bounds = array<i64: 16, 32>}]} {
    %c0 = arith.constant 0 : index
    %c0_0 = arith.constant 0 : index
    %0 = vector.load %arg1[%c0, %c0_0] : memref<16x32xbf16, #tpu.memory_space<vmem>>, vector<16x32xbf16>
    %c0_1 = arith.constant 0 : index
    %c0_2 = arith.constant 0 : index
    %1 = vector.load %arg2[%c0_1, %c0_2] : memref<32x64xbf16, #tpu.memory_space<vmem>>, vector<32x64xbf16>
    %cst = arith.constant dense<0.000000e+00> : vector<16x64xf32>
    %2 = tpu.matmul %0, %1, %cst {dimension_numbers = #tpu.dot_dimension_numbers<[1], [0], [0], [1], [0, 0, 1, 1], [], []>} : vector<16x32xbf16>, vector<32x64xbf16>, vector<16x64xf32> -> vector<16x64xf32>
    %c0_3 = arith.constant 0 : index
    %c0_4 = arith.constant 0 : index
    %3 = vector.load %arg3[%c0_3, %c0_4] : memref<1x64xf32, #tpu.memory_space<vmem>>, vector<1x64xf32>
    %4 = vector.broadcast %3 : vector<1x64xf32> to vector<16x64xf32>
    %5 = arith.addf %2, %4 : vector<16x64xf32>
    %cst_5 = arith.constant 0.000000e+00 : f32
    %6 = vector.broadcast %cst_5 : f32 to vector<16x64xf32>
    %7 = arith.maximumf %5, %6 : vector<16x64xf32>
    %8 = arith.truncf %7 : vector<16x64xf32> to vector<16x64xbf16>
    %c0_6 = arith.constant 0 : index
    %c0_7 = arith.constant 0 : index
    %9 = vector.load %arg4[%c0_6, %c0_7] : memref<64x32xbf16, #tpu.memory_space<vmem>>, vector<64x32xbf16>
    %cst_8 = arith.constant dense<0.000000e+00> : vector<16x32xf32>
    %10 = tpu.matmul %8, %9, %cst_8 {dimension_numbers = #tpu.dot_dimension_numbers<[1], [0], [0], [1], [0, 0, 1, 1], [], []>} : vector<16x64xbf16>, vector<64x32xbf16>, vector<16x32xf32> -> vector<16x32xf32>
    %c0_9 = arith.constant 0 : index
    %c0_10 = arith.constant 0 : index
    %11 = vector.load %arg5[%c0_9, %c0_10] : memref<1x32xf32, #tpu.memory_space<vmem>>, vector<1x32xf32>
    %12 = vector.broadcast %11 : vector<1x32xf32> to vector<16x32xf32>
    %13 = arith.addf %10, %12 : vector<16x32xf32>
    %14 = arith.extf %0 : vector<16x32xbf16> to vector<16x32xf32>
    %15 = arith.addf %14, %13 : vector<16x32xf32>
    %cst_11 = arith.constant dense<0.000000e+00> : vector<16xf32>
    %16 = vector.multi_reduction <add>, %15, %cst_11 [1] : vector<16x32xf32> to vector<16xf32>
    %17 = vector.shape_cast %16 : vector<16xf32> to vector<16x1xf32>
    %cst_12 = arith.constant 3.200000e+01 : f32
    %18 = vector.broadcast %cst_12 : f32 to vector<16x1xf32>
    %19 = arith.divf %17, %18 : vector<16x1xf32>
    %20 = vector.broadcast %19 : vector<16x1xf32> to vector<16x32xf32>
    %21 = arith.subf %15, %20 : vector<16x32xf32>
    %22 = arith.mulf %21, %21 : vector<16x32xf32>
    %cst_13 = arith.constant dense<0.000000e+00> : vector<16xf32>
    %23 = vector.multi_reduction <add>, %22, %cst_13 [1] : vector<16x32xf32> to vector<16xf32>
    %24 = vector.shape_cast %23 : vector<16xf32> to vector<16x1xf32>
    %cst_14 = arith.constant 3.200000e+01 : f32
    %25 = vector.broadcast %cst_14 : f32 to vector<16x1xf32>
    %26 = arith.divf %24, %25 : vector<16x1xf32>
    %27 = vector.broadcast %19 : vector<16x1xf32> to vector<16x32xf32>
    %28 = arith.subf %15, %27 : vector<16x32xf32>
    %cst_15 = arith.constant 9.99999974E-6 : f32
    %29 = vector.broadcast %cst_15 : f32 to vector<16x1xf32>
    %30 = arith.addf %26, %29 : vector<16x1xf32>
    %31 = math.rsqrt %30 : vector<16x1xf32>
    %32 = vector.broadcast %31 : vector<16x1xf32> to vector<16x32xf32>
    %33 = arith.mulf %28, %32 : vector<16x32xf32>
    %c0_16 = arith.constant 0 : index
    %c0_17 = arith.constant 0 : index
    %34 = vector.load %arg6[%c0_16, %c0_17] : memref<1x32xf32, #tpu.memory_space<vmem>>, vector<1x32xf32>
    %35 = vector.broadcast %34 : vector<1x32xf32> to vector<16x32xf32>
    %36 = arith.mulf %33, %35 : vector<16x32xf32>
    %c0_18 = arith.constant 0 : index
    %c0_19 = arith.constant 0 : index
    %37 = vector.load %arg7[%c0_18, %c0_19] : memref<1x32xf32, #tpu.memory_space<vmem>>, vector<1x32xf32>
    %38 = vector.broadcast %37 : vector<1x32xf32> to vector<16x32xf32>
    %39 = arith.addf %36, %38 : vector<16x32xf32>
    %40 = arith.truncf %39 : vector<16x32xf32> to vector<16x32xbf16>
    %c0_20 = arith.constant 0 : index
    %c0_21 = arith.constant 0 : index
    %41 = vector.load %arg8[%c0_20, %c0_21] : memref<16x32xbf16, #tpu.memory_space<vmem>>, vector<16x32xbf16>
    tpu.vector_store %arg8[%c0_20, %c0_21], %40 {strides = array<i32>} : memref<16x32xbf16, #tpu.memory_space<vmem>>, vector<16x32xbf16>,
    return
  }
  func.func @transform_0(%arg0: i32) -> (i32, i32) {
    %c0_i32 = arith.constant 0 : i32
    %c0_i32_0 = arith.constant 0 : i32
    return %arg0, %c0_i32 : i32, i32
  }
  func.func @transform_1(%arg0: i32) -> (i32, i32) {
    %c0_i32 = arith.constant 0 : i32
    %c0_i32_0 = arith.constant 0 : i32
    %c0_i32_1 = arith.constant 0 : i32
    return %c0_i32, %c0_i32_0 : i32, i32
  }
  func.func @transform_2(%arg0: i32) -> (i32, i32) {
    %c0_i32 = arith.constant 0 : i32
    %c0_i32_0 = arith.constant 0 : i32
    %c0_i32_1 = arith.constant 0 : i32
    return %c0_i32, %c0_i32_0 : i32, i32
  }
  func.func @transform_3(%arg0: i32) -> (i32, i32) {
    %c0_i32 = arith.constant 0 : i32
    %c0_i32_0 = arith.constant 0 : i32
    %c0_i32_1 = arith.constant 0 : i32
    return %c0_i32, %c0_i32_0 : i32, i32
  }
  func.func @transform_4(%arg0: i32) -> (i32, i32) {
    %c0_i32 = arith.constant 0 : i32
    %c0_i32_0 = arith.constant 0 : i32
    %c0_i32_1 = arith.constant 0 : i32
    return %c0_i32, %c0_i32_0 : i32, i32
  }
  func.func @transform_5(%arg0: i32) -> (i32, i32) {
    %c0_i32 = arith.constant 0 : i32
    %c0_i32_0 = arith.constant 0 : i32
    %c0_i32_1 = arith.constant 0 : i32
    return %c0_i32, %c0_i32_0 : i32, i32
  }
  func.func @transform_6(%arg0: i32) -> (i32, i32) {
    %c0_i32 = arith.constant 0 : i32
    %c0_i32_0 = arith.constant 0 : i32
    %c0_i32_1 = arith.constant 0 : i32
    return %c0_i32, %c0_i32_0 : i32, i32
  }
  func.func @transform_7(%arg0: i32) -> (i32, i32) {
    %c0_i32 = arith.constant 0 : i32
    %c0_i32_0 = arith.constant 0 : i32
    return %arg0, %c0_i32 : i32, i32
  }
}

module attributes {stable_mosaic.version = 11 : i64} {
  func.func @_ffn_ln_kernel(%arg0: i32, %arg1: memref<16x32xbf16, #tpu.memory_space<vmem>>, %arg2: memref<32x64xbf16, #tpu.memory_space<vmem>>, %arg3: memref<1x64xf32, #tpu.memory_space<vmem>>, %arg4: memref<64x32xbf16, #tpu.memory_space<vmem>>, %arg5: memref<1x32xf32, #tpu.memory_space<vmem>>, %arg6: memref<1x32xf32, #tpu.memory_space<vmem>>, %arg7: memref<1x32xf32, #tpu.memory_space<vmem>>, %arg8: memref<1x32xf32, #tpu.memory_space<vmem>>, %arg9: memref<1x32xf32, #tpu.memory_space<vmem>>, %arg10: memref<16x32xf32, #tpu.memory_space<vmem>>) attributes {dimension_semantics = [#tpu.dimension_semantics<parallel>], iteration_bounds = array<i64: 1>, scalar_prefetch = 0 : i64, scratch_operands = 0 : i64, tpu.core_type = #tpu.core_type<tc>, window_params = [{transform_indices = @transform_0, window_bounds = array<i64: 16, 32>}, {pipeline_mode = #tpu.pipeline_mode<synchronous>, transform_indices = @transform_1, window_bounds = array<i64: 32, 64>}, {pipeline_mode = #tpu.pipeline_mode<synchronous>, transform_indices = @transform_2, window_bounds = array<i64: 1, 64>}, {pipeline_mode = #tpu.pipeline_mode<synchronous>, transform_indices = @transform_3, window_bounds = array<i64: 64, 32>}, {pipeline_mode = #tpu.pipeline_mode<synchronous>, transform_indices = @transform_4, window_bounds = array<i64: 1, 32>}, {pipeline_mode = #tpu.pipeline_mode<synchronous>, transform_indices = @transform_5, window_bounds = array<i64: 1, 32>}, {pipeline_mode = #tpu.pipeline_mode<synchronous>, transform_indices = @transform_6, window_bounds = array<i64: 1, 32>}, {pipeline_mode = #tpu.pipeline_mode<synchronous>, transform_indices = @transform_7, window_bounds = array<i64: 1, 32>}, {pipeline_mode = #tpu.pipeline_mode<synchronous>, transform_indices = @transform_8, window_bounds = array<i64: 1, 32>}, {transform_indices = @transform_9, window_bounds = array<i64: 16, 32>}]} {
    %c0 = arith.constant 0 : index
    %c0_0 = arith.constant 0 : index
    %0 = vector.load %arg1[%c0, %c0_0] : memref<16x32xbf16, #tpu.memory_space<vmem>>, vector<16x32xbf16>
    %c0_1 = arith.constant 0 : index
    %c0_2 = arith.constant 0 : index
    %1 = vector.load %arg2[%c0_1, %c0_2] : memref<32x64xbf16, #tpu.memory_space<vmem>>, vector<32x64xbf16>
    %cst = arith.constant dense<0.000000e+00> : vector<16x64xf32>
    %2 = tpu.matmul %0, %1, %cst {dimension_numbers = #tpu.dot_dimension_numbers<[1], [0], [0], [1], [0, 0, 1, 1], [], []>} : vector<16x32xbf16>, vector<32x64xbf16>, vector<16x64xf32> -> vector<16x64xf32>
    %c0_3 = arith.constant 0 : index
    %c0_4 = arith.constant 0 : index
    %3 = vector.load %arg3[%c0_3, %c0_4] : memref<1x64xf32, #tpu.memory_space<vmem>>, vector<1x64xf32>
    %4 = vector.broadcast %3 : vector<1x64xf32> to vector<16x64xf32>
    %5 = arith.addf %2, %4 : vector<16x64xf32>
    %cst_5 = arith.constant 0.000000e+00 : f32
    %6 = vector.broadcast %cst_5 : f32 to vector<16x64xf32>
    %7 = arith.maximumf %5, %6 : vector<16x64xf32>
    %8 = arith.truncf %7 : vector<16x64xf32> to vector<16x64xbf16>
    %c0_6 = arith.constant 0 : index
    %c0_7 = arith.constant 0 : index
    %9 = vector.load %arg4[%c0_6, %c0_7] : memref<64x32xbf16, #tpu.memory_space<vmem>>, vector<64x32xbf16>
    %cst_8 = arith.constant dense<0.000000e+00> : vector<16x32xf32>
    %10 = tpu.matmul %8, %9, %cst_8 {dimension_numbers = #tpu.dot_dimension_numbers<[1], [0], [0], [1], [0, 0, 1, 1], [], []>} : vector<16x64xbf16>, vector<64x32xbf16>, vector<16x32xf32> -> vector<16x32xf32>
    %c0_9 = arith.constant 0 : index
    %c0_10 = arith.constant 0 : index
    %11 = vector.load %arg5[%c0_9, %c0_10] : memref<1x32xf32, #tpu.memory_space<vmem>>, vector<1x32xf32>
    %12 = vector.broadcast %11 : vector<1x32xf32> to vector<16x32xf32>
    %13 = arith.addf %10, %12 : vector<16x32xf32>
    %14 = arith.extf %0 : vector<16x32xbf16> to vector<16x32xf32>
    %15 = arith.addf %14, %13 : vector<16x32xf32>
    %cst_11 = arith.constant dense<0.000000e+00> : vector<16xf32>
    %16 = vector.multi_reduction <add>, %15, %cst_11 [1] : vector<16x32xf32> to vector<16xf32>
    %17 = vector.shape_cast %16 : vector<16xf32> to vector<16x1xf32>
    %cst_12 = arith.constant 3.200000e+01 : f32
    %18 = vector.broadcast %cst_12 : f32 to vector<16x1xf32>
    %19 = arith.divf %17, %18 : vector<16x1xf32>
    %20 = vector.broadcast %19 : vector<16x1xf32> to vector<16x32xf32>
    %21 = arith.subf %15, %20 : vector<16x32xf32>
    %22 = arith.mulf %21, %21 : vector<16x32xf32>
    %cst_13 = arith.constant dense<0.000000e+00> : vector<16xf32>
    %23 = vector.multi_reduction <add>, %22, %cst_13 [1] : vector<16x32xf32> to vector<16xf32>
    %24 = vector.shape_cast %23 : vector<16xf32> to vector<16x1xf32>
    %cst_14 = arith.constant 3.200000e+01 : f32
    %25 = vector.broadcast %cst_14 : f32 to vector<16x1xf32>
    %26 = arith.divf %24, %25 : vector<16x1xf32>
    %27 = vector.broadcast %19 : vector<16x1xf32> to vector<16x32xf32>
    %28 = arith.subf %15, %27 : vector<16x32xf32>
    %cst_15 = arith.constant 9.99999974E-6 : f32
    %29 = vector.broadcast %cst_15 : f32 to vector<16x1xf32>
    %30 = arith.addf %26, %29 : vector<16x1xf32>
    %31 = math.rsqrt %30 : vector<16x1xf32>
    %32 = vector.broadcast %31 : vector<16x1xf32> to vector<16x32xf32>
    %33 = arith.mulf %28, %32 : vector<16x32xf32>
    %c0_16 = arith.constant 0 : index
    %c0_17 = arith.constant 0 : index
    %34 = vector.load %arg6[%c0_16, %c0_17] : memref<1x32xf32, #tpu.memory_space<vmem>>, vector<1x32xf32>
    %35 = vector.broadcast %34 : vector<1x32xf32> to vector<16x32xf32>
    %36 = arith.mulf %33, %35 : vector<16x32xf32>
    %c0_18 = arith.constant 0 : index
    %c0_19 = arith.constant 0 : index
    %37 = vector.load %arg7[%c0_18, %c0_19] : memref<1x32xf32, #tpu.memory_space<vmem>>, vector<1x32xf32>
    %38 = vector.broadcast %37 : vector<1x32xf32> to vector<16x32xf32>
    %39 = arith.addf %36, %38 : vector<16x32xf32>
    %cst_20 = arith.constant dense<0.000000e+00> : vector<16xf32>
    %40 = vector.multi_reduction <add>, %39, %cst_20 [1] : vector<16x32xf32> to vector<16xf32>
    %41 = vector.shape_cast %40 : vector<16xf32> to vector<16x1xf32>
    %cst_21 = arith.constant 3.200000e+01 : f32
    %42 = vector.broadcast %cst_21 : f32 to vector<16x1xf32>
    %43 = arith.divf %41, %42 : vector<16x1xf32>
    %44 = vector.broadcast %43 : vector<16x1xf32> to vector<16x32xf32>
    %45 = arith.subf %39, %44 : vector<16x32xf32>
    %46 = arith.mulf %45, %45 : vector<16x32xf32>
    %cst_22 = arith.constant dense<0.000000e+00> : vector<16xf32>
    %47 = vector.multi_reduction <add>, %46, %cst_22 [1] : vector<16x32xf32> to vector<16xf32>
    %48 = vector.shape_cast %47 : vector<16xf32> to vector<16x1xf32>
    %cst_23 = arith.constant 3.200000e+01 : f32
    %49 = vector.broadcast %cst_23 : f32 to vector<16x1xf32>
    %50 = arith.divf %48, %49 : vector<16x1xf32>
    %51 = vector.broadcast %43 : vector<16x1xf32> to vector<16x32xf32>
    %52 = arith.subf %39, %51 : vector<16x32xf32>
    %cst_24 = arith.constant 9.99999974E-6 : f32
    %53 = vector.broadcast %cst_24 : f32 to vector<16x1xf32>
    %54 = arith.addf %50, %53 : vector<16x1xf32>
    %55 = math.rsqrt %54 : vector<16x1xf32>
    %56 = vector.broadcast %55 : vector<16x1xf32> to vector<16x32xf32>
    %57 = arith.mulf %52, %56 : vector<16x32xf32>
    %c0_25 = arith.constant 0 : index
    %c0_26 = arith.constant 0 : index
    %58 = vector.load %arg8[%c0_25, %c0_26] : memref<1x32xf32, #tpu.memory_space<vmem>>, vector<1x32xf32>
    %59 = vector.broadcast %58 : vector<1x32xf32> to vector<16x32xf32>
    %60 = arith.mulf %57, %59 : vector<16x32xf32>
    %c0_27 = arith.constant 0 : index
    %c0_28 = arith.constant 0 : index
    %61 = vector.load %arg9[%c0_27, %c0_28] : memref<1x32xf32, #tpu.memory_space<vmem>>, vector<1x32xf32>
    %62 = vector.broadcast %61 : vector<1x32xf32> to vector<16x32xf32>
    %63 = arith.addf %60, %62 : vector<16x32xf32>
    %c0_29 = arith.constant 0 : index
    %c0_30 = arith.constant 0 : index
    %64 = vector.load %arg10[%c0_29, %c0_30] : memref<16x32xf32, #tpu.memory_space<vmem>>, vector<16x32xf32>
    tpu.vector_store %arg10[%c0_29, %c0_30], %63 {strides = array<i32>} : memref<16x32xf32, #tpu.memory_space<vmem>>, vector<16x32xf32>,
    return
  }
  func.func @transform_0(%arg0: i32) -> (i32, i32) {
    %c0_i32 = arith.constant 0 : i32
    %c0_i32_0 = arith.constant 0 : i32
    return %arg0, %c0_i32 : i32, i32
  }
  func.func @transform_1(%arg0: i32) -> (i32, i32) {
    %c0_i32 = arith.constant 0 : i32
    %c0_i32_0 = arith.constant 0 : i32
    %c0_i32_1 = arith.constant 0 : i32
    return %c0_i32, %c0_i32_0 : i32, i32
  }
  func.func @transform_2(%arg0: i32) -> (i32, i32) {
    %c0_i32 = arith.constant 0 : i32
    %c0_i32_0 = arith.constant 0 : i32
    %c0_i32_1 = arith.constant 0 : i32
    return %c0_i32, %c0_i32_0 : i32, i32
  }
  func.func @transform_3(%arg0: i32) -> (i32, i32) {
    %c0_i32 = arith.constant 0 : i32
    %c0_i32_0 = arith.constant 0 : i32
    %c0_i32_1 = arith.constant 0 : i32
    return %c0_i32, %c0_i32_0 : i32, i32
  }
  func.func @transform_4(%arg0: i32) -> (i32, i32) {
    %c0_i32 = arith.constant 0 : i32
    %c0_i32_0 = arith.constant 0 : i32
    %c0_i32_1 = arith.constant 0 : i32
    return %c0_i32, %c0_i32_0 : i32, i32
  }
  func.func @transform_5(%arg0: i32) -> (i32, i32) {
    %c0_i32 = arith.constant 0 : i32
    %c0_i32_0 = arith.constant 0 : i32
    %c0_i32_1 = arith.constant 0 : i32
    return %c0_i32, %c0_i32_0 : i32, i32
  }
  func.func @transform_6(%arg0: i32) -> (i32, i32) {
    %c0_i32 = arith.constant 0 : i32
    %c0_i32_0 = arith.constant 0 : i32
    %c0_i32_1 = arith.constant 0 : i32
    return %c0_i32, %c0_i32_0 : i32, i32
  }
  func.func @transform_7(%arg0: i32) -> (i32, i32) {
    %c0_i32 = arith.constant 0 : i32
    %c0_i32_0 = arith.constant 0 : i32
    %c0_i32_1 = arith.constant 0 : i32
    return %c0_i32, %c0_i32_0 : i32, i32
  }
  func.func @transform_8(%arg0: i32) -> (i32, i32) {
    %c0_i32 = arith.constant 0 : i32
    %c0_i32_0 = arith.constant 0 : i32
    %c0_i32_1 = arith.constant 0 : i32
    return %c0_i32, %c0_i32_0 : i32, i32
  }
  func.func @transform_9(%arg0: i32) -> (i32, i32) {
    %c0_i32 = arith.constant 0 : i32
    %c0_i32_0 = arith.constant 0 : i32
    return %arg0, %c0_i32 : i32, i32
  }
}

</mosaic_0001>

<llo_original>
// kernel: gsum_decoder_forward.11
$region0: #{gsum_decoder_forward.11}
  #allocation0 [shape = 'u32[]', space=smem, size = 0x4, offset = 0x4, fixed_abs, tag = 'smem constant byte address 0x4 - core index']
  #allocation1 [shape = 'u32[144,128]{1,0:T(1,128)}', space=vmem, size = 0x12000, scoped, tag = 'internal scratch']
  %s0 = inlined_call_operand.vmem [shape: f32[16,32], index: 0, kind: input, shape index: {}]
  %s1 = inlined_call_operand.vmem [shape: bf16[32,64], index: 1, kind: input, shape index: {}]
  %s2 = inlined_call_operand.hbm [shape: f32[1,64], index: 2, kind: input, shape index: {}]
  %s3 = inlined_call_operand.vmem [shape: bf16[16,64], index: 3, kind: output, shape index: {}]
  %s4 = sld [smem:[#allocation0]]
  $region26: #{gsum_decoder_forward.11} parent=0
    _
  %s6 = ssub.s32 1, %s4
  %s7 = scalar_select 0, %s6, %s4
  $region1: #{gsum_decoder_forward.11} parent=0
    #allocation2 [shape = 'u8[512]{0}', space=vmem, size = 0x400, scoped, tag = 'input window, operand 2, single buffered']
    #allocation3 [shape = 's32[1]{0}', space=sflag, size = 0x4, scoped, tag = 'scoped memory for gsum_decoder_forward.11']
    %8 = vsyncpa [#allocation3], 0
    // Predicated region
    $region2: #{gsum_decoder_forward.11} parent=1 // pred_check
      _
    $region3: #{gsum_decoder_forward.11} parent=1 // pred_check_branch
      %10 = sbr.rel (0) target = $region5
    $region4: #{gsum_decoder_forward.11} parent=1 // pred_region
      _
    $region5: #{gsum_decoder_forward.11} parent=1 // pred_fallthru
      _
    // Predicated region
    $region6: #{gsum_decoder_forward.11} parent=1 // pred_check
      _
    $region7: #{gsum_decoder_forward.11} parent=1 // pred_check_branch
      %12 = sbr.rel (0) target = $region9
    $region8: #{gsum_decoder_forward.11} parent=1 // pred_region
      _
    $region9: #{gsum_decoder_forward.11} parent=1 // pred_fallthru
      _
    // Predicated region
    $region10: #{gsum_decoder_forward.11} parent=1 // pred_check
      _
    $region11: #{gsum_decoder_forward.11} parent=1 // pred_check_branch
      %14 = sbr.rel (0) target = $region13
    $region12: #{gsum_decoder_forward.11} parent=1 // pred_region
      %s16 = ssub.s32 16, 16
      %17 = vsyncadd [#allocation3], %s16
      %s19 = sshll.u32 [#allocation2], 4
      %s20 = int_to_ptr.vmem [resolvable:$true] %s19
      %22 = dma.hbm_to_vmem [thread:$0]  %s2, 16, %s20, [#allocation3]
    $region13: #{gsum_decoder_forward.11} parent=1 // pred_fallthru
      _
    // Predicated region
    $region14: #{gsum_decoder_forward.11} parent=1 // pred_check
      _
    $region15: #{gsum_decoder_forward.11} parent=1 // pred_check_branch
      %24 = sbr.rel (0) target = $region17
    $region16: #{gsum_decoder_forward.11} parent=1 // pred_region
      %25 = dma.done [#allocation3], 16
    $region17: #{gsum_decoder_forward.11} parent=1 // pred_fallthru
      _
    %v27 = vld [vmem:[%s0] sm:$0xff]
    %v28 = vld [vmem:[%s0 + $0x8] sm:$0xff]
    %v29 = vpack.c.bf16 %v28, %v27
    %v30 = vld [vmem:[%s1] sm:$0xf]
    %v31 = vld [vmem:[%s1 + $0x4] sm:$0xf]
    %v32 = vld [vmem:[%s1 + $0x8] sm:$0xf]
    %v33 = vld [vmem:[%s1 + $0xc] sm:$0xf]
    %v34 = vld [vmem:[#allocation2] sm:$0x1]
    %v36 = vlaneseq
    %v37 = vshrl.u32 %v36, 7
    %v38 = vsub.s32 0, %v37
    %v39 = vrot.slane %v34, %v38
    %v45 = vunpack.c.l.b16 %v30
    %v46 = vunpack.c.l.b16 %v31
    %v47 = vunpack.c.l.b16 %v32
    %v48 = vunpack.c.l.b16 %v33
    %v49 = vpack.c.b16 %v46, %v45
    %v50 = vpack.c.b16 %v48, %v47
    %vm53 = vcmask 261120
    %v55 = vsel %vm53, %v29, 0
    %57 = vmatprep.subr.bf16.mxu0 0
    %58 = vmatpush1.bf16.msra.mxu0 %v49
    %59 = vmatprep.subr.bf16.mxu0 0
    %60 = vmatpush1.bf16.msra.mxu0 %v50
    %61 = vmatprep.subr.bf16.mxu0 0
    %62 = vmatpush1.bf16.msra.mxu0 0
    %63 = vmatprep.subr.bf16.mxu0 0
    %64 = vmatpush1.bf16.msra.mxu0 0
    %65 = vmatprep.subr.bf16.mxu0 0
    %66 = vmatpush1.bf16.msra.mxu0 0
    %67 = vmatprep.subr.bf16.mxu0 0
    %68 = vmatpush1.bf16.msra.mxu0 0
    %69 = vmatprep.subr.bf16.mxu0 0
    %70 = vmatpush1.bf16.msra.mxu0 0
    %71 = vmatprep.subr.bf16.mxu0 0
    %72 = vmatpush1.bf16.msra.mxu0 0
    %73 = vmatprep.subr.bf16.mxu0 0
    %74 = vmatpush1.bf16.msra.mxu0 0
    %75 = vmatprep.subr.bf16.mxu0 0
    %76 = vmatpush1.bf16.msra.mxu0 0
    %77 = vmatprep.subr.bf16.mxu0 0
    %78 = vmatpush1.bf16.msra.mxu0 0
    %79 = vmatprep.subr.bf16.mxu0 0
    %80 = vmatpush1.bf16.msra.mxu0 0
    %81 = vmatprep.subr.bf16.mxu0 0
    %82 = vmatpush1.bf16.msra.mxu0 0
    %83 = vmatprep.subr.bf16.mxu0 0
    %84 = vmatpush1.bf16.msra.mxu0 0
    %85 = vmatprep.subr.bf16.mxu0 0
    %86 = vmatpush1.bf16.msra.mxu0 0
    %87 = vmatprep.subr.bf16.mxu0 0
    %88 = vmatpush1.bf16.msra.mxu0 0
    %89 = vmatprep.mubr.bf16.mxu0 0
    %90 = vmatmul.mubr.bf16.gmra.mrb[0].mxu0 %v55
    %v91 = vpop.f32.mrb[0].mxu0
    %v92 = vadd.f32 %v39, %v91
    %v93 = vpop.f32.mrb[0].mxu0
    %v94 = vpop.f32.mrb[0].mxu0
    %v95 = vadd.f32 %v39, %v94
    %v96 = vpop.f32.mrb[0].mxu0
    %97 = vdwg.mxu0
    %v98 = vpack.c.bf16 %v95, %v92
    %v100 = vunpack.c.l.b16 %v98
    %v101 = vunpack.c.h.b16 %v98
    %v102 = vpack.c.b16 %v100, %v100
    %v103 = vpack.c.b16 %v101, %v101
    %vm106 = vcmask 519168
    %107 = vst.msk [vmem:[%s3] sm:$0xf] %vm106, %v102
    %108 = vst.msk [vmem:[%s3 + $0x4] sm:$0xf] %vm106, %v103
    // Predicated region
    $region18: #{gsum_decoder_forward.11} parent=1 // pred_check
      _
    $region19: #{gsum_decoder_forward.11} parent=1 // pred_check_branch
      %110 = sbr.rel (0) target = $region21
    $region20: #{gsum_decoder_forward.11} parent=1 // pred_region
      _
    $region21: #{gsum_decoder_forward.11} parent=1 // pred_fallthru
      _
    // Predicated region
    $region22: #{gsum_decoder_forward.11} parent=1 // pred_check
      _
    $region23: #{gsum_decoder_forward.11} parent=1 // pred_check_branch
      %112 = sbr.rel (0) target = $region25
    $region24: #{gsum_decoder_forward.11} parent=1 // pred_region
      _
    $region25: #{gsum_decoder_forward.11} parent=1 // pred_fallthru
      _
    %113 = vsyncpa [#allocation3], 1

// kernel: gsum_decoder_forward.10
$region0: #{gsum_decoder_forward.10}
  #allocation0 [shape = 'u32[]', space=smem, size = 0x4, offset = 0x4, fixed_abs, tag = 'smem constant byte address 0x4 - core index']
  #allocation1 [shape = 'u32[144,128]{1,0:T(1,128)}', space=vmem, size = 0x12000, scoped, tag = 'internal scratch']
  %s0 = inlined_call_operand.vmem [shape: f32[32,32], index: 0, kind: input, shape index: {}]
  %s1 = inlined_call_operand.vmem [shape: bf16[32,64], index: 1, kind: input, shape index: {}]
  %s2 = inlined_call_operand.vmem [shape: f32[1,64], index: 2, kind: input, shape index: {}]
  %s3 = inlined_call_operand.vmem [shape: bf16[32,64], index: 3, kind: output, shape index: {}]
  %s4 = sld [smem:[#allocation0]]
  $region22: #{gsum_decoder_forward.10} parent=0
    _
  %s6 = ssub.s32 1, %s4
  %s7 = scalar_select 0, %s6, %s4
  // Predicated region
  $region2: #{gsum_decoder_forward.10} parent=0 // pred_check
    _
  $region3: #{gsum_decoder_forward.10} parent=0 // pred_check_branch
    %9 = sbr.rel (0) target = $region5
  $region4: #{gsum_decoder_forward.10} parent=0 // pred_region
    _
  $region5: #{gsum_decoder_forward.10} parent=0 // pred_fallthru
    _
  // Predicated region
  $region6: #{gsum_decoder_forward.10} parent=0 // pred_check
    _
  $region7: #{gsum_decoder_forward.10} parent=0 // pred_check_branch
    %11 = sbr.rel (0) target = $region9
  $region8: #{gsum_decoder_forward.10} parent=0 // pred_region
    _
  $region9: #{gsum_decoder_forward.10} parent=0 // pred_fallthru
    _
  // Predicated region
  $region10: #{gsum_decoder_forward.10} parent=0 // pred_check
    _
  $region11: #{gsum_decoder_forward.10} parent=0 // pred_check_branch
    %13 = sbr.rel (0) target = $region13
  $region12: #{gsum_decoder_forward.10} parent=0 // pred_region
    _
  $region13: #{gsum_decoder_forward.10} parent=0 // pred_fallthru
    _
  %v15 = vld [vmem:[%s0] sm:$0xff]
  %v16 = vld [vmem:[%s0 + $0x8] sm:$0xff]
  %v17 = vld [vmem:[%s0 + $0x10] sm:$0xff]
  %v18 = vld [vmem:[%s0 + $0x18] sm:$0xff]
  %v19 = vpack.c.bf16 %v16, %v15
  %v20 = vpack.c.bf16 %v18, %v17
  %v21 = vld [vmem:[%s1] sm:$0xf]
  %v22 = vld [vmem:[%s1 + $0x4] sm:$0xf]
  %v23 = vld [vmem:[%s1 + $0x8] sm:$0xf]
  %v24 = vld [vmem:[%s1 + $0xc] sm:$0xf]
  %v25 = vld [vmem:[%s2] sm:$0x1]
  %v27 = vlaneseq
  %v28 = vshrl.u32 %v27, 7
  %v29 = vsub.s32 0, %v28
  %v30 = vrot.slane %v25, %v29
  %v36 = vunpack.c.l.b16 %v21
  %v37 = vunpack.c.l.b16 %v22
  %v38 = vunpack.c.l.b16 %v23
  %v39 = vunpack.c.l.b16 %v24
  %v40 = vpack.c.b16 %v37, %v36
  %v41 = vpack.c.b16 %v39, %v38
  %vm44 = vcmask 261120
  %v46 = vsel %vm44, %v19, 0
  %v49 = vsel %vm44, %v20, 0
  %51 = vmatprep.subr.bf16.mxu0 0
  %52 = vmatpush1.bf16.msra.mxu0 %v40
  %53 = vmatprep.subr.bf16.mxu0 0
  %54 = vmatpush1.bf16.msra.mxu0 %v41
  %55 = vmatprep.subr.bf16.mxu0 0
  %56 = vmatpush1.bf16.msra.mxu0 0
  %57 = vmatprep.subr.bf16.mxu0 0
  %58 = vmatpush1.bf16.msra.mxu0 0
  %59 = vmatprep.subr.bf16.mxu0 0
  %60 = vmatpush1.bf16.msra.mxu0 0
  %61 = vmatprep.subr.bf16.mxu0 0
  %62 = vmatpush1.bf16.msra.mxu0 0
  %63 = vmatprep.subr.bf16.mxu0 0
  %64 = vmatpush1.bf16.msra.mxu0 0
  %65 = vmatprep.subr.bf16.mxu0 0
  %66 = vmatpush1.bf16.msra.mxu0 0
  %67 = vmatprep.subr.bf16.mxu0 0
  %68 = vmatpush1.bf16.msra.mxu0 0
  %69 = vmatprep.subr.bf16.mxu0 0
  %70 = vmatpush1.bf16.msra.mxu0 0
  %71 = vmatprep.subr.bf16.mxu0 0
  %72 = vmatpush1.bf16.msra.mxu0 0
  %73 = vmatprep.subr.bf16.mxu0 0
  %74 = vmatpush1.bf16.msra.mxu0 0
  %75 = vmatprep.subr.bf16.mxu0 0
  %76 = vmatpush1.bf16.msra.mxu0 0
  %77 = vmatprep.subr.bf16.mxu0 0
  %78 = vmatpush1.bf16.msra.mxu0 0
  %79 = vmatprep.subr.bf16.mxu0 0
  %80 = vmatpush1.bf16.msra.mxu0 0
  %81 = vmatprep.subr.bf16.mxu0 0
  %82 = vmatpush1.bf16.msra.mxu0 0
  %83 = vmatprep.mubr.bf16.mxu0 0
  %84 = vmatmul.mubr.bf16.gmra.mrb[0].mxu0 %v46
  %v85 = vpop.f32.mrb[0].mxu0
  %v86 = vadd.f32 %v30, %v85
  %v87 = vpop.f32.mrb[0].mxu0
  %v88 = vpop.f32.mrb[0].mxu0
  %v89 = vadd.f32 %v30, %v88
  %v90 = vpop.f32.mrb[0].mxu0
  %91 = vmatprep.mubr.bf16.mxu0 0
  %92 = vmatmul.mubr.bf16.gmra.mrb[0].mxu0 %v49
  %v93 = vpop.f32.mrb[0].mxu0
  %v94 = vadd.f32 %v30, %v93
  %v95 = vpop.f32.mrb[0].mxu0
  %v96 = vpop.f32.mrb[0].mxu0
  %v97 = vadd.f32 %v30, %v96
  %v98 = vpop.f32.mrb[0].mxu0
  %99 = vdwg.mxu0
  %v100 = vpack.c.bf16 %v89, %v86
  %v101 = vpack.c.bf16 %v97, %v94
  %v104 = vunpack.c.l.b16 %v100
  %v105 = vunpack.c.h.b16 %v100
  %v106 = vunpack.c.l.b16 %v101
  %v107 = vunpack.c.h.b16 %v101
  %v108 = vpack.c.b16 %v104, %v104
  %v109 = vpack.c.b16 %v105, %v105
  %v110 = vpack.c.b16 %v106, %v106
  %v111 = vpack.c.b16 %v107, %v107
  %vm116 = vcmask 519168
  %117 = vst.msk [vmem:[%s3] sm:$0xf] %vm116, %v108
  %118 = vst.msk [vmem:[%s3 + $0x4] sm:$0xf] %vm116, %v109
  %119 = vst.msk [vmem:[%s3 + $0x8] sm:$0xf] %vm116, %v110
  %120 = vst.msk [vmem:[%s3 + $0xc] sm:$0xf] %vm116, %v111
  // Predicated region
  $region14: #{gsum_decoder_forward.10} parent=0 // pred_check
    _
  $region15: #{gsum_decoder_forward.10} parent=0 // pred_check_branch
    %122 = sbr.rel (0) target = $region17
  $region16: #{gsum_decoder_forward.10} parent=0 // pred_region
    _
  $region17: #{gsum_decoder_forward.10} parent=0 // pred_fallthru
    _
  // Predicated region
  $region18: #{gsum_decoder_forward.10} parent=0 // pred_check
    _
  $region19: #{gsum_decoder_forward.10} parent=0 // pred_check_branch
    %124 = sbr.rel (0) target = $region21
  $region20: #{gsum_decoder_forward.10} parent=0 // pred_region
    _
  $region21: #{gsum_decoder_forward.10} parent=0 // pred_fallthru
    _

// kernel: gsum_decoder_forward.13
$region0: #{gsum_decoder_forward.13}
  #allocation0 [shape = 'u32[]', space=smem, size = 0x4, offset = 0x4, fixed_abs, tag = 'smem constant byte address 0x4 - core index']
  #allocation1 [shape = 'u32[144,128]{1,0:T(1,128)}', space=vmem, size = 0x12000, scoped, tag = 'internal scratch']
  #allocation2 [shape = 'f32[8,32]{1,0:T(8,128)}', space=vmem, size = 0x1000, scoped, tag = 'scratch operand']
  %s0 = inlined_call_operand.vmem [shape: bf16[2,8,32], index: 0, kind: input, shape index: {}]
  %s1 = inlined_call_operand.vmem [shape: bf16[2,16,64], index: 1, kind: input, shape index: {}]
  %s2 = inlined_call_operand.vmem [shape: f32[2,1,16], index: 2, kind: input, shape index: {}]
  %s3 = inlined_call_operand.vmem [shape: bf16[32,32], index: 3, kind: input, shape index: {}]
  %s4 = inlined_call_operand.vmem [shape: f32[1,32], index: 4, kind: input, shape index: {}]
  %s5 = inlined_call_operand.vmem [shape: bf16[32,32], index: 5, kind: input, shape index: {}]
  %s6 = inlined_call_operand.vmem [shape: f32[1,32], index: 6, kind: input, shape index: {}]
  %s7 = inlined_call_operand.vmem [shape: f32[1,32], index: 7, kind: input, shape index: {}]
  %s8 = inlined_call_operand.vmem [shape: f32[1,32], index: 8, kind: input, shape index: {}]
  %s9 = inlined_call_operand.vmem [shape: bf16[2,8,32], index: 9, kind: output, shape index: {}]
  %s10 = sld [smem:[#allocation0]]
  $region69: #{gsum_decoder_forward.13} parent=0
    _
  %s12 = ssub.s32 1, %s10
  %s13 = scalar_select 0, %s12, %s10
  loop: start=0, step=1, limit=4
  $region2: #{gsum_decoder_forward.13} parent=0 // loop_pre_header
    _
  $region3: #{gsum_decoder_forward.13} parent=0 // loop_header
    %s15 = sphi 0, %s19
    %p16 = scmp.ge.s32.totalorder %s15, 4
    %s25 = sphi 0, %s27
    %s28 = sphi 0, %s25
    %s29 = sphi 0, %s28
    %s45 = sphi 0, %s29
    %s51 = sphi 0, %s53
    %s54 = sphi 0, %s51
    %s55 = sphi 0, %s54
    %s71 = sphi 0, %s55
    %s77 = sphi 0, %s79
    %s80 = sphi 0, %s77
    %s81 = sphi 0, %s80
    %s97 = sphi 0, %s81
    %s101 = sphi 0, %s101
    %s103 = sphi 0, %s101
    %s104 = sphi 0, %s103
    %s118 = sphi 0, %s104
    %s122 = sphi 0, %s122
    %s124 = sphi 0, %s122
    %s125 = sphi 0, %s124
    %s139 = sphi 0, %s125
    %s143 = sphi 0, %s143
    %s145 = sphi 0, %s143
    %s146 = sphi 0, %s145
    %s160 = sphi 0, %s146
    %s164 = sphi 0, %s164
    %s166 = sphi 0, %s164
    %s167 = sphi 0, %s166
    %s181 = sphi 0, %s167
    %s185 = sphi 0, %s185
    %s187 = sphi 0, %s185
    %s188 = sphi 0, %s187
    %s202 = sphi 0, %s188
    %s206 = sphi 0, %s206
    %s208 = sphi 0, %s206
    %s209 = sphi 0, %s208
    %s223 = sphi 0, %s209
    %s229 = sphi 0, %s231
    %s232 = sphi 0, %s229
    %s233 = sphi 0, %s232
    %s249 = sphi 0, %s233
  $region4: #{gsum_decoder_forward.13} parent=0 // loop_header_branch
    %18 = sbr.rel (%p16) target = $region8
  $region5: #{gsum_decoder_forward.13} parent=0 // loop_body
    %s20 = ssub.s32 %s15, 1
    %s21 = ssub.s32 %s15, 2
    %s22 = sadd.s32 %s15, 1
    %s23 = ssub.s32 %s15, %s22
    %p24 = scmp.eq.s32.totalorder %s23, 0
    %s26 = sadd.s32 %s25, 1
    %s27 = scalar_select %p24, %s25, %s26
    %p30 = pneg %p24
    %p31 = scmp.eq.s32.totalorder %s15, 1
    %p32 = por %p30, %p31
    %p33 = scmp.ne.s32.totalorder %s25, %s28
    %p34 = scmp.eq.s32.totalorder %s15, 0
    %p35 = por %p33, %p34
    %p36 = scmp.ne.s32.totalorder %s25, %s28
    %p37 = scmp.eq.s32.totalorder %s20, 1
    %p38 = por %p36, %p37
    %p39 = scmp.ne.s32.totalorder %s28, %s29
    %p40 = scmp.eq.s32.totalorder %s20, 0
    %p41 = por %p39, %p40
    %p42 = scmp.ne.s32.totalorder %s28, %s29
    %p43 = scmp.eq.s32.totalorder %s21, 1
    %p44 = por %p42, %p43
    %p46 = scmp.ne.s32.totalorder %s29, %s45
    %p47 = scmp.eq.s32.totalorder %s21, 0
    %p48 = por %p46, %p47
    %s49 = ssub.s32 %s15, %s22
    %p50 = scmp.eq.s32.totalorder %s49, 0
    %s52 = sadd.s32 %s51, 1
    %s53 = scalar_select %p50, %s51, %s52
    %p56 = pneg %p50
    %p57 = scmp.eq.s32.totalorder %s15, 1
    %p58 = por %p56, %p57
    %p59 = scmp.ne.s32.totalorder %s51, %s54
    %p60 = scmp.eq.s32.totalorder %s15, 0
    %p61 = por %p59, %p60
    %p62 = scmp.ne.s32.totalorder %s51, %s54
    %p63 = scmp.eq.s32.totalorder %s20, 1
    %p64 = por %p62, %p63
    %p65 = scmp.ne.s32.totalorder %s54, %s55
    %p66 = scmp.eq.s32.totalorder %s20, 0
    %p67 = por %p65, %p66
    %p68 = scmp.ne.s32.totalorder %s54, %s55
    %p69 = scmp.eq.s32.totalorder %s21, 1
    %p70 = por %p68, %p69
    %p72 = scmp.ne.s32.totalorder %s55, %s71
    %p73 = scmp.eq.s32.totalorder %s21, 0
    %p74 = por %p72, %p73
    %s75 = ssub.s32 %s15, %s22
    %p76 = scmp.eq.s32.totalorder %s75, 0
    %s78 = sadd.s32 %s77, 1
    %s79 = scalar_select %p76, %s77, %s78
    %p82 = pneg %p76
    %p83 = scmp.eq.s32.totalorder %s15, 1
    %p84 = por %p82, %p83
    %p85 = scmp.ne.s32.totalorder %s77, %s80
    %p86 = scmp.eq.s32.totalorder %s15, 0
    %p87 = por %p85, %p86
    %p88 = scmp.ne.s32.totalorder %s77, %s80
    %p89 = scmp.eq.s32.totalorder %s20, 1
    %p90 = por %p88, %p89
    %p91 = scmp.ne.s32.totalorder %s80, %s81
    %p92 = scmp.eq.s32.totalorder %s20, 0
    %p93 = por %p91, %p92
    %p94 = scmp.ne.s32.totalorder %s80, %s81
    %p95 = scmp.eq.s32.totalorder %s21, 1
    %p96 = por %p94, %p95
    %p98 = scmp.ne.s32.totalorder %s81, %s97
    %p99 = scmp.eq.s32.totalorder %s21, 0
    %p100 = por %p98, %p99
    %s102 = sadd.s32 %s101, 1
    %p105 = scmp.eq.s32.totalorder %s15, 1
    %p106 = scmp.ne.s32.totalorder %s101, %s103
    %p107 = scmp.eq.s32.totalorder %s15, 0
    %p108 = por %p106, %p107
    %p109 = scmp.ne.s32.totalorder %s101, %s103
    %p110 = scmp.eq.s32.totalorder %s20, 1
    %p111 = por %p109, %p110
    %p112 = scmp.ne.s32.totalorder %s103, %s104
    %p113 = scmp.eq.s32.totalorder %s20, 0
    %p114 = por %p112, %p113
    %p115 = scmp.ne.s32.totalorder %s103, %s104
    %p116 = scmp.eq.s32.totalorder %s21, 1
    %p117 = por %p115, %p116
    %p119 = scmp.ne.s32.totalorder %s104, %s118
    %p120 = scmp.eq.s32.totalorder %s21, 0
    %p121 = por %p119, %p120
    %s123 = sadd.s32 %s122, 1
    %p126 = scmp.eq.s32.totalorder %s15, 1
    %p127 = scmp.ne.s32.totalorder %s122, %s124
    %p128 = scmp.eq.s32.totalorder %s15, 0
    %p129 = por %p127, %p128
    %p130 = scmp.ne.s32.totalorder %s122, %s124
    %p131 = scmp.eq.s32.totalorder %s20, 1
    %p132 = por %p130, %p131
    %p133 = scmp.ne.s32.totalorder %s124, %s125
    %p134 = scmp.eq.s32.totalorder %s20, 0
    %p135 = por %p133, %p134
    %p136 = scmp.ne.s32.totalorder %s124, %s125
    %p137 = scmp.eq.s32.totalorder %s21, 1
    %p138 = por %p136, %p137
    %p140 = scmp.ne.s32.totalorder %s125, %s139
    %p141 = scmp.eq.s32.totalorder %s21, 0
    %p142 = por %p140, %p141
    %s144 = sadd.s32 %s143, 1
    %p147 = scmp.eq.s32.totalorder %s15, 1
    %p148 = scmp.ne.s32.totalorder %s143, %s145
    %p149 = scmp.eq.s32.totalorder %s15, 0
    %p150 = por %p148, %p149
    %p151 = scmp.ne.s32.totalorder %s143, %s145
    %p152 = scmp.eq.s32.totalorder %s20, 1
    %p153 = por %p151, %p152
    %p154 = scmp.ne.s32.totalorder %s145, %s146
    %p155 = scmp.eq.s32.totalorder %s20, 0
    %p156 = por %p154, %p155
    %p157 = scmp.ne.s32.totalorder %s145, %s146
    %p158 = scmp.eq.s32.totalorder %s21, 1
    %p159 = por %p157, %p158
    %p161 = scmp.ne.s32.totalorder %s146, %s160
    %p162 = scmp.eq.s32.totalorder %s21, 0
    %p163 = por %p161, %p162
    %s165 = sadd.s32 %s164, 1
    %p168 = scmp.eq.s32.totalorder %s15, 1
    %p169 = scmp.ne.s32.totalorder %s164, %s166
    %p170 = scmp.eq.s32.totalorder %s15, 0
    %p171 = por %p169, %p170
    %p172 = scmp.ne.s32.totalorder %s164, %s166
    %p173 = scmp.eq.s32.totalorder %s20, 1
    %p174 = por %p172, %p173
    %p175 = scmp.ne.s32.totalorder %s166, %s167
    %p176 = scmp.eq.s32.totalorder %s20, 0
    %p177 = por %p175, %p176
    %p178 = scmp.ne.s32.totalorder %s166, %s167
    %p179 = scmp.eq.s32.totalorder %s21, 1
    %p180 = por %p178, %p179
    %p182 = scmp.ne.s32.totalorder %s167, %s181
    %p183 = scmp.eq.s32.totalorder %s21, 0
    %p184 = por %p182, %p183
    %s186 = sadd.s32 %s185, 1
    %p189 = scmp.eq.s32.totalorder %s15, 1
    %p190 = scmp.ne.s32.totalorder %s185, %s187
    %p191 = scmp.eq.s32.totalorder %s15, 0
    %p192 = por %p190, %p191
    %p193 = scmp.ne.s32.totalorder %s185, %s187
    %p194 = scmp.eq.s32.totalorder %s20, 1
    %p195 = por %p193, %p194
    %p196 = scmp.ne.s32.totalorder %s187, %s188
    %p197 = scmp.eq.s32.totalorder %s20, 0
    %p198 = por %p196, %p197
    %p199 = scmp.ne.s32.totalorder %s187, %s188
    %p200 = scmp.eq.s32.totalorder %s21, 1
    %p201 = por %p199, %p200
    %p203 = scmp.ne.s32.totalorder %s188, %s202
    %p204 = scmp.eq.s32.totalorder %s21, 0
    %p205 = por %p203, %p204
    %s207 = sadd.s32 %s206, 1
    %p210 = scmp.eq.s32.totalorder %s15, 1
    %p211 = scmp.ne.s32.totalorder %s206, %s208
    %p212 = scmp.eq.s32.totalorder %s15, 0
    %p213 = por %p211, %p212
    %p214 = scmp.ne.s32.totalorder %s206, %s208
    %p215 = scmp.eq.s32.totalorder %s20, 1
    %p216 = por %p214, %p215
    %p217 = scmp.ne.s32.totalorder %s208, %s209
    %p218 = scmp.eq.s32.totalorder %s20, 0
    %p219 = por %p217, %p218
    %p220 = scmp.ne.s32.totalorder %s208, %s209
    %p221 = scmp.eq.s32.totalorder %s21, 1
    %p222 = por %p220, %p221
    %p224 = scmp.ne.s32.totalorder %s209, %s223
    %p225 = scmp.eq.s32.totalorder %s21, 0
    %p226 = por %p224, %p225
    %s227 = ssub.s32 %s15, %s22
    %p228 = scmp.eq.s32.totalorder %s227, 0
    %s230 = sadd.s32 %s229, 1
    %s231 = scalar_select %p228, %s229, %s230
    %p234 = pneg %p228
    %p235 = scmp.eq.s32.totalorder %s15, 1
    %p236 = por %p234, %p235
    %p237 = scmp.ne.s32.totalorder %s229, %s232
    %p238 = scmp.eq.s32.totalorder %s15, 0
    %p239 = por %p237, %p238
    %p240 = scmp.ne.s32.totalorder %s229, %s232
    %p241 = scmp.eq.s32.totalorder %s20, 1
    %p242 = por %p240, %p241
    %p243 = scmp.ne.s32.totalorder %s232, %s233
    %p244 = scmp.eq.s32.totalorder %s20, 0
    %p245 = por %p243, %p244
    %p246 = scmp.ne.s32.totalorder %s232, %s233
    %p247 = scmp.eq.s32.totalorder %s21, 1
    %p248 = por %p246, %p247
    %p250 = scmp.ne.s32.totalorder %s233, %s249
    %p251 = scmp.eq.s32.totalorder %s21, 0
    %p252 = por %p250, %p251
    %p253 = scmp.le.s32.totalorder 1, %s15
    %p254 = scmp.lt.s32.totalorder %s15, 3
    %p255 = pnand %p253, %p254
    %p256 = pneg %p255
    // Predicated region
    $region9: #{gsum_decoder_forward.13} parent=5 // pred_check
      _
    $region10: #{gsum_decoder_forward.13} parent=5 // pred_check_branch
      %258 = sbr.rel (%p255) target = $region12
    $region11: #{gsum_decoder_forward.13} parent=5 // pred_region
      %s259 = ssub.s32 %s15, 1
      // Predicated region
      $region13: #{gsum_decoder_forward.13} parent=11 // pred_check
        %p260 = pneg %p114
      $region14: #{gsum_decoder_forward.13} parent=11 // pred_check_branch
        %262 = sbr.rel (%p260) target = $region16
      $region15: #{gsum_decoder_forward.13} parent=11 // pred_region
        _
      $region16: #{gsum_decoder_forward.13} parent=11 // pred_fallthru
        _
      // Predicated region
      $region17: #{gsum_decoder_forward.13} parent=11 // pred_check
        %p263 = pneg %p135
      $region18: #{gsum_decoder_forward.13} parent=11 // pred_check_branch
        %265 = sbr.rel (%p263) target = $region20
      $region19: #{gsum_decoder_forward.13} parent=11 // pred_region
        _
      $region20: #{gsum_decoder_forward.13} parent=11 // pred_fallthru
        _
      // Predicated region
      $region21: #{gsum_decoder_forward.13} parent=11 // pred_check
        %p266 = pneg %p156
      $region22: #{gsum_decoder_forward.13} parent=11 // pred_check_branch
        %268 = sbr.rel (%p266) target = $region24
      $region23: #{gsum_decoder_forward.13} parent=11 // pred_region
        _
      $region24: #{gsum_decoder_forward.13} parent=11 // pred_fallthru
        _
      // Predicated region
      $region25: #{gsum_decoder_forward.13} parent=11 // pred_check
        %p269 = pneg %p177
      $region26: #{gsum_decoder_forward.13} parent=11 // pred_check_branch
        %271 = sbr.rel (%p269) target = $region28
      $region27: #{gsum_decoder_forward.13} parent=11 // pred_region
        _
      $region28: #{gsum_decoder_forward.13} parent=11 // pred_fallthru
        _
      // Predicated region
      $region29: #{gsum_decoder_forward.13} parent=11 // pred_check
        %p272 = pneg %p198
      $region30: #{gsum_decoder_forward.13} parent=11 // pred_check_branch
        %274 = sbr.rel (%p272) target = $region32
      $region31: #{gsum_decoder_forward.13} parent=11 // pred_region
        _
      $region32: #{gsum_decoder_forward.13} parent=11 // pred_fallthru
        _
      // Predicated region
      $region33: #{gsum_decoder_forward.13} parent=11 // pred_check
        %p275 = pneg %p219
      $region34: #{gsum_decoder_forward.13} parent=11 // pred_check_branch
        %277 = sbr.rel (%p275) target = $region36
      $region35: #{gsum_decoder_forward.13} parent=11 // pred_region
        _
      $region36: #{gsum_decoder_forward.13} parent=11 // pred_fallthru
        _
    $region12: #{gsum_decoder_forward.13} parent=5 // pred_fallthru
      _
    %p278 = scmp.lt.s32.totalorder %s15, 2
    // Predicated region
    $region37: #{gsum_decoder_forward.13} parent=5 // pred_check
      %p279 = pneg %p278
    $region38: #{gsum_decoder_forward.13} parent=5 // pred_check_branch
      %281 = sbr.rel (%p279) target = $region40
    $region39: #{gsum_decoder_forward.13} parent=5 // pred_region
      // Predicated region
      $region41: #{gsum_decoder_forward.13} parent=39 // pred_check
        %p282 = pneg %p35
      $region42: #{gsum_decoder_forward.13} parent=39 // pred_check_branch
        %284 = sbr.rel (%p282) target = $region44
      $region43: #{gsum_decoder_forward.13} parent=39 // pred_region
        %p285 = scmp.lt.s32.totalorder %s15, 1
        %s286 = scalar_select %p285, %s15, 1
        %s287 = smul.addr %s286, 4
        %s288 = scalar_lea.vmem %s0, %s287
      $region44: #{gsum_decoder_forward.13} parent=39 // pred_fallthru
        _
      // Predicated region
      $region45: #{gsum_decoder_forward.13} parent=39 // pred_check
        %p289 = pneg %p61
      $region46: #{gsum_decoder_forward.13} parent=39 // pred_check_branch
        %291 = sbr.rel (%p289) target = $region48
      $region47: #{gsum_decoder_forward.13} parent=39 // pred_region
        %p292 = scmp.lt.s32.totalorder %s15, 1
        %s293 = scalar_select %p292, %s15, 1
        %s294 = smul.addr %s293, 2
        %s295 = smul.addr %s294, 4
        %s296 = scalar_lea.vmem %s1, %s295
      $region48: #{gsum_decoder_forward.13} parent=39 // pred_fallthru
        _
      // Predicated region
      $region49: #{gsum_decoder_forward.13} parent=39 // pred_check
        %p297 = pneg %p87
      $region50: #{gsum_decoder_forward.13} parent=39 // pred_check_branch
        %299 = sbr.rel (%p297) target = $region52
      $region51: #{gsum_decoder_forward.13} parent=39 // pred_region
        %p300 = scmp.lt.s32.totalorder %s15, 1
        %s301 = scalar_select %p300, %s15, 1
        %s302 = scalar_lea.vmem %s2, %s301
      $region52: #{gsum_decoder_forward.13} parent=39 // pred_fallthru
        _
    $region40: #{gsum_decoder_forward.13} parent=5 // pred_fallthru
      _
    %p303 = scmp.le.s32.totalorder 1, %s15
    %p304 = scmp.lt.s32.totalorder %s15, 3
    %p305 = pnand %p303, %p304
    %p306 = pneg %p305
    // Predicated region
    $region53: #{gsum_decoder_forward.13} parent=5 // pred_check
      _
    $region54: #{gsum_decoder_forward.13} parent=5 // pred_check_branch
      %308 = sbr.rel (%p305) target = $region56
    $region55: #{gsum_decoder_forward.13} parent=5 // pred_region
      %s309 = ssub.s32 %s15, 1
      %p310 = scmp.lt.s32.totalorder %s20, 1
      %s311 = scalar_select %p310, %s20, 1
      %s312 = smul.addr %s311, 4
      %s313 = scalar_lea.vmem %s0, %s312
      %p314 = pneg %p41
      %p315 = pneg %p38
      %p316 = scmp.lt.s32.totalorder %s20, 1
      %s317 = scalar_select %p316, %s20, 1
      %s318 = smul.addr %s317, 2
      %s319 = smul.addr %s318, 4
      %s320 = scalar_lea.vmem %s1, %s319
      %p321 = pneg %p67
      %p322 = pneg %p64
      %p323 = scmp.lt.s32.totalorder %s20, 1
      %s324 = scalar_select %p323, %s20, 1
      %s325 = scalar_lea.vmem %s2, %s324
      %p326 = pneg %p93
      %p327 = pneg %p90
      %p328 = pneg %p114
      %p329 = pneg %p111
      %p330 = pneg %p135
      %p331 = pneg %p132
      %p332 = pneg %p156
      %p333 = pneg %p153
      %p334 = pneg %p177
      %p335 = pneg %p174
      %p336 = pneg %p198
      %p337 = pneg %p195
      %p338 = pneg %p219
      %p339 = pneg %p216
      %p340 = pneg %p245
      %p341 = pneg %p242
      %p342 = scmp.lt.s32.totalorder %s20, 1
      %s343 = scalar_select %p342, %s20, 1
      %s344 = smul.addr %s343, 4
      %s345 = scalar_lea.vmem %s9, %s344
      %p346 = scmp.lt.s32.totalorder %s20, 1
      %s347 = scalar_select %p346, %s20, 1
      %s348 = smul.addr %s347, 4
      %s349 = scalar_lea.vmem %s0, %s348
      %p350 = scmp.lt.s32.totalorder %s20, 1
      %s351 = scalar_select %p350, %s20, 1
      %s352 = smul.addr %s351, 2
      %s353 = smul.addr %s352, 4
      %s354 = scalar_lea.vmem %s1, %s353
      %p355 = scmp.lt.s32.totalorder %s20, 1
      %s356 = scalar_select %p355, %s20, 1
      %s357 = scalar_lea.vmem %s2, %s356
      %p358 = scmp.lt.s32.totalorder %s20, 1
      %s359 = scalar_select %p358, %s20, 1
      %s360 = smul.addr %s359, 4
      %s361 = scalar_lea.vmem %s9, %s360
      %v363 = vld [vmem:[%s349] sm:$0xf]
      %v364 = vld [vmem:[%s354] sm:$0xf]
      %v365 = vld [vmem:[%s354 + $0x4] sm:$0xf]
      %v366 = vld [vmem:[%s357] sm:$0x1]
      %v367 = vld [vmem:[%s3] sm:$0xf]
      %v368 = vld [vmem:[%s3 + $0x4] sm:$0xf]
      %v369 = vld [vmem:[%s3 + $0x8] sm:$0xf]
      %v370 = vld [vmem:[%s3 + $0xc] sm:$0xf]
      %v371 = vld [vmem:[%s4] sm:$0x1]
      %v373 = vlaneseq
      %v374 = vshrl.u32 %v373, 7
      %v375 = vsub.s32 0, %v374
      %v376 = vrot.slane %v371, %v375
      %v382 = vunpack.c.l.b16 %v367
      %v383 = vunpack.c.l.b16 %v368
      %v384 = vunpack.c.l.b16 %v369
      %v385 = vunpack.c.l.b16 %v370
      %v386 = vpack.c.b16 %v383, %v382
      %v387 = vpack.c.b16 %v385, %v384
      %vm390 = vcmask 261120
      %v392 = vsel %vm390, %v363, 0
      %394 = vmatprep.subr.bf16.mxu0 0
      %395 = vmatpush1.bf16.msra.mxu0 %v386
      %396 = vmatprep.subr.bf16.mxu0 0
      %397 = vmatpush1.bf16.msra.mxu0 %v387
      %398 = vmatprep.subr.bf16.mxu0 0
      %399 = vmatpush1.bf16.msra.mxu0 0
      %400 = vmatprep.subr.bf16.mxu0 0
      %401 = vmatpush1.bf16.msra.mxu0 0
      %402 = vmatprep.subr.bf16.mxu0 0
      %403 = vmatpush1.bf16.msra.mxu0 0
      %404 = vmatprep.subr.bf16.mxu0 0
      %405 = vmatpush1.bf16.msra.mxu0 0
      %406 = vmatprep.subr.bf16.mxu0 0
      %407 = vmatpush1.bf16.msra.mxu0 0
      %408 = vmatprep.subr.bf16.mxu0 0
      %409 = vmatpush1.bf16.msra.mxu0 0
      %410 = vmatprep.subr.bf16.mxu0 0
      %411 = vmatpush1.bf16.msra.mxu0 0
      %412 = vmatprep.subr.bf16.mxu0 0
      %413 = vmatpush1.bf16.msra.mxu0 0
      %414 = vmatprep.subr.bf16.mxu0 0
      %415 = vmatpush1.bf16.msra.mxu0 0
      %416 = vmatprep.subr.bf16.mxu0 0
      %417 = vmatpush1.bf16.msra.mxu0 0
      %418 = vmatprep.subr.bf16.mxu0 0
      %419 = vmatpush1.bf16.msra.mxu0 0
      %420 = vmatprep.subr.bf16.mxu0 0
      %421 = vmatpush1.bf16.msra.mxu0 0
      %422 = vmatprep.subr.bf16.mxu0 0
      %423 = vmatpush1.bf16.msra.mxu0 0
      %424 = vmatprep.subr.bf16.mxu0 0
      %425 = vmatpush1.bf16.msra.mxu0 0
      %426 = vmatprep.mubr.bf16.mxu0 0
      %427 = vmatmul.mubr.bf16.gmra.mrb[0].mxu0 %v392
      %v428 = vpop.f32.mrb[0].mxu0
      %v429 = vadd.f32 %v376, %v428
      %v430 = vpop.f32.mrb[0].mxu0
      %v431 = vpop.f32.mrb[0].mxu0
      %v432 = vpop.f32.mrb[0].mxu0
      %433 = vdwg.mxu0
      %v434 = vmul.f32 %v429, 0.35355338
      %v435 = vpack.c.bf16 %v434, %v434
      %v437 = vlaneseq
      %v438 = vshrl.u32 %v437, 7
      %v439 = vsub.s32 0, %v438
      %v440 = vrot.slane %v366, %v439
      %v444 = vunpack.c.l.b16 %v364
      %v445 = vunpack.c.l.b16 %v365
      %v446 = vpack.c.b16 %v445, %v444
      %vm447 = vcmask 64512
      %v449 = vsel %vm447, %v435, 0
      %v452 = vsel %vm447, %v446, 0
      %454 = vmatprep.subr.bf16.mxu0 0
      %455 = vmatpush1.bf16.xpose.msra.mxu0 %v452
      %456 = vmatprep.subr.bf16.mxu0 0
      %457 = vmatpush1.bf16.xpose.msra.mxu0 0
      %458 = vmatprep.subr.bf16.mxu0 0
      %459 = vmatpush1.bf16.xpose.msra.mxu0 0
      %460 = vmatprep.subr.bf16.mxu0 0
      %461 = vmatpush1.bf16.xpose.msra.mxu0 0
      %462 = vmatprep.subr.bf16.mxu0 0
      %463 = vmatpush1.bf16.xpose.msra.mxu0 0
      %464 = vmatprep.subr.bf16.mxu0 0
      %465 = vmatpush1.bf16.xpose.msra.mxu0 0
      %466 = vmatprep.subr.bf16.mxu0 0
      %467 = vmatpush1.bf16.xpose.msra.mxu0 0
      %468 = vmatprep.subr.bf16.mxu0 0
      %469 = vmatpush1.bf16.xpose.msra.mxu0 0
      %470 = vmatprep.subr.bf16.mxu0 0
      %471 = vmatpush1.bf16.xpose.msra.mxu0 0
      %472 = vmatprep.subr.bf16.mxu0 0
      %473 = vmatpush1.bf16.xpose.msra.mxu0 0
      %474 = vmatprep.subr.bf16.mxu0 0
      %475 = vmatpush1.bf16.xpose.msra.mxu0 0
      %476 = vmatprep.subr.bf16.mxu0 0
      %477 = vmatpush1.bf16.xpose.msra.mxu0 0
      %478 = vmatprep.subr.bf16.mxu0 0
      %479 = vmatpush1.bf16.xpose.msra.mxu0 0
      %480 = vmatprep.subr.bf16.mxu0 0
      %481 = vmatpush1.bf16.xpose.msra.mxu0 0
      %482 = vmatprep.subr.bf16.mxu0 0
      %483 = vmatpush1.bf16.xpose.msra.mxu0 0
      %484 = vmatprep.subr.bf16.mxu0 0
      %485 = vmatpush1.bf16.xpose.msra.mxu0 0
      %486 = vmatprep.mubr.bf16.mxu0 0
      %487 = vmatmul.mubr.bf16.gmra.mrb[0].mxu0 %v449
      %v488 = vpop.f32.mrb[0].mxu0
      %v489 = vadd.f32 %v440, %v488
      %v490 = vpop.f32.mrb[0].mxu0
      %v491 = vpop.f32.mrb[0].mxu0
      %v492 = vpop.f32.mrb[0].mxu0
      %493 = vdwg.mxu0
      %vm494 = vcmask 130048
      %v495 = vsel %vm494, %v489, -inf
      %496 = vmax.xlane.f32.xlu0 %v495
      %v497 = vpop.xlane.xlu0 %496
      %v498 = vsub.f32 %v489, %v497
      %v499 = vmul.f32 %v498, 1.442695
      %v500 = vpow.pop %v499
      %v501 = vsel %vm494, %v500, 0.0
      %502 = vadd.xlane.f32.xlu0 %v501
      %v503 = vpop.xlane.xlu0 %502
      %v504 = vrcp.pop %v503
      %v505 = vmul.f32 %v500, %v504
      %v506 = vpack.c.bf16 %v505, %v505
      %507 = vrot.lane.b32.xlu0 %v446, 96
      %v508 = vpop.permute.xlu0 %507
      %v511 = vsel %vm494, %v506, 0
      %513 = vmatprep.subr.bf16.mxu0 0
      %514 = vmatpush1.bf16.msra.mxu0 %v508
      %515 = vmatprep.subr.bf16.mxu0 0
      %516 = vmatpush1.bf16.msra.mxu0 0
      %517 = vmatprep.subr.bf16.mxu0 0
      %518 = vmatpush1.bf16.msra.mxu0 0
      %519 = vmatprep.subr.bf16.mxu0 0
      %520 = vmatpush1.bf16.msra.mxu0 0
      %521 = vmatprep.subr.bf16.mxu0 0
      %522 = vmatpush1.bf16.msra.mxu0 0
      %523 = vmatprep.subr.bf16.mxu0 0
      %524 = vmatpush1.bf16.msra.mxu0 0
      %525 = vmatprep.subr.bf16.mxu0 0
      %526 = vmatpush1.bf16.msra.mxu0 0
      %527 = vmatprep.subr.bf16.mxu0 0
      %528 = vmatpush1.bf16.msra.mxu0 0
      %529 = vmatprep.subr.bf16.mxu0 0
      %530 = vmatpush1.bf16.msra.mxu0 0
      %531 = vmatprep.subr.bf16.mxu0 0
      %532 = vmatpush1.bf16.msra.mxu0 0
      %533 = vmatprep.subr.bf16.mxu0 0
      %534 = vmatpush1.bf16.msra.mxu0 0
      %535 = vmatprep.subr.bf16.mxu0 0
      %536 = vmatpush1.bf16.msra.mxu0 0
      %537 = vmatprep.subr.bf16.mxu0 0
      %538 = vmatpush1.bf16.msra.mxu0 0
      %539 = vmatprep.subr.bf16.mxu0 0
      %540 = vmatpush1.bf16.msra.mxu0 0
      %541 = vmatprep.subr.bf16.mxu0 0
      %542 = vmatpush1.bf16.msra.mxu0 0
      %543 = vmatprep.subr.bf16.mxu0 0
      %544 = vmatpush1.bf16.msra.mxu0 0
      %545 = vmatprep.mubr.bf16.mxu0 0
      %546 = vmatmul.mubr.bf16.gmra.mrb[0].mxu0 %v511
      %v547 = vpop.f32.mrb[0].mxu0
      %v548 = vadd.f32 0.0, %v547
      %v549 = vpop.f32.mrb[0].mxu0
      %v550 = vpop.f32.mrb[0].mxu0
      %v551 = vpop.f32.mrb[0].mxu0
      %552 = vdwg.mxu0
      %553 = vst.msk [vmem:[#allocation2] sm:$0xff] %vm447, %v548
      %555 = vrot.lane.b32.xlu0 %v435, 120
      %v556 = vpop.permute.xlu0 %555
      %557 = vrot.lane.b32.xlu0 %v446, 120
      %v558 = vpop.permute.xlu0 %557
      %v560 = vsel %vm447, %v556, 0
      %v563 = vsel %vm447, %v558, 0
      %565 = vmatprep.subr.bf16.mxu0 0
      %566 = vmatpush1.bf16.xpose.msra.mxu0 %v563
      %567 = vmatprep.subr.bf16.mxu0 0
      %568 = vmatpush1.bf16.xpose.msra.mxu0 0
      %569 = vmatprep.subr.bf16.mxu0 0
      %570 = vmatpush1.bf16.xpose.msra.mxu0 0
      %571 = vmatprep.subr.bf16.mxu0 0
      %572 = vmatpush1.bf16.xpose.msra.mxu0 0
      %573 = vmatprep.subr.bf16.mxu0 0
      %574 = vmatpush1.bf16.xpose.msra.mxu0 0
      %575 = vmatprep.subr.bf16.mxu0 0
      %576 = vmatpush1.bf16.xpose.msra.mxu0 0
      %577 = vmatprep.subr.bf16.mxu0 0
      %578 = vmatpush1.bf16.xpose.msra.mxu0 0
      %579 = vmatprep.subr.bf16.mxu0 0
      %580 = vmatpush1.bf16.xpose.msra.mxu0 0
      %581 = vmatprep.subr.bf16.mxu0 0
      %582 = vmatpush1.bf16.xpose.msra.mxu0 0
      %583 = vmatprep.subr.bf16.mxu0 0
      %584 = vmatpush1.bf16.xpose.msra.mxu0 0
      %585 = vmatprep.subr.bf16.mxu0 0
      %586 = vmatpush1.bf16.xpose.msra.mxu0 0
      %587 = vmatprep.subr.bf16.mxu0 0
      %588 = vmatpush1.bf16.xpose.msra.mxu0 0
      %589 = vmatprep.subr.bf16.mxu0 0
      %590 = vmatpush1.bf16.xpose.msra.mxu0 0
      %591 = vmatprep.subr.bf16.mxu0 0
      %592 = vmatpush1.bf16.xpose.msra.mxu0 0
      %593 = vmatprep.subr.bf16.mxu0 0
      %594 = vmatpush1.bf16.xpose.msra.mxu0 0
      %595 = vmatprep.subr.bf16.mxu0 0
      %596 = vmatpush1.bf16.xpose.msra.mxu0 0
      %597 = vmatprep.mubr.bf16.mxu0 0
      %598 = vmatmul.mubr.bf16.gmra.mrb[0].mxu0 %v560
      %v599 = vpop.f32.mrb[0].mxu0
      %v600 = vadd.f32 %v440, %v599
      %v601 = vpop.f32.mrb[0].mxu0
      %v602 = vpop.f32.mrb[0].mxu0
      %v603 = vpop.f32.mrb[0].mxu0
      %604 = vdwg.mxu0
      %v605 = vsel %vm494, %v600, -inf
      %606 = vmax.xlane.f32.xlu0 %v605
      %v607 = vpop.xlane.xlu0 %606
      %v608 = vsub.f32 %v600, %v607
      %v609 = vmul.f32 %v608, 1.442695
      %v610 = vpow.pop %v609
      %v611 = vsel %vm494, %v610, 0.0
      %612 = vadd.xlane.f32.xlu0 %v611
      %v613 = vpop.xlane.xlu0 %612
      %v614 = vrcp.pop %v613
      %v615 = vmul.f32 %v610, %v614
      %v616 = vpack.c.bf16 %v615, %v615
      %617 = vrot.lane.b32.xlu0 %v446, 88
      %v618 = vpop.permute.xlu0 %617
      %v621 = vsel %vm494, %v616, 0
      %623 = vmatprep.subr.bf16.mxu0 0
      %624 = vmatpush1.bf16.msra.mxu0 %v618
      %625 = vmatprep.subr.bf16.mxu0 0
      %626 = vmatpush1.bf16.msra.mxu0 0
      %627 = vmatprep.subr.bf16.mxu0 0
      %628 = vmatpush1.bf16.msra.mxu0 0
      %629 = vmatprep.subr.bf16.mxu0 0
      %630 = vmatpush1.bf16.msra.mxu0 0
      %631 = vmatprep.subr.bf16.mxu0 0
      %632 = vmatpush1.bf16.msra.mxu0 0
      %633 = vmatprep.subr.bf16.mxu0 0
      %634 = vmatpush1.bf16.msra.mxu0 0
      %635 = vmatprep.subr.bf16.mxu0 0
      %636 = vmatpush1.bf16.msra.mxu0 0
      %637 = vmatprep.subr.bf16.mxu0 0
      %638 = vmatpush1.bf16.msra.mxu0 0
      %639 = vmatprep.subr.bf16.mxu0 0
      %640 = vmatpush1.bf16.msra.mxu0 0
      %641 = vmatprep.subr.bf16.mxu0 0
      %642 = vmatpush1.bf16.msra.mxu0 0
      %643 = vmatprep.subr.bf16.mxu0 0
      %644 = vmatpush1.bf16.msra.mxu0 0
      %645 = vmatprep.subr.bf16.mxu0 0
      %646 = vmatpush1.bf16.msra.mxu0 0
      %647 = vmatprep.subr.bf16.mxu0 0
      %648 = vmatpush1.bf16.msra.mxu0 0
      %649 = vmatprep.subr.bf16.mxu0 0
      %650 = vmatpush1.bf16.msra.mxu0 0
      %651 = vmatprep.subr.bf16.mxu0 0
      %652 = vmatpush1.bf16.msra.mxu0 0
      %653 = vmatprep.subr.bf16.mxu0 0
      %654 = vmatpush1.bf16.msra.mxu0 0
      %655 = vmatprep.mubr.bf16.mxu0 0
      %656 = vmatmul.mubr.bf16.gmra.mrb[0].mxu0 %v621
      %v657 = vpop.f32.mrb[0].mxu0
      %v658 = vadd.f32 0.0, %v657
      %v659 = vpop.f32.mrb[0].mxu0
      %v660 = vpop.f32.mrb[0].mxu0
      %v661 = vpop.f32.mrb[0].mxu0
      %662 = vdwg.mxu0
      %664 = vrot.lane.b32.xlu0 %v658, 8
      %v665 = vpop.permute.xlu0 %664
      %vm667 = vcmask 130112
      %668 = vst.msk [vmem:[#allocation2] sm:$0xff] %vm667, %v665
      %669 = vrot.lane.b32.xlu0 %v435, 112
      %v670 = vpop.permute.xlu0 %669
      %671 = vrot.lane.b32.xlu0 %v446, 112
      %v672 = vpop.permute.xlu0 %671
      %v674 = vsel %vm447, %v670, 0
      %v677 = vsel %vm447, %v672, 0
      %679 = vmatprep.subr.bf16.mxu0 0
      %680 = vmatpush1.bf16.xpose.msra.mxu0 %v677
      %681 = vmatprep.subr.bf16.mxu0 0
      %682 = vmatpush1.bf16.xpose.msra.mxu0 0
      %683 = vmatprep.subr.bf16.mxu0 0
      %684 = vmatpush1.bf16.xpose.msra.mxu0 0
      %685 = vmatprep.subr.bf16.mxu0 0
      %686 = vmatpush1.bf16.xpose.msra.mxu0 0
      %687 = vmatprep.subr.bf16.mxu0 0
      %688 = vmatpush1.bf16.xpose.msra.mxu0 0
      %689 = vmatprep.subr.bf16.mxu0 0
      %690 = vmatpush1.bf16.xpose.msra.mxu0 0
      %691 = vmatprep.subr.bf16.mxu0 0
      %692 = vmatpush1.bf16.xpose.msra.mxu0 0
      %693 = vmatprep.subr.bf16.mxu0 0
      %694 = vmatpush1.bf16.xpose.msra.mxu0 0
      %695 = vmatprep.subr.bf16.mxu0 0
      %696 = vmatpush1.bf16.xpose.msra.mxu0 0
      %697 = vmatprep.subr.bf16.mxu0 0
      %698 = vmatpush1.bf16.xpose.msra.mxu0 0
      %699 = vmatprep.subr.bf16.mxu0 0
      %700 = vmatpush1.bf16.xpose.msra.mxu0 0
      %701 = vmatprep.subr.bf16.mxu0 0
      %702 = vmatpush1.bf16.xpose.msra.mxu0 0
      %703 = vmatprep.subr.bf16.mxu0 0
      %704 = vmatpush1.bf16.xpose.msra.mxu0 0
      %705 = vmatprep.subr.bf16.mxu0 0
      %706 = vmatpush1.bf16.xpose.msra.mxu0 0
      %707 = vmatprep.subr.bf16.mxu0 0
      %708 = vmatpush1.bf16.xpose.msra.mxu0 0
      %709 = vmatprep.subr.bf16.mxu0 0
      %710 = vmatpush1.bf16.xpose.msra.mxu0 0
      %711 = vmatprep.mubr.bf16.mxu0 0
      %712 = vmatmul.mubr.bf16.gmra.mrb[0].mxu0 %v674
      %v713 = vpop.f32.mrb[0].mxu0
      %v714 = vadd.f32 %v440, %v713
      %v715 = vpop.f32.mrb[0].mxu0
      %v716 = vpop.f32.mrb[0].mxu0
      %v717 = vpop.f32.mrb[0].mxu0
      %718 = vdwg.mxu0
      %v719 = vsel %vm494, %v714, -inf
      %720 = vmax.xlane.f32.xlu0 %v719
      %v721 = vpop.xlane.xlu0 %720
      %v722 = vsub.f32 %v714, %v721
      %v723 = vmul.f32 %v722, 1.442695
      %v724 = vpow.pop %v723
      %v725 = vsel %vm494, %v724, 0.0
      %726 = vadd.xlane.f32.xlu0 %v725
      %v727 = vpop.xlane.xlu0 %726
      %v728 = vrcp.pop %v727
      %v729 = vmul.f32 %v724, %v728
      %v730 = vpack.c.bf16 %v729, %v729
      %731 = vrot.lane.b32.xlu0 %v446, 80
      %v732 = vpop.permute.xlu0 %731
      %v735 = vsel %vm494, %v730, 0
      %737 = vmatprep.subr.bf16.mxu0 0
      %738 = vmatpush1.bf16.msra.mxu0 %v732
      %739 = vmatprep.subr.bf16.mxu0 0
      %740 = vmatpush1.bf16.msra.mxu0 0
      %741 = vmatprep.subr.bf16.mxu0 0
      %742 = vmatpush1.bf16.msra.mxu0 0
      %743 = vmatprep.subr.bf16.mxu0 0
      %744 = vmatpush1.bf16.msra.mxu0 0
      %745 = vmatprep.subr.bf16.mxu0 0
      %746 = vmatpush1.bf16.msra.mxu0 0
      %747 = vmatprep.subr.bf16.mxu0 0
      %748 = vmatpush1.bf16.msra.mxu0 0
      %749 = vmatprep.subr.bf16.mxu0 0
      %750 = vmatpush1.bf16.msra.mxu0 0
      %751 = vmatprep.subr.bf16.mxu0 0
      %752 = vmatpush1.bf16.msra.mxu0 0
      %753 = vmatprep.subr.bf16.mxu0 0
      %754 = vmatpush1.bf16.msra.mxu0 0
      %755 = vmatprep.subr.bf16.mxu0 0
      %756 = vmatpush1.bf16.msra.mxu0 0
      %757 = vmatprep.subr.bf16.mxu0 0
      %758 = vmatpush1.bf16.msra.mxu0 0
      %759 = vmatprep.subr.bf16.mxu0 0
      %760 = vmatpush1.bf16.msra.mxu0 0
      %761 = vmatprep.subr.bf16.mxu0 0
      %762 = vmatpush1.bf16.msra.mxu0 0
      %763 = vmatprep.subr.bf16.mxu0 0
      %764 = vmatpush1.bf16.msra.mxu0 0
      %765 = vmatprep.subr.bf16.mxu0 0
      %766 = vmatpush1.bf16.msra.mxu0 0
      %767 = vmatprep.subr.bf16.mxu0 0
      %768 = vmatpush1.bf16.msra.mxu0 0
      %769 = vmatprep.mubr.bf16.mxu0 0
      %770 = vmatmul.mubr.bf16.gmra.mrb[0].mxu0 %v735
      %v771 = vpop.f32.mrb[0].mxu0
      %v772 = vadd.f32 0.0, %v771
      %v773 = vpop.f32.mrb[0].mxu0
      %v774 = vpop.f32.mrb[0].mxu0
      %v775 = vpop.f32.mrb[0].mxu0
      %776 = vdwg.mxu0
      %778 = vrot.lane.b32.xlu0 %v772, 16
      %v779 = vpop.permute.xlu0 %778
      %vm781 = vcmask 195712
      %782 = vst.msk [vmem:[#allocation2] sm:$0xff] %vm781, %v779
      %783 = vrot.lane.b32.xlu0 %v435, 104
      %v784 = vpop.permute.xlu0 %783
      %785 = vrot.lane.b32.xlu0 %v446, 104
      %v786 = vpop.permute.xlu0 %785
      %v788 = vsel %vm447, %v784, 0
      %v791 = vsel %vm447, %v786, 0
      %793 = vmatprep.subr.bf16.mxu0 0
      %794 = vmatpush1.bf16.xpose.msra.mxu0 %v791
      %795 = vmatprep.subr.bf16.mxu0 0
      %796 = vmatpush1.bf16.xpose.msra.mxu0 0
      %797 = vmatprep.subr.bf16.mxu0 0
      %798 = vmatpush1.bf16.xpose.msra.mxu0 0
      %799 = vmatprep.subr.bf16.mxu0 0
      %800 = vmatpush1.bf16.xpose.msra.mxu0 0
      %801 = vmatprep.subr.bf16.mxu0 0
      %802 = vmatpush1.bf16.xpose.msra.mxu0 0
      %803 = vmatprep.subr.bf16.mxu0 0
      %804 = vmatpush1.bf16.xpose.msra.mxu0 0
      %805 = vmatprep.subr.bf16.mxu0 0
      %806 = vmatpush1.bf16.xpose.msra.mxu0 0
      %807 = vmatprep.subr.bf16.mxu0 0
      %808 = vmatpush1.bf16.xpose.msra.mxu0 0
      %809 = vmatprep.subr.bf16.mxu0 0
      %810 = vmatpush1.bf16.xpose.msra.mxu0 0
      %811 = vmatprep.subr.bf16.mxu0 0
      %812 = vmatpush1.bf16.xpose.msra.mxu0 0
      %813 = vmatprep.subr.bf16.mxu0 0
      %814 = vmatpush1.bf16.xpose.msra.mxu0 0
      %815 = vmatprep.subr.bf16.mxu0 0
      %816 = vmatpush1.bf16.xpose.msra.mxu0 0
      %817 = vmatprep.subr.bf16.mxu0 0
      %818 = vmatpush1.bf16.xpose.msra.mxu0 0
      %819 = vmatprep.subr.bf16.mxu0 0
      %820 = vmatpush1.bf16.xpose.msra.mxu0 0
      %821 = vmatprep.subr.bf16.mxu0 0
      %822 = vmatpush1.bf16.xpose.msra.mxu0 0
      %823 = vmatprep.subr.bf16.mxu0 0
      %824 = vmatpush1.bf16.xpose.msra.mxu0 0
      %825 = vmatprep.mubr.bf16.mxu0 0
      %826 = vmatmul.mubr.bf16.gmra.mrb[0].mxu0 %v788
      %v827 = vpop.f32.mrb[0].mxu0
      %v828 = vadd.f32 %v440, %v827
      %v829 = vpop.f32.mrb[0].mxu0
      %v830 = vpop.f32.mrb[0].mxu0
      %v831 = vpop.f32.mrb[0].mxu0
      %832 = vdwg.mxu0
      %v833 = vsel %vm494, %v828, -inf
      %834 = vmax.xlane.f32.xlu0 %v833
      %v835 = vpop.xlane.xlu0 %834
      %v836 = vsub.f32 %v828, %v835
      %v837 = vmul.f32 %v836, 1.442695
      %v838 = vpow.pop %v837
      %v839 = vsel %vm494, %v838, 0.0
      %840 = vadd.xlane.f32.xlu0 %v839
      %v841 = vpop.xlane.xlu0 %840
      %v842 = vrcp.pop %v841
      %v843 = vmul.f32 %v838, %v842
      %v844 = vpack.c.bf16 %v843, %v843
      %845 = vrot.lane.b32.xlu0 %v446, 72
      %v846 = vpop.permute.xlu0 %845
      %v849 = vsel %vm494, %v844, 0
      %851 = vmatprep.subr.bf16.mxu0 0
      %852 = vmatpush1.bf16.msra.mxu0 %v846
      %853 = vmatprep.subr.bf16.mxu0 0
      %854 = vmatpush1.bf16.msra.mxu0 0
      %855 = vmatprep.subr.bf16.mxu0 0
      %856 = vmatpush1.bf16.msra.mxu0 0
      %857 = vmatprep.subr.bf16.mxu0 0
      %858 = vmatpush1.bf16.msra.mxu0 0
      %859 = vmatprep.subr.bf16.mxu0 0
      %860 = vmatpush1.bf16.msra.mxu0 0
      %861 = vmatprep.subr.bf16.mxu0 0
      %862 = vmatpush1.bf16.msra.mxu0 0
      %863 = vmatprep.subr.bf16.mxu0 0
      %864 = vmatpush1.bf16.msra.mxu0 0
      %865 = vmatprep.subr.bf16.mxu0 0
      %866 = vmatpush1.bf16.msra.mxu0 0
      %867 = vmatprep.subr.bf16.mxu0 0
      %868 = vmatpush1.bf16.msra.mxu0 0
      %869 = vmatprep.subr.bf16.mxu0 0
      %870 = vmatpush1.bf16.msra.mxu0 0
      %871 = vmatprep.subr.bf16.mxu0 0
      %872 = vmatpush1.bf16.msra.mxu0 0
      %873 = vmatprep.subr.bf16.mxu0 0
      %874 = vmatpush1.bf16.msra.mxu0 0
      %875 = vmatprep.subr.bf16.mxu0 0
      %876 = vmatpush1.bf16.msra.mxu0 0
      %877 = vmatprep.subr.bf16.mxu0 0
      %878 = vmatpush1.bf16.msra.mxu0 0
      %879 = vmatprep.subr.bf16.mxu0 0
      %880 = vmatpush1.bf16.msra.mxu0 0
      %881 = vmatprep.subr.bf16.mxu0 0
      %882 = vmatpush1.bf16.msra.mxu0 0
      %883 = vmatprep.mubr.bf16.mxu0 0
      %884 = vmatmul.mubr.bf16.gmra.mrb[0].mxu0 %v849
      %v885 = vpop.f32.mrb[0].mxu0
      %v886 = vadd.f32 0.0, %v885
      %v887 = vpop.f32.mrb[0].mxu0
      %v888 = vpop.f32.mrb[0].mxu0
      %v889 = vpop.f32.mrb[0].mxu0
      %890 = vdwg.mxu0
      %892 = vrot.lane.b32.xlu0 %v886, 24
      %v893 = vpop.permute.xlu0 %892
      %vm895 = vcmask 261312
      %896 = vst.msk [vmem:[#allocation2] sm:$0xff] %vm895, %v893
      %v897 = vld [vmem:[#allocation2] sm:$0xff]
      %v898 = vpack.c.bf16 %v897, %v897
      %v899 = vld [vmem:[%s5] sm:$0xf]
      %v900 = vld [vmem:[%s5 + $0x4] sm:$0xf]
      %v901 = vld [vmem:[%s5 + $0x8] sm:$0xf]
      %v902 = vld [vmem:[%s5 + $0xc] sm:$0xf]
      %v903 = vld [vmem:[%s6] sm:$0x1]
      %v905 = vlaneseq
      %v906 = vshrl.u32 %v905, 7
      %v907 = vsub.s32 0, %v906
      %v908 = vrot.slane %v903, %v907
      %v914 = vunpack.c.l.b16 %v899
      %v915 = vunpack.c.l.b16 %v900
      %v916 = vunpack.c.l.b16 %v901
      %v917 = vunpack.c.l.b16 %v902
      %v918 = vpack.c.b16 %v915, %v914
      %v919 = vpack.c.b16 %v917, %v916
      %v923 = vsel %vm390, %v898, 0
      %925 = vmatprep.subr.bf16.mxu0 0
      %926 = vmatpush1.bf16.msra.mxu0 %v918
      %927 = vmatprep.subr.bf16.mxu0 0
      %928 = vmatpush1.bf16.msra.mxu0 %v919
      %929 = vmatprep.subr.bf16.mxu0 0
      %930 = vmatpush1.bf16.msra.mxu0 0
      %931 = vmatprep.subr.bf16.mxu0 0
      %932 = vmatpush1.bf16.msra.mxu0 0
      %933 = vmatprep.subr.bf16.mxu0 0
      %934 = vmatpush1.bf16.msra.mxu0 0
      %935 = vmatprep.subr.bf16.mxu0 0
      %936 = vmatpush1.bf16.msra.mxu0 0
      %937 = vmatprep.subr.bf16.mxu0 0
      %938 = vmatpush1.bf16.msra.mxu0 0
      %939 = vmatprep.subr.bf16.mxu0 0
      %940 = vmatpush1.bf16.msra.mxu0 0
      %941 = vmatprep.subr.bf16.mxu0 0
      %942 = vmatpush1.bf16.msra.mxu0 0
      %943 = vmatprep.subr.bf16.mxu0 0
      %944 = vmatpush1.bf16.msra.mxu0 0
      %945 = vmatprep.subr.bf16.mxu0 0
      %946 = vmatpush1.bf16.msra.mxu0 0
      %947 = vmatprep.subr.bf16.mxu0 0
      %948 = vmatpush1.bf16.msra.mxu0 0
      %949 = vmatprep.subr.bf16.mxu0 0
      %950 = vmatpush1.bf16.msra.mxu0 0
      %951 = vmatprep.subr.bf16.mxu0 0
      %952 = vmatpush1.bf16.msra.mxu0 0
      %953 = vmatprep.subr.bf16.mxu0 0
      %954 = vmatpush1.bf16.msra.mxu0 0
      %955 = vmatprep.subr.bf16.mxu0 0
      %956 = vmatpush1.bf16.msra.mxu0 0
      %957 = vmatprep.mubr.bf16.mxu0 0
      %958 = vmatmul.mubr.bf16.gmra.mrb[0].mxu0 %v923
      %v959 = vpop.f32.mrb[0].mxu0
      %v960 = vadd.f32 %v908, %v959
      %v961 = vpop.f32.mrb[0].mxu0
      %v962 = vpop.f32.mrb[0].mxu0
      %v963 = vpop.f32.mrb[0].mxu0
      %964 = vdwg.mxu0
      %v965 = vunpack.c.l.bf16 %v363
      %v966 = vadd.f32 %v965, %v960
      %v967 = vsel %vm390, %v966, 0.0
      %968 = vadd.xlane.f32.xlu0 %v967
      %v969 = vpop.xlane.xlu0 %968
      %v970 = vrcp.pop 32.0
      %v971 = vmul.f32 %v969, %v970
      %v972 = vsub.f32 %v966, %v971
      %v973 = vmul.f32 %v972, %v972
      %v974 = vsel %vm390, %v973, 0.0
      %975 = vadd.xlane.f32.xlu0 %v974
      %v976 = vpop.xlane.xlu0 %975
      %v977 = vmul.f32 %v976, %v970
      %v978 = vadd.f32 %v977, 1e-05
      %v979 = vrsqrt.pop %v978
      %v980 = vmul.f32 %v972, %v979
      %v981 = vld [vmem:[%s7] sm:$0x1]
      %v983 = vlaneseq
      %v984 = vshrl.u32 %v983, 7
      %v985 = vsub.s32 0, %v984
      %v986 = vrot.slane %v981, %v985
      %v988 = vmul.f32 %v980, %v986
      %v989 = vld [vmem:[%s8] sm:$0x1]
      %v991 = vlaneseq
      %v992 = vshrl.u32 %v991, 7
      %v993 = vsub.s32 0, %v992
      %v994 = vrot.slane %v989, %v993
      %v996 = vadd.f32 %v988, %v994
      %v997 = vpack.c.bf16 %v996, %v996
      %vm998 = vcmask 257024
      %999 = vst.msk [vmem:[%s361] sm:$0xf] %vm998, %v997
      %p1000 = scmp.lt.s32.totalorder %s20, 1
      %s1001 = scalar_select %p1000, %s20, 1
      %s1002 = smul.addr %s1001, 4
      %s1003 = scalar_lea.vmem %s9, %s1002
      // Predicated region
      $region57: #{gsum_decoder_forward.13} parent=55 // pred_check
        %p1004 = pneg %p242
      $region58: #{gsum_decoder_forward.13} parent=55 // pred_check_branch
        %1006 = sbr.rel (%p1004) target = $region60
      $region59: #{gsum_decoder_forward.13} parent=55 // pred_region
        _
      $region60: #{gsum_decoder_forward.13} parent=55 // pred_fallthru
        _
    $region56: #{gsum_decoder_forward.13} parent=5 // pred_fallthru
      _
    %p1007 = scmp.le.s32.totalorder 2, %s15
    // Predicated region
    $region61: #{gsum_decoder_forward.13} parent=5 // pred_check
      %p1008 = pneg %p1007
    $region62: #{gsum_decoder_forward.13} parent=5 // pred_check_branch
      %1010 = sbr.rel (%p1008) target = $region64
    $region63: #{gsum_decoder_forward.13} parent=5 // pred_region
      %s1011 = ssub.s32 %s15, 2
      // Predicated region
      $region65: #{gsum_decoder_forward.13} parent=63 // pred_check
        %p1012 = pneg %p248
      $region66: #{gsum_decoder_forward.13} parent=63 // pred_check_branch
        %1014 = sbr.rel (%p1012) target = $region68
      $region67: #{gsum_decoder_forward.13} parent=63 // pred_region
        %p1015 = scmp.lt.s32.totalorder %s21, 1
        %s1016 = scalar_select %p1015, %s21, 1
        %s1017 = smul.addr %s1016, 4
        %s1018 = scalar_lea.vmem %s9, %s1017
      $region68: #{gsum_decoder_forward.13} parent=63 // pred_fallthru
        _
    $region64: #{gsum_decoder_forward.13} parent=5 // pred_fallthru
      _
  $region6: #{gsum_decoder_forward.13} parent=0 // loop_footer
    %s19 = sadd.s32 1, %s15
  $region7: #{gsum_decoder_forward.13} parent=0 // loop_footer_branch
    %14 = sbr.rel target = $region3
  $region8: #{gsum_decoder_forward.13} parent=0 // loop_exit
    _

// kernel: gsum_decoder_forward.12
$region0: #{gsum_decoder_forward.12}
  #allocation0 [shape = 'u32[]', space=smem, size = 0x4, offset = 0x4, fixed_abs, tag = 'smem constant byte address 0x4 - core index']
  #allocation1 [shape = 'u32[144,128]{1,0:T(1,128)}', space=vmem, size = 0x12000, scoped, tag = 'internal scratch']
  #allocation2 [shape = 'f32[8,32]{1,0:T(8,128)}', space=vmem, size = 0x1000, scoped, tag = 'scratch operand']
  %s0 = inlined_call_operand.vmem [shape: bf16[2,8,32], index: 0, kind: input, shape index: {}]
  %s1 = inlined_call_operand.vmem [shape: f32[1,8,8], index: 1, kind: input, shape index: {}]
  %s2 = inlined_call_operand.vmem [shape: bf16[32,32], index: 2, kind: input, shape index: {}]
  %s3 = inlined_call_operand.vmem [shape: f32[1,32], index: 3, kind: input, shape index: {}]
  %s4 = inlined_call_operand.vmem [shape: bf16[32,64], index: 4, kind: input, shape index: {}]
  %s5 = inlined_call_operand.vmem [shape: f32[1,64], index: 5, kind: input, shape index: {}]
  %s6 = inlined_call_operand.vmem [shape: bf16[32,32], index: 6, kind: input, shape index: {}]
  %s7 = inlined_call_operand.vmem [shape: f32[1,32], index: 7, kind: input, shape index: {}]
  %s8 = inlined_call_operand.vmem [shape: f32[1,32], index: 8, kind: input, shape index: {}]
  %s9 = inlined_call_operand.vmem [shape: f32[1,32], index: 9, kind: input, shape index: {}]
  %s10 = inlined_call_operand.vmem [shape: bf16[2,8,32], index: 10, kind: output, shape index: {}]
  %s11 = sld [smem:[#allocation0]]
  $region73: #{gsum_decoder_forward.12} parent=0
    _
  %s13 = ssub.s32 1, %s11
  %s14 = scalar_select 0, %s13, %s11
  loop: start=0, step=1, limit=4
  $region2: #{gsum_decoder_forward.12} parent=0 // loop_pre_header
    _
  $region3: #{gsum_decoder_forward.12} parent=0 // loop_header
    %s16 = sphi 0, %s20
    %p17 = scmp.ge.s32.totalorder %s16, 4
    %s26 = sphi 0, %s28
    %s29 = sphi 0, %s26
    %s30 = sphi 0, %s29
    %s46 = sphi 0, %s30
    %s50 = sphi 0, %s50
    %s52 = sphi 0, %s50
    %s53 = sphi 0, %s52
    %s67 = sphi 0, %s53
    %s71 = sphi 0, %s71
    %s73 = sphi 0, %s71
    %s74 = sphi 0, %s73
    %s88 = sphi 0, %s74
    %s92 = sphi 0, %s92
    %s94 = sphi 0, %s92
    %s95 = sphi 0, %s94
    %s109 = sphi 0, %s95
    %s113 = sphi 0, %s113
    %s115 = sphi 0, %s113
    %s116 = sphi 0, %s115
    %s130 = sphi 0, %s116
    %s134 = sphi 0, %s134
    %s136 = sphi 0, %s134
    %s137 = sphi 0, %s136
    %s151 = sphi 0, %s137
    %s155 = sphi 0, %s155
    %s157 = sphi 0, %s155
    %s158 = sphi 0, %s157
    %s172 = sphi 0, %s158
    %s176 = sphi 0, %s176
    %s178 = sphi 0, %s176
    %s179 = sphi 0, %s178
    %s193 = sphi 0, %s179
    %s197 = sphi 0, %s197
    %s199 = sphi 0, %s197
    %s200 = sphi 0, %s199
    %s214 = sphi 0, %s200
    %s218 = sphi 0, %s218
    %s220 = sphi 0, %s218
    %s221 = sphi 0, %s220
    %s235 = sphi 0, %s221
    %s241 = sphi 0, %s243
    %s244 = sphi 0, %s241
    %s245 = sphi 0, %s244
    %s261 = sphi 0, %s245
  $region4: #{gsum_decoder_forward.12} parent=0 // loop_header_branch
    %19 = sbr.rel (%p17) target = $region8
  $region5: #{gsum_decoder_forward.12} parent=0 // loop_body
    %s21 = ssub.s32 %s16, 1
    %s22 = ssub.s32 %s16, 2
    %s23 = sadd.s32 %s16, 1
    %s24 = ssub.s32 %s16, %s23
    %p25 = scmp.eq.s32.totalorder %s24, 0
    %s27 = sadd.s32 %s26, 1
    %s28 = scalar_select %p25, %s26, %s27
    %p31 = pneg %p25
    %p32 = scmp.eq.s32.totalorder %s16, 1
    %p33 = por %p31, %p32
    %p34 = scmp.ne.s32.totalorder %s26, %s29
    %p35 = scmp.eq.s32.totalorder %s16, 0
    %p36 = por %p34, %p35
    %p37 = scmp.ne.s32.totalorder %s26, %s29
    %p38 = scmp.eq.s32.totalorder %s21, 1
    %p39 = por %p37, %p38
    %p40 = scmp.ne.s32.totalorder %s29, %s30
    %p41 = scmp.eq.s32.totalorder %s21, 0
    %p42 = por %p40, %p41
    %p43 = scmp.ne.s32.totalorder %s29, %s30
    %p44 = scmp.eq.s32.totalorder %s22, 1
    %p45 = por %p43, %p44
    %p47 = scmp.ne.s32.totalorder %s30, %s46
    %p48 = scmp.eq.s32.totalorder %s22, 0
    %p49 = por %p47, %p48
    %s51 = sadd.s32 %s50, 1
    %p54 = scmp.eq.s32.totalorder %s16, 1
    %p55 = scmp.ne.s32.totalorder %s50, %s52
    %p56 = scmp.eq.s32.totalorder %s16, 0
    %p57 = por %p55, %p56
    %p58 = scmp.ne.s32.totalorder %s50, %s52
    %p59 = scmp.eq.s32.totalorder %s21, 1
    %p60 = por %p58, %p59
    %p61 = scmp.ne.s32.totalorder %s52, %s53
    %p62 = scmp.eq.s32.totalorder %s21, 0
    %p63 = por %p61, %p62
    %p64 = scmp.ne.s32.totalorder %s52, %s53
    %p65 = scmp.eq.s32.totalorder %s22, 1
    %p66 = por %p64, %p65
    %p68 = scmp.ne.s32.totalorder %s53, %s67
    %p69 = scmp.eq.s32.totalorder %s22, 0
    %p70 = por %p68, %p69
    %s72 = sadd.s32 %s71, 1
    %p75 = scmp.eq.s32.totalorder %s16, 1
    %p76 = scmp.ne.s32.totalorder %s71, %s73
    %p77 = scmp.eq.s32.totalorder %s16, 0
    %p78 = por %p76, %p77
    %p79 = scmp.ne.s32.totalorder %s71, %s73
    %p80 = scmp.eq.s32.totalorder %s21, 1
    %p81 = por %p79, %p80
    %p82 = scmp.ne.s32.totalorder %s73, %s74
    %p83 = scmp.eq.s32.totalorder %s21, 0
    %p84 = por %p82, %p83
    %p85 = scmp.ne.s32.totalorder %s73, %s74
    %p86 = scmp.eq.s32.totalorder %s22, 1
    %p87 = por %p85, %p86
    %p89 = scmp.ne.s32.totalorder %s74, %s88
    %p90 = scmp.eq.s32.totalorder %s22, 0
    %p91 = por %p89, %p90
    %s93 = sadd.s32 %s92, 1
    %p96 = scmp.eq.s32.totalorder %s16, 1
    %p97 = scmp.ne.s32.totalorder %s92, %s94
    %p98 = scmp.eq.s32.totalorder %s16, 0
    %p99 = por %p97, %p98
    %p100 = scmp.ne.s32.totalorder %s92, %s94
    %p101 = scmp.eq.s32.totalorder %s21, 1
    %p102 = por %p100, %p101
    %p103 = scmp.ne.s32.totalorder %s94, %s95
    %p104 = scmp.eq.s32.totalorder %s21, 0
    %p105 = por %p103, %p104
    %p106 = scmp.ne.s32.totalorder %s94, %s95
    %p107 = scmp.eq.s32.totalorder %s22, 1
    %p108 = por %p106, %p107
    %p110 = scmp.ne.s32.totalorder %s95, %s109
    %p111 = scmp.eq.s32.totalorder %s22, 0
    %p112 = por %p110, %p111
    %s114 = sadd.s32 %s113, 1
    %p117 = scmp.eq.s32.totalorder %s16, 1
    %p118 = scmp.ne.s32.totalorder %s113, %s115
    %p119 = scmp.eq.s32.totalorder %s16, 0
    %p120 = por %p118, %p119
    %p121 = scmp.ne.s32.totalorder %s113, %s115
    %p122 = scmp.eq.s32.totalorder %s21, 1
    %p123 = por %p121, %p122
    %p124 = scmp.ne.s32.totalorder %s115, %s116
    %p125 = scmp.eq.s32.totalorder %s21, 0
    %p126 = por %p124, %p125
    %p127 = scmp.ne.s32.totalorder %s115, %s116
    %p128 = scmp.eq.s32.totalorder %s22, 1
    %p129 = por %p127, %p128
    %p131 = scmp.ne.s32.totalorder %s116, %s130
    %p132 = scmp.eq.s32.totalorder %s22, 0
    %p133 = por %p131, %p132
    %s135 = sadd.s32 %s134, 1
    %p138 = scmp.eq.s32.totalorder %s16, 1
    %p139 = scmp.ne.s32.totalorder %s134, %s136
    %p140 = scmp.eq.s32.totalorder %s16, 0
    %p141 = por %p139, %p140
    %p142 = scmp.ne.s32.totalorder %s134, %s136
    %p143 = scmp.eq.s32.totalorder %s21, 1
    %p144 = por %p142, %p143
    %p145 = scmp.ne.s32.totalorder %s136, %s137
    %p146 = scmp.eq.s32.totalorder %s21, 0
    %p147 = por %p145, %p146
    %p148 = scmp.ne.s32.totalorder %s136, %s137
    %p149 = scmp.eq.s32.totalorder %s22, 1
    %p150 = por %p148, %p149
    %p152 = scmp.ne.s32.totalorder %s137, %s151
    %p153 = scmp.eq.s32.totalorder %s22, 0
    %p154 = por %p152, %p153
    %s156 = sadd.s32 %s155, 1
    %p159 = scmp.eq.s32.totalorder %s16, 1
    %p160 = scmp.ne.s32.totalorder %s155, %s157
    %p161 = scmp.eq.s32.totalorder %s16, 0
    %p162 = por %p160, %p161
    %p163 = scmp.ne.s32.totalorder %s155, %s157
    %p164 = scmp.eq.s32.totalorder %s21, 1
    %p165 = por %p163, %p164
    %p166 = scmp.ne.s32.totalorder %s157, %s158
    %p167 = scmp.eq.s32.totalorder %s21, 0
    %p168 = por %p166, %p167
    %p169 = scmp.ne.s32.totalorder %s157, %s158
    %p170 = scmp.eq.s32.totalorder %s22, 1
    %p171 = por %p169, %p170
    %p173 = scmp.ne.s32.totalorder %s158, %s172
    %p174 = scmp.eq.s32.totalorder %s22, 0
    %p175 = por %p173, %p174
    %s177 = sadd.s32 %s176, 1
    %p180 = scmp.eq.s32.totalorder %s16, 1
    %p181 = scmp.ne.s32.totalorder %s176, %s178
    %p182 = scmp.eq.s32.totalorder %s16, 0
    %p183 = por %p181, %p182
    %p184 = scmp.ne.s32.totalorder %s176, %s178
    %p185 = scmp.eq.s32.totalorder %s21, 1
    %p186 = por %p184, %p185
    %p187 = scmp.ne.s32.totalorder %s178, %s179
    %p188 = scmp.eq.s32.totalorder %s21, 0
    %p189 = por %p187, %p188
    %p190 = scmp.ne.s32.totalorder %s178, %s179
    %p191 = scmp.eq.s32.totalorder %s22, 1
    %p192 = por %p190, %p191
    %p194 = scmp.ne.s32.totalorder %s179, %s193
    %p195 = scmp.eq.s32.totalorder %s22, 0
    %p196 = por %p194, %p195
    %s198 = sadd.s32 %s197, 1
    %p201 = scmp.eq.s32.totalorder %s16, 1
    %p202 = scmp.ne.s32.totalorder %s197, %s199
    %p203 = scmp.eq.s32.totalorder %s16, 0
    %p204 = por %p202, %p203
    %p205 = scmp.ne.s32.totalorder %s197, %s199
    %p206 = scmp.eq.s32.totalorder %s21, 1
    %p207 = por %p205, %p206
    %p208 = scmp.ne.s32.totalorder %s199, %s200
    %p209 = scmp.eq.s32.totalorder %s21, 0
    %p210 = por %p208, %p209
    %p211 = scmp.ne.s32.totalorder %s199, %s200
    %p212 = scmp.eq.s32.totalorder %s22, 1
    %p213 = por %p211, %p212
    %p215 = scmp.ne.s32.totalorder %s200, %s214
    %p216 = scmp.eq.s32.totalorder %s22, 0
    %p217 = por %p215, %p216
    %s219 = sadd.s32 %s218, 1
    %p222 = scmp.eq.s32.totalorder %s16, 1
    %p223 = scmp.ne.s32.totalorder %s218, %s220
    %p224 = scmp.eq.s32.totalorder %s16, 0
    %p225 = por %p223, %p224
    %p226 = scmp.ne.s32.totalorder %s218, %s220
    %p227 = scmp.eq.s32.totalorder %s21, 1
    %p228 = por %p226, %p227
    %p229 = scmp.ne.s32.totalorder %s220, %s221
    %p230 = scmp.eq.s32.totalorder %s21, 0
    %p231 = por %p229, %p230
    %p232 = scmp.ne.s32.totalorder %s220, %s221
    %p233 = scmp.eq.s32.totalorder %s22, 1
    %p234 = por %p232, %p233
    %p236 = scmp.ne.s32.totalorder %s221, %s235
    %p237 = scmp.eq.s32.totalorder %s22, 0
    %p238 = por %p236, %p237
    %s239 = ssub.s32 %s16, %s23
    %p240 = scmp.eq.s32.totalorder %s239, 0
    %s242 = sadd.s32 %s241, 1
    %s243 = scalar_select %p240, %s241, %s242
    %p246 = pneg %p240
    %p247 = scmp.eq.s32.totalorder %s16, 1
    %p248 = por %p246, %p247
    %p249 = scmp.ne.s32.totalorder %s241, %s244
    %p250 = scmp.eq.s32.totalorder %s16, 0
    %p251 = por %p249, %p250
    %p252 = scmp.ne.s32.totalorder %s241, %s244
    %p253 = scmp.eq.s32.totalorder %s21, 1
    %p254 = por %p252, %p253
    %p255 = scmp.ne.s32.totalorder %s244, %s245
    %p256 = scmp.eq.s32.totalorder %s21, 0
    %p257 = por %p255, %p256
    %p258 = scmp.ne.s32.totalorder %s244, %s245
    %p259 = scmp.eq.s32.totalorder %s22, 1
    %p260 = por %p258, %p259
    %p262 = scmp.ne.s32.totalorder %s245, %s261
    %p263 = scmp.eq.s32.totalorder %s22, 0
    %p264 = por %p262, %p263
    %p265 = scmp.le.s32.totalorder 1, %s16
    %p266 = scmp.lt.s32.totalorder %s16, 3
    %p267 = pnand %p265, %p266
    %p268 = pneg %p267
    // Predicated region
    $region9: #{gsum_decoder_forward.12} parent=5 // pred_check
      _
    $region10: #{gsum_decoder_forward.12} parent=5 // pred_check_branch
      %270 = sbr.rel (%p267) target = $region12
    $region11: #{gsum_decoder_forward.12} parent=5 // pred_region
      %s271 = ssub.s32 %s16, 1
      // Predicated region
      $region13: #{gsum_decoder_forward.12} parent=11 // pred_check
        %p272 = pneg %p63
      $region14: #{gsum_decoder_forward.12} parent=11 // pred_check_branch
        %274 = sbr.rel (%p272) target = $region16
      $region15: #{gsum_decoder_forward.12} parent=11 // pred_region
        _
      $region16: #{gsum_decoder_forward.12} parent=11 // pred_fallthru
        _
      // Predicated region
      $region17: #{gsum_decoder_forward.12} parent=11 // pred_check
        %p275 = pneg %p84
      $region18: #{gsum_decoder_forward.12} parent=11 // pred_check_branch
        %277 = sbr.rel (%p275) target = $region20
      $region19: #{gsum_decoder_forward.12} parent=11 // pred_region
        _
      $region20: #{gsum_decoder_forward.12} parent=11 // pred_fallthru
        _
      // Predicated region
      $region21: #{gsum_decoder_forward.12} parent=11 // pred_check
        %p278 = pneg %p105
      $region22: #{gsum_decoder_forward.12} parent=11 // pred_check_branch
        %280 = sbr.rel (%p278) target = $region24
      $region23: #{gsum_decoder_forward.12} parent=11 // pred_region
        _
      $region24: #{gsum_decoder_forward.12} parent=11 // pred_fallthru
        _
      // Predicated region
      $region25: #{gsum_decoder_forward.12} parent=11 // pred_check
        %p281 = pneg %p126
      $region26: #{gsum_decoder_forward.12} parent=11 // pred_check_branch
        %283 = sbr.rel (%p281) target = $region28
      $region27: #{gsum_decoder_forward.12} parent=11 // pred_region
        _
      $region28: #{gsum_decoder_forward.12} parent=11 // pred_fallthru
        _
      // Predicated region
      $region29: #{gsum_decoder_forward.12} parent=11 // pred_check
        %p284 = pneg %p147
      $region30: #{gsum_decoder_forward.12} parent=11 // pred_check_branch
        %286 = sbr.rel (%p284) target = $region32
      $region31: #{gsum_decoder_forward.12} parent=11 // pred_region
        _
      $region32: #{gsum_decoder_forward.12} parent=11 // pred_fallthru
        _
      // Predicated region
      $region33: #{gsum_decoder_forward.12} parent=11 // pred_check
        %p287 = pneg %p168
      $region34: #{gsum_decoder_forward.12} parent=11 // pred_check_branch
        %289 = sbr.rel (%p287) target = $region36
      $region35: #{gsum_decoder_forward.12} parent=11 // pred_region
        _
      $region36: #{gsum_decoder_forward.12} parent=11 // pred_fallthru
        _
      // Predicated region
      $region37: #{gsum_decoder_forward.12} parent=11 // pred_check
        %p290 = pneg %p189
      $region38: #{gsum_decoder_forward.12} parent=11 // pred_check_branch
        %292 = sbr.rel (%p290) target = $region40
      $region39: #{gsum_decoder_forward.12} parent=11 // pred_region
        _
      $region40: #{gsum_decoder_forward.12} parent=11 // pred_fallthru
        _
      // Predicated region
      $region41: #{gsum_decoder_forward.12} parent=11 // pred_check
        %p293 = pneg %p210
      $region42: #{gsum_decoder_forward.12} parent=11 // pred_check_branch
        %295 = sbr.rel (%p293) target = $region44
      $region43: #{gsum_decoder_forward.12} parent=11 // pred_region
        _
      $region44: #{gsum_decoder_forward.12} parent=11 // pred_fallthru
        _
      // Predicated region
      $region45: #{gsum_decoder_forward.12} parent=11 // pred_check
        %p296 = pneg %p231
      $region46: #{gsum_decoder_forward.12} parent=11 // pred_check_branch
        %298 = sbr.rel (%p296) target = $region48
      $region47: #{gsum_decoder_forward.12} parent=11 // pred_region
        _
      $region48: #{gsum_decoder_forward.12} parent=11 // pred_fallthru
        _
    $region12: #{gsum_decoder_forward.12} parent=5 // pred_fallthru
      _
    %p299 = scmp.lt.s32.totalorder %s16, 2
    // Predicated region
    $region49: #{gsum_decoder_forward.12} parent=5 // pred_check
      %p300 = pneg %p299
    $region50: #{gsum_decoder_forward.12} parent=5 // pred_check_branch
      %302 = sbr.rel (%p300) target = $region52
    $region51: #{gsum_decoder_forward.12} parent=5 // pred_region
      // Predicated region
      $region53: #{gsum_decoder_forward.12} parent=51 // pred_check
        %p303 = pneg %p36
      $region54: #{gsum_decoder_forward.12} parent=51 // pred_check_branch
        %305 = sbr.rel (%p303) target = $region56
      $region55: #{gsum_decoder_forward.12} parent=51 // pred_region
        %p306 = scmp.lt.s32.totalorder %s16, 1
        %s307 = scalar_select %p306, %s16, 1
        %s308 = smul.addr %s307, 4
        %s309 = scalar_lea.vmem %s0, %s308
      $region56: #{gsum_decoder_forward.12} parent=51 // pred_fallthru
        _
    $region52: #{gsum_decoder_forward.12} parent=5 // pred_fallthru
      _
    %p310 = scmp.le.s32.totalorder 1, %s16
    %p311 = scmp.lt.s32.totalorder %s16, 3
    %p312 = pnand %p310, %p311
    %p313 = pneg %p312
    // Predicated region
    $region57: #{gsum_decoder_forward.12} parent=5 // pred_check
      _
    $region58: #{gsum_decoder_forward.12} parent=5 // pred_check_branch
      %315 = sbr.rel (%p312) target = $region60
    $region59: #{gsum_decoder_forward.12} parent=5 // pred_region
      %s316 = ssub.s32 %s16, 1
      %p317 = scmp.lt.s32.totalorder %s21, 1
      %s318 = scalar_select %p317, %s21, 1
      %s319 = smul.addr %s318, 4
      %s320 = scalar_lea.vmem %s0, %s319
      %p321 = pneg %p42
      %p322 = pneg %p39
      %p323 = pneg %p63
      %p324 = pneg %p60
      %p325 = pneg %p84
      %p326 = pneg %p81
      %p327 = pneg %p105
      %p328 = pneg %p102
      %p329 = pneg %p126
      %p330 = pneg %p123
      %p331 = pneg %p147
      %p332 = pneg %p144
      %p333 = pneg %p168
      %p334 = pneg %p165
      %p335 = pneg %p189
      %p336 = pneg %p186
      %p337 = pneg %p210
      %p338 = pneg %p207
      %p339 = pneg %p231
      %p340 = pneg %p228
      %p341 = pneg %p257
      %p342 = pneg %p254
      %p343 = scmp.lt.s32.totalorder %s21, 1
      %s344 = scalar_select %p343, %s21, 1
      %s345 = smul.addr %s344, 4
      %s346 = scalar_lea.vmem %s10, %s345
      %p347 = scmp.lt.s32.totalorder %s21, 1
      %s348 = scalar_select %p347, %s21, 1
      %s349 = smul.addr %s348, 4
      %s350 = scalar_lea.vmem %s0, %s349
      %p351 = scmp.lt.s32.totalorder %s21, 1
      %s352 = scalar_select %p351, %s21, 1
      %s353 = smul.addr %s352, 4
      %s354 = scalar_lea.vmem %s10, %s353
      %v356 = vld [vmem:[%s350] sm:$0xf]
      %v357 = vld [vmem:[%s1] sm:$0xff]
      %v358 = vld [vmem:[%s2] sm:$0xf]
      %v359 = vld [vmem:[%s2 + $0x4] sm:$0xf]
      %v360 = vld [vmem:[%s2 + $0x8] sm:$0xf]
      %v361 = vld [vmem:[%s2 + $0xc] sm:$0xf]
      %v362 = vld [vmem:[%s3] sm:$0x1]
      %v364 = vlaneseq
      %v365 = vshrl.u32 %v364, 7
      %v366 = vsub.s32 0, %v365
      %v367 = vrot.slane %v362, %v366
      %v373 = vunpack.c.l.b16 %v358
      %v374 = vunpack.c.l.b16 %v359
      %v375 = vunpack.c.l.b16 %v360
      %v376 = vunpack.c.l.b16 %v361
      %v377 = vpack.c.b16 %v374, %v373
      %v378 = vpack.c.b16 %v376, %v375
      %vm381 = vcmask 261120
      %v383 = vsel %vm381, %v356, 0
      %385 = vmatprep.subr.bf16.mxu0 0
      %386 = vmatpush1.bf16.msra.mxu0 %v377
      %387 = vmatprep.subr.bf16.mxu0 0
      %388 = vmatpush1.bf16.msra.mxu0 %v378
      %389 = vmatprep.subr.bf16.mxu0 0
      %390 = vmatpush1.bf16.msra.mxu0 0
      %391 = vmatprep.subr.bf16.mxu0 0
      %392 = vmatpush1.bf16.msra.mxu0 0
      %393 = vmatprep.subr.bf16.mxu0 0
      %394 = vmatpush1.bf16.msra.mxu0 0
      %395 = vmatprep.subr.bf16.mxu0 0
      %396 = vmatpush1.bf16.msra.mxu0 0
      %397 = vmatprep.subr.bf16.mxu0 0
      %398 = vmatpush1.bf16.msra.mxu0 0
      %399 = vmatprep.subr.bf16.mxu0 0
      %400 = vmatpush1.bf16.msra.mxu0 0
      %401 = vmatprep.subr.bf16.mxu0 0
      %402 = vmatpush1.bf16.msra.mxu0 0
      %403 = vmatprep.subr.bf16.mxu0 0
      %404 = vmatpush1.bf16.msra.mxu0 0
      %405 = vmatprep.subr.bf16.mxu0 0
      %406 = vmatpush1.bf16.msra.mxu0 0
      %407 = vmatprep.subr.bf16.mxu0 0
      %408 = vmatpush1.bf16.msra.mxu0 0
      %409 = vmatprep.subr.bf16.mxu0 0
      %410 = vmatpush1.bf16.msra.mxu0 0
      %411 = vmatprep.subr.bf16.mxu0 0
      %412 = vmatpush1.bf16.msra.mxu0 0
      %413 = vmatprep.subr.bf16.mxu0 0
      %414 = vmatpush1.bf16.msra.mxu0 0
      %415 = vmatprep.subr.bf16.mxu0 0
      %416 = vmatpush1.bf16.msra.mxu0 0
      %417 = vmatprep.mubr.bf16.mxu0 0
      %418 = vmatmul.mubr.bf16.gmra.mrb[0].mxu0 %v383
      %v419 = vpop.f32.mrb[0].mxu0
      %v420 = vadd.f32 %v367, %v419
      %v421 = vpop.f32.mrb[0].mxu0
      %v422 = vpop.f32.mrb[0].mxu0
      %v423 = vpop.f32.mrb[0].mxu0
      %424 = vdwg.mxu0
      %v425 = vld [vmem:[%s4] sm:$0xf]
      %v426 = vld [vmem:[%s4 + $0x4] sm:$0xf]
      %v427 = vld [vmem:[%s4 + $0x8] sm:$0xf]
      %v428 = vld [vmem:[%s4 + $0xc] sm:$0xf]
      %v429 = vld [vmem:[%s5] sm:$0x1]
      %v431 = vlaneseq
      %v432 = vshrl.u32 %v431, 7
      %v433 = vsub.s32 0, %v432
      %v434 = vrot.slane %v429, %v433
      %v440 = vunpack.c.l.b16 %v425
      %v441 = vunpack.c.l.b16 %v426
      %v442 = vunpack.c.l.b16 %v427
      %v443 = vunpack.c.l.b16 %v428
      %v444 = vpack.c.b16 %v441, %v440
      %v445 = vpack.c.b16 %v443, %v442
      %448 = vmatprep.subr.bf16.mxu0 0
      %449 = vmatpush1.bf16.msra.mxu0 %v444
      %450 = vmatprep.subr.bf16.mxu0 0
      %451 = vmatpush1.bf16.msra.mxu0 %v445
      %452 = vmatprep.subr.bf16.mxu0 0
      %453 = vmatpush1.bf16.msra.mxu0 0
      %454 = vmatprep.subr.bf16.mxu0 0
      %455 = vmatpush1.bf16.msra.mxu0 0
      %456 = vmatprep.subr.bf16.mxu0 0
      %457 = vmatpush1.bf16.msra.mxu0 0
      %458 = vmatprep.subr.bf16.mxu0 0
      %459 = vmatpush1.bf16.msra.mxu0 0
      %460 = vmatprep.subr.bf16.mxu0 0
      %461 = vmatpush1.bf16.msra.mxu0 0
      %462 = vmatprep.subr.bf16.mxu0 0
      %463 = vmatpush1.bf16.msra.mxu0 0
      %464 = vmatprep.subr.bf16.mxu0 0
      %465 = vmatpush1.bf16.msra.mxu0 0
      %466 = vmatprep.subr.bf16.mxu0 0
      %467 = vmatpush1.bf16.msra.mxu0 0
      %468 = vmatprep.subr.bf16.mxu0 0
      %469 = vmatpush1.bf16.msra.mxu0 0
      %470 = vmatprep.subr.bf16.mxu0 0
      %471 = vmatpush1.bf16.msra.mxu0 0
      %472 = vmatprep.subr.bf16.mxu0 0
      %473 = vmatpush1.bf16.msra.mxu0 0
      %474 = vmatprep.subr.bf16.mxu0 0
      %475 = vmatpush1.bf16.msra.mxu0 0
      %476 = vmatprep.subr.bf16.mxu0 0
      %477 = vmatpush1.bf16.msra.mxu0 0
      %478 = vmatprep.subr.bf16.mxu0 0
      %479 = vmatpush1.bf16.msra.mxu0 0
      %480 = vmatprep.mubr.bf16.mxu0 0
      %481 = vmatmul.mubr.bf16.gmra.mrb[0].mxu0 %v383
      %v482 = vpop.f32.mrb[0].mxu0
      %v483 = vadd.f32 %v434, %v482
      %v484 = vpop.f32.mrb[0].mxu0
      %v485 = vpop.f32.mrb[0].mxu0
      %v486 = vpop.f32.mrb[0].mxu0
      %487 = vdwg.mxu0
      %v488 = vmul.f32 %v420, 0.35355338
      %v489 = vpack.c.bf16 %v488, %v488
      %v490 = vpack.c.bf16 %v483, %v483
      %vm491 = vcmask 64512
      %v493 = vsel %vm491, %v489, 0
      %v496 = vsel %vm491, %v490, 0
      %498 = vmatprep.subr.bf16.mxu0 0
      %499 = vmatpush1.bf16.xpose.msra.mxu0 %v496
      %500 = vmatprep.subr.bf16.mxu0 0
      %501 = vmatpush1.bf16.xpose.msra.mxu0 0
      %502 = vmatprep.subr.bf16.mxu0 0
      %503 = vmatpush1.bf16.xpose.msra.mxu0 0
      %504 = vmatprep.subr.bf16.mxu0 0
      %505 = vmatpush1.bf16.xpose.msra.mxu0 0
      %506 = vmatprep.subr.bf16.mxu0 0
      %507 = vmatpush1.bf16.xpose.msra.mxu0 0
      %508 = vmatprep.subr.bf16.mxu0 0
      %509 = vmatpush1.bf16.xpose.msra.mxu0 0
      %510 = vmatprep.subr.bf16.mxu0 0
      %511 = vmatpush1.bf16.xpose.msra.mxu0 0
      %512 = vmatprep.subr.bf16.mxu0 0
      %513 = vmatpush1.bf16.xpose.msra.mxu0 0
      %514 = vmatprep.subr.bf16.mxu0 0
      %515 = vmatpush1.bf16.xpose.msra.mxu0 0
      %516 = vmatprep.subr.bf16.mxu0 0
      %517 = vmatpush1.bf16.xpose.msra.mxu0 0
      %518 = vmatprep.subr.bf16.mxu0 0
      %519 = vmatpush1.bf16.xpose.msra.mxu0 0
      %520 = vmatprep.subr.bf16.mxu0 0
      %521 = vmatpush1.bf16.xpose.msra.mxu0 0
      %522 = vmatprep.subr.bf16.mxu0 0
      %523 = vmatpush1.bf16.xpose.msra.mxu0 0
      %524 = vmatprep.subr.bf16.mxu0 0
      %525 = vmatpush1.bf16.xpose.msra.mxu0 0
      %526 = vmatprep.subr.bf16.mxu0 0
      %527 = vmatpush1.bf16.xpose.msra.mxu0 0
      %528 = vmatprep.subr.bf16.mxu0 0
      %529 = vmatpush1.bf16.xpose.msra.mxu0 0
      %530 = vmatprep.mubr.bf16.mxu0 0
      %531 = vmatmul.mubr.bf16.gmra.mrb[0].mxu0 %v493
      %v532 = vpop.f32.mrb[0].mxu0
      %v533 = vadd.f32 %v357, %v532
      %v534 = vpop.f32.mrb[0].mxu0
      %v535 = vpop.f32.mrb[0].mxu0
      %v536 = vpop.f32.mrb[0].mxu0
      %537 = vdwg.mxu0
      %v538 = vsel %vm491, %v533, -inf
      %539 = vmax.xlane.f32.xlu0 %v538
      %v540 = vpop.xlane.xlu0 %539
      %v541 = vsub.f32 %v533, %v540
      %v542 = vmul.f32 %v541, 1.442695
      %v543 = vpow.pop %v542
      %v544 = vsel %vm491, %v543, 0.0
      %545 = vadd.xlane.f32.xlu0 %v544
      %v546 = vpop.xlane.xlu0 %545
      %v547 = vrcp.pop %v546
      %v548 = vmul.f32 %v543, %v547
      %v549 = vpack.c.bf16 %v548, %v548
      %551 = vrot.lane.b32.xlu0 %v490, 96
      %v552 = vpop.permute.xlu0 %551
      %v554 = vsel %vm491, %v549, 0
      %vm556 = vcmask 1043456
      %v558 = vsel %vm556, %v552, 0
      %560 = vmatprep.subr.bf16.mxu0 0
      %561 = vmatpush1.bf16.msra.mxu0 %v558
      %562 = vmatprep.subr.bf16.mxu0 0
      %563 = vmatpush1.bf16.msra.mxu0 0
      %564 = vmatprep.subr.bf16.mxu0 0
      %565 = vmatpush1.bf16.msra.mxu0 0
      %566 = vmatprep.subr.bf16.mxu0 0
      %567 = vmatpush1.bf16.msra.mxu0 0
      %568 = vmatprep.subr.bf16.mxu0 0
      %569 = vmatpush1.bf16.msra.mxu0 0
      %570 = vmatprep.subr.bf16.mxu0 0
      %571 = vmatpush1.bf16.msra.mxu0 0
      %572 = vmatprep.subr.bf16.mxu0 0
      %573 = vmatpush1.bf16.msra.mxu0 0
      %574 = vmatprep.subr.bf16.mxu0 0
      %575 = vmatpush1.bf16.msra.mxu0 0
      %576 = vmatprep.subr.bf16.mxu0 0
      %577 = vmatpush1.bf16.msra.mxu0 0
      %578 = vmatprep.subr.bf16.mxu0 0
      %579 = vmatpush1.bf16.msra.mxu0 0
      %580 = vmatprep.subr.bf16.mxu0 0
      %581 = vmatpush1.bf16.msra.mxu0 0
      %582 = vmatprep.subr.bf16.mxu0 0
      %583 = vmatpush1.bf16.msra.mxu0 0
      %584 = vmatprep.subr.bf16.mxu0 0
      %585 = vmatpush1.bf16.msra.mxu0 0
      %586 = vmatprep.subr.bf16.mxu0 0
      %587 = vmatpush1.bf16.msra.mxu0 0
      %588 = vmatprep.subr.bf16.mxu0 0
      %589 = vmatpush1.bf16.msra.mxu0 0
      %590 = vmatprep.subr.bf16.mxu0 0
      %591 = vmatpush1.bf16.msra.mxu0 0
      %592 = vmatprep.mubr.bf16.mxu0 0
      %593 = vmatmul.mubr.bf16.gmra.mrb[0].mxu0 %v554
      %v594 = vpop.f32.mrb[0].mxu0
      %v595 = vadd.f32 0.0, %v594
      %v596 = vpop.f32.mrb[0].mxu0
      %v597 = vpop.f32.mrb[0].mxu0
      %v598 = vpop.f32.mrb[0].mxu0
      %599 = vdwg.mxu0
      %600 = vst.msk [vmem:[#allocation2] sm:$0xff] %vm491, %v595
      %602 = vrot.lane.b32.xlu0 %v489, 120
      %v603 = vpop.permute.xlu0 %602
      %604 = vrot.lane.b32.xlu0 %v490, 120
      %v605 = vpop.permute.xlu0 %604
      %v607 = vsel %vm491, %v603, 0
      %v610 = vsel %vm491, %v605, 0
      %612 = vmatprep.subr.bf16.mxu0 0
      %613 = vmatpush1.bf16.xpose.msra.mxu0 %v610
      %614 = vmatprep.subr.bf16.mxu0 0
      %615 = vmatpush1.bf16.xpose.msra.mxu0 0
      %616 = vmatprep.subr.bf16.mxu0 0
      %617 = vmatpush1.bf16.xpose.msra.mxu0 0
      %618 = vmatprep.subr.bf16.mxu0 0
      %619 = vmatpush1.bf16.xpose.msra.mxu0 0
      %620 = vmatprep.subr.bf16.mxu0 0
      %621 = vmatpush1.bf16.xpose.msra.mxu0 0
      %622 = vmatprep.subr.bf16.mxu0 0
      %623 = vmatpush1.bf16.xpose.msra.mxu0 0
      %624 = vmatprep.subr.bf16.mxu0 0
      %625 = vmatpush1.bf16.xpose.msra.mxu0 0
      %626 = vmatprep.subr.bf16.mxu0 0
      %627 = vmatpush1.bf16.xpose.msra.mxu0 0
      %628 = vmatprep.subr.bf16.mxu0 0
      %629 = vmatpush1.bf16.xpose.msra.mxu0 0
      %630 = vmatprep.subr.bf16.mxu0 0
      %631 = vmatpush1.bf16.xpose.msra.mxu0 0
      %632 = vmatprep.subr.bf16.mxu0 0
      %633 = vmatpush1.bf16.xpose.msra.mxu0 0
      %634 = vmatprep.subr.bf16.mxu0 0
      %635 = vmatpush1.bf16.xpose.msra.mxu0 0
      %636 = vmatprep.subr.bf16.mxu0 0
      %637 = vmatpush1.bf16.xpose.msra.mxu0 0
      %638 = vmatprep.subr.bf16.mxu0 0
      %639 = vmatpush1.bf16.xpose.msra.mxu0 0
      %640 = vmatprep.subr.bf16.mxu0 0
      %641 = vmatpush1.bf16.xpose.msra.mxu0 0
      %642 = vmatprep.subr.bf16.mxu0 0
      %643 = vmatpush1.bf16.xpose.msra.mxu0 0
      %644 = vmatprep.mubr.bf16.mxu0 0
      %645 = vmatmul.mubr.bf16.gmra.mrb[0].mxu0 %v607
      %v646 = vpop.f32.mrb[0].mxu0
      %v647 = vadd.f32 %v357, %v646
      %v648 = vpop.f32.mrb[0].mxu0
      %v649 = vpop.f32.mrb[0].mxu0
      %v650 = vpop.f32.mrb[0].mxu0
      %651 = vdwg.mxu0
      %v652 = vsel %vm491, %v647, -inf
      %653 = vmax.xlane.f32.xlu0 %v652
      %v654 = vpop.xlane.xlu0 %653
      %v655 = vsub.f32 %v647, %v654
      %v656 = vmul.f32 %v655, 1.442695
      %v657 = vpow.pop %v656
      %v658 = vsel %vm491, %v657, 0.0
      %659 = vadd.xlane.f32.xlu0 %v658
      %v660 = vpop.xlane.xlu0 %659
      %v661 = vrcp.pop %v660
      %v662 = vmul.f32 %v657, %v661
      %v663 = vpack.c.bf16 %v662, %v662
      %664 = vrot.lane.b32.xlu0 %v490, 88
      %v665 = vpop.permute.xlu0 %664
      %v667 = vsel %vm491, %v663, 0
      %v670 = vsel %vm556, %v665, 0
      %672 = vmatprep.subr.bf16.mxu0 0
      %673 = vmatpush1.bf16.msra.mxu0 %v670
      %674 = vmatprep.subr.bf16.mxu0 0
      %675 = vmatpush1.bf16.msra.mxu0 0
      %676 = vmatprep.subr.bf16.mxu0 0
      %677 = vmatpush1.bf16.msra.mxu0 0
      %678 = vmatprep.subr.bf16.mxu0 0
      %679 = vmatpush1.bf16.msra.mxu0 0
      %680 = vmatprep.subr.bf16.mxu0 0
      %681 = vmatpush1.bf16.msra.mxu0 0
      %682 = vmatprep.subr.bf16.mxu0 0
      %683 = vmatpush1.bf16.msra.mxu0 0
      %684 = vmatprep.subr.bf16.mxu0 0
      %685 = vmatpush1.bf16.msra.mxu0 0
      %686 = vmatprep.subr.bf16.mxu0 0
      %687 = vmatpush1.bf16.msra.mxu0 0
      %688 = vmatprep.subr.bf16.mxu0 0
      %689 = vmatpush1.bf16.msra.mxu0 0
      %690 = vmatprep.subr.bf16.mxu0 0
      %691 = vmatpush1.bf16.msra.mxu0 0
      %692 = vmatprep.subr.bf16.mxu0 0
      %693 = vmatpush1.bf16.msra.mxu0 0
      %694 = vmatprep.subr.bf16.mxu0 0
      %695 = vmatpush1.bf16.msra.mxu0 0
      %696 = vmatprep.subr.bf16.mxu0 0
      %697 = vmatpush1.bf16.msra.mxu0 0
      %698 = vmatprep.subr.bf16.mxu0 0
      %699 = vmatpush1.bf16.msra.mxu0 0
      %700 = vmatprep.subr.bf16.mxu0 0
      %701 = vmatpush1.bf16.msra.mxu0 0
      %702 = vmatprep.subr.bf16.mxu0 0
      %703 = vmatpush1.bf16.msra.mxu0 0
      %704 = vmatprep.mubr.bf16.mxu0 0
      %705 = vmatmul.mubr.bf16.gmra.mrb[0].mxu0 %v667
      %v706 = vpop.f32.mrb[0].mxu0
      %v707 = vadd.f32 0.0, %v706
      %v708 = vpop.f32.mrb[0].mxu0
      %v709 = vpop.f32.mrb[0].mxu0
      %v710 = vpop.f32.mrb[0].mxu0
      %711 = vdwg.mxu0
      %713 = vrot.lane.b32.xlu0 %v707, 8
      %v714 = vpop.permute.xlu0 %713
      %vm716 = vcmask 130112
      %717 = vst.msk [vmem:[#allocation2] sm:$0xff] %vm716, %v714
      %718 = vrot.lane.b32.xlu0 %v489, 112
      %v719 = vpop.permute.xlu0 %718
      %720 = vrot.lane.b32.xlu0 %v490, 112
      %v721 = vpop.permute.xlu0 %720
      %v723 = vsel %vm491, %v719, 0
      %v726 = vsel %vm491, %v721, 0
      %728 = vmatprep.subr.bf16.mxu0 0
      %729 = vmatpush1.bf16.xpose.msra.mxu0 %v726
      %730 = vmatprep.subr.bf16.mxu0 0
      %731 = vmatpush1.bf16.xpose.msra.mxu0 0
      %732 = vmatprep.subr.bf16.mxu0 0
      %733 = vmatpush1.bf16.xpose.msra.mxu0 0
      %734 = vmatprep.subr.bf16.mxu0 0
      %735 = vmatpush1.bf16.xpose.msra.mxu0 0
      %736 = vmatprep.subr.bf16.mxu0 0
      %737 = vmatpush1.bf16.xpose.msra.mxu0 0
      %738 = vmatprep.subr.bf16.mxu0 0
      %739 = vmatpush1.bf16.xpose.msra.mxu0 0
      %740 = vmatprep.subr.bf16.mxu0 0
      %741 = vmatpush1.bf16.xpose.msra.mxu0 0
      %742 = vmatprep.subr.bf16.mxu0 0
      %743 = vmatpush1.bf16.xpose.msra.mxu0 0
      %744 = vmatprep.subr.bf16.mxu0 0
      %745 = vmatpush1.bf16.xpose.msra.mxu0 0
      %746 = vmatprep.subr.bf16.mxu0 0
      %747 = vmatpush1.bf16.xpose.msra.mxu0 0
      %748 = vmatprep.subr.bf16.mxu0 0
      %749 = vmatpush1.bf16.xpose.msra.mxu0 0
      %750 = vmatprep.subr.bf16.mxu0 0
      %751 = vmatpush1.bf16.xpose.msra.mxu0 0
      %752 = vmatprep.subr.bf16.mxu0 0
      %753 = vmatpush1.bf16.xpose.msra.mxu0 0
      %754 = vmatprep.subr.bf16.mxu0 0
      %755 = vmatpush1.bf16.xpose.msra.mxu0 0
      %756 = vmatprep.subr.bf16.mxu0 0
      %757 = vmatpush1.bf16.xpose.msra.mxu0 0
      %758 = vmatprep.subr.bf16.mxu0 0
      %759 = vmatpush1.bf16.xpose.msra.mxu0 0
      %760 = vmatprep.mubr.bf16.mxu0 0
      %761 = vmatmul.mubr.bf16.gmra.mrb[0].mxu0 %v723
      %v762 = vpop.f32.mrb[0].mxu0
      %v763 = vadd.f32 %v357, %v762
      %v764 = vpop.f32.mrb[0].mxu0
      %v765 = vpop.f32.mrb[0].mxu0
      %v766 = vpop.f32.mrb[0].mxu0
      %767 = vdwg.mxu0
      %v768 = vsel %vm491, %v763, -inf
      %769 = vmax.xlane.f32.xlu0 %v768
      %v770 = vpop.xlane.xlu0 %769
      %v771 = vsub.f32 %v763, %v770
      %v772 = vmul.f32 %v771, 1.442695
      %v773 = vpow.pop %v772
      %v774 = vsel %vm491, %v773, 0.0
      %775 = vadd.xlane.f32.xlu0 %v774
      %v776 = vpop.xlane.xlu0 %775
      %v777 = vrcp.pop %v776
      %v778 = vmul.f32 %v773, %v777
      %v779 = vpack.c.bf16 %v778, %v778
      %780 = vrot.lane.b32.xlu0 %v490, 80
      %v781 = vpop.permute.xlu0 %780
      %v783 = vsel %vm491, %v779, 0
      %v786 = vsel %vm556, %v781, 0
      %788 = vmatprep.subr.bf16.mxu0 0
      %789 = vmatpush1.bf16.msra.mxu0 %v786
      %790 = vmatprep.subr.bf16.mxu0 0
      %791 = vmatpush1.bf16.msra.mxu0 0
      %792 = vmatprep.subr.bf16.mxu0 0
      %793 = vmatpush1.bf16.msra.mxu0 0
      %794 = vmatprep.subr.bf16.mxu0 0
      %795 = vmatpush1.bf16.msra.mxu0 0
      %796 = vmatprep.subr.bf16.mxu0 0
      %797 = vmatpush1.bf16.msra.mxu0 0
      %798 = vmatprep.subr.bf16.mxu0 0
      %799 = vmatpush1.bf16.msra.mxu0 0
      %800 = vmatprep.subr.bf16.mxu0 0
      %801 = vmatpush1.bf16.msra.mxu0 0
      %802 = vmatprep.subr.bf16.mxu0 0
      %803 = vmatpush1.bf16.msra.mxu0 0
      %804 = vmatprep.subr.bf16.mxu0 0
      %805 = vmatpush1.bf16.msra.mxu0 0
      %806 = vmatprep.subr.bf16.mxu0 0
      %807 = vmatpush1.bf16.msra.mxu0 0
      %808 = vmatprep.subr.bf16.mxu0 0
      %809 = vmatpush1.bf16.msra.mxu0 0
      %810 = vmatprep.subr.bf16.mxu0 0
      %811 = vmatpush1.bf16.msra.mxu0 0
      %812 = vmatprep.subr.bf16.mxu0 0
      %813 = vmatpush1.bf16.msra.mxu0 0
      %814 = vmatprep.subr.bf16.mxu0 0
      %815 = vmatpush1.bf16.msra.mxu0 0
      %816 = vmatprep.subr.bf16.mxu0 0
      %817 = vmatpush1.bf16.msra.mxu0 0
      %818 = vmatprep.subr.bf16.mxu0 0
      %819 = vmatpush1.bf16.msra.mxu0 0
      %820 = vmatprep.mubr.bf16.mxu0 0
      %821 = vmatmul.mubr.bf16.gmra.mrb[0].mxu0 %v783
      %v822 = vpop.f32.mrb[0].mxu0
      %v823 = vadd.f32 0.0, %v822
      %v824 = vpop.f32.mrb[0].mxu0
      %v825 = vpop.f32.mrb[0].mxu0
      %v826 = vpop.f32.mrb[0].mxu0
      %827 = vdwg.mxu0
      %829 = vrot.lane.b32.xlu0 %v823, 16
      %v830 = vpop.permute.xlu0 %829
      %vm832 = vcmask 195712
      %833 = vst.msk [vmem:[#allocation2] sm:$0xff] %vm832, %v830
      %834 = vrot.lane.b32.xlu0 %v489, 104
      %v835 = vpop.permute.xlu0 %834
      %836 = vrot.lane.b32.xlu0 %v490, 104
      %v837 = vpop.permute.xlu0 %836
      %v839 = vsel %vm491, %v835, 0
      %v842 = vsel %vm491, %v837, 0
      %844 = vmatprep.subr.bf16.mxu0 0
      %845 = vmatpush1.bf16.xpose.msra.mxu0 %v842
      %846 = vmatprep.subr.bf16.mxu0 0
      %847 = vmatpush1.bf16.xpose.msra.mxu0 0
      %848 = vmatprep.subr.bf16.mxu0 0
      %849 = vmatpush1.bf16.xpose.msra.mxu0 0
      %850 = vmatprep.subr.bf16.mxu0 0
      %851 = vmatpush1.bf16.xpose.msra.mxu0 0
      %852 = vmatprep.subr.bf16.mxu0 0
      %853 = vmatpush1.bf16.xpose.msra.mxu0 0
      %854 = vmatprep.subr.bf16.mxu0 0
      %855 = vmatpush1.bf16.xpose.msra.mxu0 0
      %856 = vmatprep.subr.bf16.mxu0 0
      %857 = vmatpush1.bf16.xpose.msra.mxu0 0
      %858 = vmatprep.subr.bf16.mxu0 0
      %859 = vmatpush1.bf16.xpose.msra.mxu0 0
      %860 = vmatprep.subr.bf16.mxu0 0
      %861 = vmatpush1.bf16.xpose.msra.mxu0 0
      %862 = vmatprep.subr.bf16.mxu0 0
      %863 = vmatpush1.bf16.xpose.msra.mxu0 0
      %864 = vmatprep.subr.bf16.mxu0 0
      %865 = vmatpush1.bf16.xpose.msra.mxu0 0
      %866 = vmatprep.subr.bf16.mxu0 0
      %867 = vmatpush1.bf16.xpose.msra.mxu0 0
      %868 = vmatprep.subr.bf16.mxu0 0
      %869 = vmatpush1.bf16.xpose.msra.mxu0 0
      %870 = vmatprep.subr.bf16.mxu0 0
      %871 = vmatpush1.bf16.xpose.msra.mxu0 0
      %872 = vmatprep.subr.bf16.mxu0 0
      %873 = vmatpush1.bf16.xpose.msra.mxu0 0
      %874 = vmatprep.subr.bf16.mxu0 0
      %875 = vmatpush1.bf16.xpose.msra.mxu0 0
      %876 = vmatprep.mubr.bf16.mxu0 0
      %877 = vmatmul.mubr.bf16.gmra.mrb[0].mxu0 %v839
      %v878 = vpop.f32.mrb[0].mxu0
      %v879 = vadd.f32 %v357, %v878
      %v880 = vpop.f32.mrb[0].mxu0
      %v881 = vpop.f32.mrb[0].mxu0
      %v882 = vpop.f32.mrb[0].mxu0
      %883 = vdwg.mxu0
      %v884 = vsel %vm491, %v879, -inf
      %885 = vmax.xlane.f32.xlu0 %v884
      %v886 = vpop.xlane.xlu0 %885
      %v887 = vsub.f32 %v879, %v886
      %v888 = vmul.f32 %v887, 1.442695
      %v889 = vpow.pop %v888
      %v890 = vsel %vm491, %v889, 0.0
      %891 = vadd.xlane.f32.xlu0 %v890
      %v892 = vpop.xlane.xlu0 %891
      %v893 = vrcp.pop %v892
      %v894 = vmul.f32 %v889, %v893
      %v895 = vpack.c.bf16 %v894, %v894
      %896 = vrot.lane.b32.xlu0 %v490, 72
      %v897 = vpop.permute.xlu0 %896
      %v899 = vsel %vm491, %v895, 0
      %v902 = vsel %vm556, %v897, 0
      %904 = vmatprep.subr.bf16.mxu0 0
      %905 = vmatpush1.bf16.msra.mxu0 %v902
      %906 = vmatprep.subr.bf16.mxu0 0
      %907 = vmatpush1.bf16.msra.mxu0 0
      %908 = vmatprep.subr.bf16.mxu0 0
      %909 = vmatpush1.bf16.msra.mxu0 0
      %910 = vmatprep.subr.bf16.mxu0 0
      %911 = vmatpush1.bf16.msra.mxu0 0
      %912 = vmatprep.subr.bf16.mxu0 0
      %913 = vmatpush1.bf16.msra.mxu0 0
      %914 = vmatprep.subr.bf16.mxu0 0
      %915 = vmatpush1.bf16.msra.mxu0 0
      %916 = vmatprep.subr.bf16.mxu0 0
      %917 = vmatpush1.bf16.msra.mxu0 0
      %918 = vmatprep.subr.bf16.mxu0 0
      %919 = vmatpush1.bf16.msra.mxu0 0
      %920 = vmatprep.subr.bf16.mxu0 0
      %921 = vmatpush1.bf16.msra.mxu0 0
      %922 = vmatprep.subr.bf16.mxu0 0
      %923 = vmatpush1.bf16.msra.mxu0 0
      %924 = vmatprep.subr.bf16.mxu0 0
      %925 = vmatpush1.bf16.msra.mxu0 0
      %926 = vmatprep.subr.bf16.mxu0 0
      %927 = vmatpush1.bf16.msra.mxu0 0
      %928 = vmatprep.subr.bf16.mxu0 0
      %929 = vmatpush1.bf16.msra.mxu0 0
      %930 = vmatprep.subr.bf16.mxu0 0
      %931 = vmatpush1.bf16.msra.mxu0 0
      %932 = vmatprep.subr.bf16.mxu0 0
      %933 = vmatpush1.bf16.msra.mxu0 0
      %934 = vmatprep.subr.bf16.mxu0 0
      %935 = vmatpush1.bf16.msra.mxu0 0
      %936 = vmatprep.mubr.bf16.mxu0 0
      %937 = vmatmul.mubr.bf16.gmra.mrb[0].mxu0 %v899
      %v938 = vpop.f32.mrb[0].mxu0
      %v939 = vadd.f32 0.0, %v938
      %v940 = vpop.f32.mrb[0].mxu0
      %v941 = vpop.f32.mrb[0].mxu0
      %v942 = vpop.f32.mrb[0].mxu0
      %943 = vdwg.mxu0
      %945 = vrot.lane.b32.xlu0 %v939, 24
      %v946 = vpop.permute.xlu0 %945
      %vm948 = vcmask 261312
      %949 = vst.msk [vmem:[#allocation2] sm:$0xff] %vm948, %v946
      %v950 = vld [vmem:[#allocation2] sm:$0xff]
      %v951 = vpack.c.bf16 %v950, %v950
      %v952 = vld [vmem:[%s6] sm:$0xf]
      %v953 = vld [vmem:[%s6 + $0x4] sm:$0xf]
      %v954 = vld [vmem:[%s6 + $0x8] sm:$0xf]
      %v955 = vld [vmem:[%s6 + $0xc] sm:$0xf]
      %v956 = vld [vmem:[%s7] sm:$0x1]
      %v958 = vlaneseq
      %v959 = vshrl.u32 %v958, 7
      %v960 = vsub.s32 0, %v959
      %v961 = vrot.slane %v956, %v960
      %v967 = vunpack.c.l.b16 %v952
      %v968 = vunpack.c.l.b16 %v953
      %v969 = vunpack.c.l.b16 %v954
      %v970 = vunpack.c.l.b16 %v955
      %v971 = vpack.c.b16 %v968, %v967
      %v972 = vpack.c.b16 %v970, %v969
      %v976 = vsel %vm381, %v951, 0
      %978 = vmatprep.subr.bf16.mxu0 0
      %979 = vmatpush1.bf16.msra.mxu0 %v971
      %980 = vmatprep.subr.bf16.mxu0 0
      %981 = vmatpush1.bf16.msra.mxu0 %v972
      %982 = vmatprep.subr.bf16.mxu0 0
      %983 = vmatpush1.bf16.msra.mxu0 0
      %984 = vmatprep.subr.bf16.mxu0 0
      %985 = vmatpush1.bf16.msra.mxu0 0
      %986 = vmatprep.subr.bf16.mxu0 0
      %987 = vmatpush1.bf16.msra.mxu0 0
      %988 = vmatprep.subr.bf16.mxu0 0
      %989 = vmatpush1.bf16.msra.mxu0 0
      %990 = vmatprep.subr.bf16.mxu0 0
      %991 = vmatpush1.bf16.msra.mxu0 0
      %992 = vmatprep.subr.bf16.mxu0 0
      %993 = vmatpush1.bf16.msra.mxu0 0
      %994 = vmatprep.subr.bf16.mxu0 0
      %995 = vmatpush1.bf16.msra.mxu0 0
      %996 = vmatprep.subr.bf16.mxu0 0
      %997 = vmatpush1.bf16.msra.mxu0 0
      %998 = vmatprep.subr.bf16.mxu0 0
      %999 = vmatpush1.bf16.msra.mxu0 0
      %1000 = vmatprep.subr.bf16.mxu0 0
      %1001 = vmatpush1.bf16.msra.mxu0 0
      %1002 = vmatprep.subr.bf16.mxu0 0
      %1003 = vmatpush1.bf16.msra.mxu0 0
      %1004 = vmatprep.subr.bf16.mxu0 0
      %1005 = vmatpush1.bf16.msra.mxu0 0
      %1006 = vmatprep.subr.bf16.mxu0 0
      %1007 = vmatpush1.bf16.msra.mxu0 0
      %1008 = vmatprep.subr.bf16.mxu0 0
      %1009 = vmatpush1.bf16.msra.mxu0 0
      %1010 = vmatprep.mubr.bf16.mxu0 0
      %1011 = vmatmul.mubr.bf16.gmra.mrb[0].mxu0 %v976
      %v1012 = vpop.f32.mrb[0].mxu0
      %v1013 = vadd.f32 %v961, %v1012
      %v1014 = vpop.f32.mrb[0].mxu0
      %v1015 = vpop.f32.mrb[0].mxu0
      %v1016 = vpop.f32.mrb[0].mxu0
      %1017 = vdwg.mxu0
      %v1018 = vunpack.c.l.bf16 %v356
      %v1019 = vadd.f32 %v1018, %v1013
      %v1020 = vsel %vm381, %v1019, 0.0
      %1021 = vadd.xlane.f32.xlu0 %v1020
      %v1022 = vpop.xlane.xlu0 %1021
      %v1023 = vrcp.pop 32.0
      %v1024 = vmul.f32 %v1022, %v1023
      %v1025 = vsub.f32 %v1019, %v1024
      %v1026 = vmul.f32 %v1025, %v1025
      %v1027 = vsel %vm381, %v1026, 0.0
      %1028 = vadd.xlane.f32.xlu0 %v1027
      %v1029 = vpop.xlane.xlu0 %1028
      %v1030 = vmul.f32 %v1029, %v1023
      %v1031 = vadd.f32 %v1030, 1e-05
      %v1032 = vrsqrt.pop %v1031
      %v1033 = vmul.f32 %v1025, %v1032
      %v1034 = vld [vmem:[%s8] sm:$0x1]
      %v1036 = vlaneseq
      %v1037 = vshrl.u32 %v1036, 7
      %v1038 = vsub.s32 0, %v1037
      %v1039 = vrot.slane %v1034, %v1038
      %v1041 = vmul.f32 %v1033, %v1039
      %v1042 = vld [vmem:[%s9] sm:$0x1]
      %v1044 = vlaneseq
      %v1045 = vshrl.u32 %v1044, 7
      %v1046 = vsub.s32 0, %v1045
      %v1047 = vrot.slane %v1042, %v1046
      %v1049 = vadd.f32 %v1041, %v1047
      %v1050 = vpack.c.bf16 %v1049, %v1049
      %vm1051 = vcmask 257024
      %1052 = vst.msk [vmem:[%s354] sm:$0xf] %vm1051, %v1050
      %p1053 = scmp.lt.s32.totalorder %s21, 1
      %s1054 = scalar_select %p1053, %s21, 1
      %s1055 = smul.addr %s1054, 4
      %s1056 = scalar_lea.vmem %s10, %s1055
      // Predicated region
      $region61: #{gsum_decoder_forward.12} parent=59 // pred_check
        %p1057 = pneg %p254
      $region62: #{gsum_decoder_forward.12} parent=59 // pred_check_branch
        %1059 = sbr.rel (%p1057) target = $region64
      $region63: #{gsum_decoder_forward.12} parent=59 // pred_region
        _
      $region64: #{gsum_decoder_forward.12} parent=59 // pred_fallthru
        _
    $region60: #{gsum_decoder_forward.12} parent=5 // pred_fallthru
      _
    %p1060 = scmp.le.s32.totalorder 2, %s16
    // Predicated region
    $region65: #{gsum_decoder_forward.12} parent=5 // pred_check
      %p1061 = pneg %p1060
    $region66: #{gsum_decoder_forward.12} parent=5 // pred_check_branch
      %1063 = sbr.rel (%p1061) target = $region68
    $region67: #{gsum_decoder_forward.12} parent=5 // pred_region
      %s1064 = ssub.s32 %s16, 2
      // Predicated region
      $region69: #{gsum_decoder_forward.12} parent=67 // pred_check
        %p1065 = pneg %p260
      $region70: #{gsum_decoder_forward.12} parent=67 // pred_check_branch
        %1067 = sbr.rel (%p1065) target = $region72
      $region71: #{gsum_decoder_forward.12} parent=67 // pred_region
        %p1068 = scmp.lt.s32.totalorder %s22, 1
        %s1069 = scalar_select %p1068, %s22, 1
        %s1070 = smul.addr %s1069, 4
        %s1071 = scalar_lea.vmem %s10, %s1070
      $region72: #{gsum_decoder_forward.12} parent=67 // pred_fallthru
        _
    $region68: #{gsum_decoder_forward.12} parent=5 // pred_fallthru
      _
  $region6: #{gsum_decoder_forward.12} parent=0 // loop_footer
    %s20 = sadd.s32 1, %s16
  $region7: #{gsum_decoder_forward.12} parent=0 // loop_footer_branch
    %15 = sbr.rel target = $region3
  $region8: #{gsum_decoder_forward.12} parent=0 // loop_exit
    _

// kernel: gsum_decoder_forward.15
$region0: #{gsum_decoder_forward.15}
  #allocation0 [shape = 'u32[]', space=smem, size = 0x4, offset = 0x4, fixed_abs, tag = 'smem constant byte address 0x4 - core index']
  #allocation1 [shape = 'u32[144,128]{1,0:T(1,128)}', space=vmem, size = 0x12000, scoped, tag = 'internal scratch']
  %s0 = inlined_call_operand.vmem [shape: bf16[16,32], index: 0, kind: input, shape index: {}]
  %s1 = inlined_call_operand.vmem [shape: bf16[32,64], index: 1, kind: input, shape index: {}]
  %s2 = inlined_call_operand.vmem [shape: f32[1,64], index: 2, kind: input, shape index: {}]
  %s3 = inlined_call_operand.vmem [shape: bf16[64,32], index: 3, kind: input, shape index: {}]
  %s4 = inlined_call_operand.vmem [shape: f32[1,32], index: 4, kind: input, shape index: {}]
  %s5 = inlined_call_operand.vmem [shape: f32[1,32], index: 5, kind: input, shape index: {}]
  %s6 = inlined_call_operand.vmem [shape: f32[1,32], index: 6, kind: input, shape index: {}]
  %s7 = inlined_call_operand.vmem [shape: bf16[16,32], index: 7, kind: output, shape index: {}]
  %s8 = sld [smem:[#allocation0]]
  $region38: #{gsum_decoder_forward.15} parent=0
    _
  %s10 = ssub.s32 1, %s8
  %s11 = scalar_select 0, %s10, %s8
  // Predicated region
  $region2: #{gsum_decoder_forward.15} parent=0 // pred_check
    _
  $region3: #{gsum_decoder_forward.15} parent=0 // pred_check_branch
    %13 = sbr.rel (0) target = $region5
  $region4: #{gsum_decoder_forward.15} parent=0 // pred_region
    _
  $region5: #{gsum_decoder_forward.15} parent=0 // pred_fallthru
    _
  // Predicated region
  $region6: #{gsum_decoder_forward.15} parent=0 // pred_check
    _
  $region7: #{gsum_decoder_forward.15} parent=0 // pred_check_branch
    %15 = sbr.rel (0) target = $region9
  $region8: #{gsum_decoder_forward.15} parent=0 // pred_region
    _
  $region9: #{gsum_decoder_forward.15} parent=0 // pred_fallthru
    _
  // Predicated region
  $region10: #{gsum_decoder_forward.15} parent=0 // pred_check
    _
  $region11: #{gsum_decoder_forward.15} parent=0 // pred_check_branch
    %17 = sbr.rel (0) target = $region13
  $region12: #{gsum_decoder_forward.15} parent=0 // pred_region
    _
  $region13: #{gsum_decoder_forward.15} parent=0 // pred_fallthru
    _
  // Predicated region
  $region14: #{gsum_decoder_forward.15} parent=0 // pred_check
    _
  $region15: #{gsum_decoder_forward.15} parent=0 // pred_check_branch
    %19 = sbr.rel (0) target = $region17
  $region16: #{gsum_decoder_forward.15} parent=0 // pred_region
    _
  $region17: #{gsum_decoder_forward.15} parent=0 // pred_fallthru
    _
  // Predicated region
  $region18: #{gsum_decoder_forward.15} parent=0 // pred_check
    _
  $region19: #{gsum_decoder_forward.15} parent=0 // pred_check_branch
    %21 = sbr.rel (0) target = $region21
  $region20: #{gsum_decoder_forward.15} parent=0 // pred_region
    _
  $region21: #{gsum_decoder_forward.15} parent=0 // pred_fallthru
    _
  // Predicated region
  $region22: #{gsum_decoder_forward.15} parent=0 // pred_check
    _
  $region23: #{gsum_decoder_forward.15} parent=0 // pred_check_branch
    %23 = sbr.rel (0) target = $region25
  $region24: #{gsum_decoder_forward.15} parent=0 // pred_region
    _
  $region25: #{gsum_decoder_forward.15} parent=0 // pred_fallthru
    _
  // Predicated region
  $region26: #{gsum_decoder_forward.15} parent=0 // pred_check
    _
  $region27: #{gsum_decoder_forward.15} parent=0 // pred_check_branch
    %25 = sbr.rel (0) target = $region29
  $region28: #{gsum_decoder_forward.15} parent=0 // pred_region
    _
  $region29: #{gsum_decoder_forward.15} parent=0 // pred_fallthru
    _
  %v27 = vld [vmem:[%s0] sm:$0xf]
  %v28 = vld [vmem:[%s0 + $0x4] sm:$0xf]
  %v29 = vld [vmem:[%s1] sm:$0xf]
  %v30 = vld [vmem:[%s1 + $0x4] sm:$0xf]
  %v31 = vld [vmem:[%s1 + $0x8] sm:$0xf]
  %v32 = vld [vmem:[%s1 + $0xc] sm:$0xf]
  %v33 = vld [vmem:[%s2] sm:$0x1]
  %v35 = vlaneseq
  %v36 = vshrl.u32 %v35, 7
  %v37 = vsub.s32 0, %v36
  %v38 = vrot.slane %v33, %v37
  %v42 = vunpack.c.l.b16 %v27
  %v43 = vunpack.c.l.b16 %v28
  %v44 = vpack.c.b16 %v43, %v42
  %v49 = vunpack.c.l.b16 %v29
  %v50 = vunpack.c.l.b16 %v30
  %v51 = vunpack.c.l.b16 %v31
  %v52 = vunpack.c.l.b16 %v32
  %v53 = vpack.c.b16 %v50, %v49
  %v54 = vpack.c.b16 %v52, %v51
  %vm57 = vcmask 261120
  %v59 = vsel %vm57, %v44, 0
  %61 = vmatprep.subr.bf16.mxu0 0
  %62 = vmatpush1.bf16.msra.mxu0 %v53
  %63 = vmatprep.subr.bf16.mxu0 0
  %64 = vmatpush1.bf16.msra.mxu0 %v54
  %65 = vmatprep.subr.bf16.mxu0 0
  %66 = vmatpush1.bf16.msra.mxu0 0
  %67 = vmatprep.subr.bf16.mxu0 0
  %68 = vmatpush1.bf16.msra.mxu0 0
  %69 = vmatprep.subr.bf16.mxu0 0
  %70 = vmatpush1.bf16.msra.mxu0 0
  %71 = vmatprep.subr.bf16.mxu0 0
  %72 = vmatpush1.bf16.msra.mxu0 0
  %73 = vmatprep.subr.bf16.mxu0 0
  %74 = vmatpush1.bf16.msra.mxu0 0
  %75 = vmatprep.subr.bf16.mxu0 0
  %76 = vmatpush1.bf16.msra.mxu0 0
  %77 = vmatprep.subr.bf16.mxu0 0
  %78 = vmatpush1.bf16.msra.mxu0 0
  %79 = vmatprep.subr.bf16.mxu0 0
  %80 = vmatpush1.bf16.msra.mxu0 0
  %81 = vmatprep.subr.bf16.mxu0 0
  %82 = vmatpush1.bf16.msra.mxu0 0
  %83 = vmatprep.subr.bf16.mxu0 0
  %84 = vmatpush1.bf16.msra.mxu0 0
  %85 = vmatprep.subr.bf16.mxu0 0
  %86 = vmatpush1.bf16.msra.mxu0 0
  %87 = vmatprep.subr.bf16.mxu0 0
  %88 = vmatpush1.bf16.msra.mxu0 0
  %89 = vmatprep.subr.bf16.mxu0 0
  %90 = vmatpush1.bf16.msra.mxu0 0
  %91 = vmatprep.subr.bf16.mxu0 0
  %92 = vmatpush1.bf16.msra.mxu0 0
  %93 = vmatprep.mubr.bf16.mxu0 0
  %94 = vmatmul.mubr.bf16.gmra.mrb[0].mxu0 %v59
  %v95 = vpop.f32.mrb[0].mxu0
  %v96 = vadd.f32 %v38, %v95
  %v97 = vpop.f32.mrb[0].mxu0
  %v98 = vpop.f32.mrb[0].mxu0
  %v99 = vadd.f32 %v38, %v98
  %v100 = vpop.f32.mrb[0].mxu0
  %101 = vdwg.mxu0
  %v102 = vmax.f32 %v96, 0.0
  %v103 = vmax.f32 %v99, 0.0
  %v104 = vpack.c.bf16 %v103, %v102
  %v105 = vld [vmem:[%s3] sm:$0xf]
  %v106 = vld [vmem:[%s3 + $0x4] sm:$0xf]
  %v107 = vld [vmem:[%s3 + $0x8] sm:$0xf]
  %v108 = vld [vmem:[%s3 + $0xc] sm:$0xf]
  %v109 = vld [vmem:[%s3 + $0x10] sm:$0xf]
  %v110 = vld [vmem:[%s3 + $0x14] sm:$0xf]
  %v111 = vld [vmem:[%s3 + $0x18] sm:$0xf]
  %v112 = vld [vmem:[%s3 + $0x1c] sm:$0xf]
  %v113 = vld [vmem:[%s4] sm:$0x1]
  %v115 = vlaneseq
  %v116 = vshrl.u32 %v115, 7
  %v117 = vsub.s32 0, %v116
  %v118 = vrot.slane %v113, %v117
  %v128 = vunpack.c.l.b16 %v105
  %v129 = vunpack.c.l.b16 %v106
  %v130 = vunpack.c.l.b16 %v107
  %v131 = vunpack.c.l.b16 %v108
  %v132 = vunpack.c.l.b16 %v109
  %v133 = vunpack.c.l.b16 %v110
  %v134 = vunpack.c.l.b16 %v111
  %v135 = vunpack.c.l.b16 %v112
  %v136 = vpack.c.b16 %v129, %v128
  %v137 = vpack.c.b16 %v131, %v130
  %v138 = vpack.c.b16 %v133, %v132
  %v139 = vpack.c.b16 %v135, %v134
  %vm144 = vcmask 523264
  %v146 = vsel %vm144, %v104, 0
  %148 = vmatprep.subr.bf16.mxu0 0
  %149 = vmatpush1.bf16.msra.mxu0 %v136
  %150 = vmatprep.subr.bf16.mxu0 0
  %151 = vmatpush1.bf16.msra.mxu0 %v137
  %152 = vmatprep.subr.bf16.mxu0 0
  %153 = vmatpush1.bf16.msra.mxu0 %v138
  %154 = vmatprep.subr.bf16.mxu0 0
  %155 = vmatpush1.bf16.msra.mxu0 %v139
  %156 = vmatprep.subr.bf16.mxu0 0
  %157 = vmatpush1.bf16.msra.mxu0 0
  %158 = vmatprep.subr.bf16.mxu0 0
  %159 = vmatpush1.bf16.msra.mxu0 0
  %160 = vmatprep.subr.bf16.mxu0 0
  %161 = vmatpush1.bf16.msra.mxu0 0
  %162 = vmatprep.subr.bf16.mxu0 0
  %163 = vmatpush1.bf16.msra.mxu0 0
  %164 = vmatprep.subr.bf16.mxu0 0
  %165 = vmatpush1.bf16.msra.mxu0 0
  %166 = vmatprep.subr.bf16.mxu0 0
  %167 = vmatpush1.bf16.msra.mxu0 0
  %168 = vmatprep.subr.bf16.mxu0 0
  %169 = vmatpush1.bf16.msra.mxu0 0
  %170 = vmatprep.subr.bf16.mxu0 0
  %171 = vmatpush1.bf16.msra.mxu0 0
  %172 = vmatprep.subr.bf16.mxu0 0
  %173 = vmatpush1.bf16.msra.mxu0 0
  %174 = vmatprep.subr.bf16.mxu0 0
  %175 = vmatpush1.bf16.msra.mxu0 0
  %176 = vmatprep.subr.bf16.mxu0 0
  %177 = vmatpush1.bf16.msra.mxu0 0
  %178 = vmatprep.subr.bf16.mxu0 0
  %179 = vmatpush1.bf16.msra.mxu0 0
  %180 = vmatprep.mubr.bf16.mxu0 0
  %181 = vmatmul.mubr.bf16.gmra.mrb[0].mxu0 %v146
  %v182 = vpop.f32.mrb[0].mxu0
  %v183 = vadd.f32 %v118, %v182
  %v184 = vpop.f32.mrb[0].mxu0
  %v185 = vpop.f32.mrb[0].mxu0
  %v186 = vadd.f32 %v118, %v185
  %v187 = vpop.f32.mrb[0].mxu0
  %188 = vdwg.mxu0
  %v189 = vunpack.c.l.bf16 %v27
  %v190 = vunpack.c.l.bf16 %v28
  %v191 = vadd.f32 %v189, %v183
  %v192 = vadd.f32 %v190, %v186
  %v193 = vsel %vm57, %v191, 0.0
  %194 = vadd.xlane.f32.xlu0 %v193
  %v195 = vpop.xlane.xlu0 %194
  %v196 = vsel %vm57, %v192, 0.0
  %197 = vadd.xlane.f32.xlu0 %v196
  %v198 = vpop.xlane.xlu0 %197
  %v199 = vrcp.pop 32.0
  %v200 = vmul.f32 %v195, %v199
  %v201 = vmul.f32 %v198, %v199
  %v202 = vsub.f32 %v191, %v200
  %v203 = vsub.f32 %v192, %v201
  %v204 = vmul.f32 %v202, %v202
  %v205 = vmul.f32 %v203, %v203
  %v206 = vsel %vm57, %v204, 0.0
  %207 = vadd.xlane.f32.xlu0 %v206
  %v208 = vpop.xlane.xlu0 %207
  %v209 = vsel %vm57, %v205, 0.0
  %210 = vadd.xlane.f32.xlu0 %v209
  %v211 = vpop.xlane.xlu0 %210
  %v212 = vmul.f32 %v208, %v199
  %v213 = vmul.f32 %v211, %v199
  %v214 = vadd.f32 %v212, 1e-05
  %v215 = vadd.f32 %v213, 1e-05
  %v216 = vrsqrt.pop %v214
  %v217 = vrsqrt.pop %v215
  %v218 = vmul.f32 %v202, %v216
  %v219 = vmul.f32 %v203, %v217
  %v220 = vld [vmem:[%s5] sm:$0x1]
  %v222 = vlaneseq
  %v223 = vshrl.u32 %v222, 7
  %v224 = vsub.s32 0, %v223
  %v225 = vrot.slane %v220, %v224
  %v227 = vmul.f32 %v218, %v225
  %v228 = vmul.f32 %v219, %v225
  %v229 = vld [vmem:[%s6] sm:$0x1]
  %v231 = vlaneseq
  %v232 = vshrl.u32 %v231, 7
  %v233 = vsub.s32 0, %v232
  %v234 = vrot.slane %v229, %v233
  %v236 = vadd.f32 %v227, %v234
  %v237 = vadd.f32 %v228, %v234
  %v238 = vpack.c.bf16 %v237, %v236
  %v240 = vunpack.c.l.b16 %v238
  %v241 = vunpack.c.h.b16 %v238
  %v242 = vpack.c.b16 %v240, %v240
  %v243 = vpack.c.b16 %v241, %v241
  %vm246 = vcmask 257024
  %247 = vst.msk [vmem:[%s7] sm:$0xf] %vm246, %v242
  %248 = vst.msk [vmem:[%s7 + $0x4] sm:$0xf] %vm246, %v243
  // Predicated region
  $region30: #{gsum_decoder_forward.15} parent=0 // pred_check
    _
  $region31: #{gsum_decoder_forward.15} parent=0 // pred_check_branch
    %250 = sbr.rel (0) target = $region33
  $region32: #{gsum_decoder_forward.15} parent=0 // pred_region
    _
  $region33: #{gsum_decoder_forward.15} parent=0 // pred_fallthru
    _
  // Predicated region
  $region34: #{gsum_decoder_forward.15} parent=0 // pred_check
    _
  $region35: #{gsum_decoder_forward.15} parent=0 // pred_check_branch
    %252 = sbr.rel (0) target = $region37
  $region36: #{gsum_decoder_forward.15} parent=0 // pred_region
    _
  $region37: #{gsum_decoder_forward.15} parent=0 // pred_fallthru
    _

// kernel: gsum_decoder_forward.14
$region0: #{gsum_decoder_forward.14}
  #allocation0 [shape = 'u32[]', space=smem, size = 0x4, offset = 0x4, fixed_abs, tag = 'smem constant byte address 0x4 - core index']
  #allocation1 [shape = 'u32[144,128]{1,0:T(1,128)}', space=vmem, size = 0x12000, scoped, tag = 'internal scratch']
  #allocation2 [shape = 'f32[8,32]{1,0:T(8,128)}', space=vmem, size = 0x1000, scoped, tag = 'scratch operand']
  %s0 = inlined_call_operand.vmem [shape: bf16[2,8,32], index: 0, kind: input, shape index: {}]
  %s1 = inlined_call_operand.vmem [shape: bf16[2,8,64], index: 1, kind: input, shape index: {}]
  %s2 = inlined_call_operand.vmem [shape: f32[2,1,8], index: 2, kind: input, shape index: {}]
  %s3 = inlined_call_operand.vmem [shape: bf16[32,32], index: 3, kind: input, shape index: {}]
  %s4 = inlined_call_operand.vmem [shape: f32[1,32], index: 4, kind: input, shape index: {}]
  %s5 = inlined_call_operand.vmem [shape: bf16[32,32], index: 5, kind: input, shape index: {}]
  %s6 = inlined_call_operand.vmem [shape: f32[1,32], index: 6, kind: input, shape index: {}]
  %s7 = inlined_call_operand.vmem [shape: f32[1,32], index: 7, kind: input, shape index: {}]
  %s8 = inlined_call_operand.vmem [shape: f32[1,32], index: 8, kind: input, shape index: {}]
  %s9 = inlined_call_operand.vmem [shape: bf16[2,8,32], index: 9, kind: output, shape index: {}]
  %s10 = sld [smem:[#allocation0]]
  $region69: #{gsum_decoder_forward.14} parent=0
    _
  %s12 = ssub.s32 1, %s10
  %s13 = scalar_select 0, %s12, %s10
  loop: start=0, step=1, limit=4
  $region2: #{gsum_decoder_forward.14} parent=0 // loop_pre_header
    _
  $region3: #{gsum_decoder_forward.14} parent=0 // loop_header
    %s15 = sphi 0, %s19
    %p16 = scmp.ge.s32.totalorder %s15, 4
    %s25 = sphi 0, %s27
    %s28 = sphi 0, %s25
    %s29 = sphi 0, %s28
    %s45 = sphi 0, %s29
    %s51 = sphi 0, %s53
    %s54 = sphi 0, %s51
    %s55 = sphi 0, %s54
    %s71 = sphi 0, %s55
    %s77 = sphi 0, %s79
    %s80 = sphi 0, %s77
    %s81 = sphi 0, %s80
    %s97 = sphi 0, %s81
    %s101 = sphi 0, %s101
    %s103 = sphi 0, %s101
    %s104 = sphi 0, %s103
    %s118 = sphi 0, %s104
    %s122 = sphi 0, %s122
    %s124 = sphi 0, %s122
    %s125 = sphi 0, %s124
    %s139 = sphi 0, %s125
    %s143 = sphi 0, %s143
    %s145 = sphi 0, %s143
    %s146 = sphi 0, %s145
    %s160 = sphi 0, %s146
    %s164 = sphi 0, %s164
    %s166 = sphi 0, %s164
    %s167 = sphi 0, %s166
    %s181 = sphi 0, %s167
    %s185 = sphi 0, %s185
    %s187 = sphi 0, %s185
    %s188 = sphi 0, %s187
    %s202 = sphi 0, %s188
    %s206 = sphi 0, %s206
    %s208 = sphi 0, %s206
    %s209 = sphi 0, %s208
    %s223 = sphi 0, %s209
    %s229 = sphi 0, %s231
    %s232 = sphi 0, %s229
    %s233 = sphi 0, %s232
    %s249 = sphi 0, %s233
  $region4: #{gsum_decoder_forward.14} parent=0 // loop_header_branch
    %18 = sbr.rel (%p16) target = $region8
  $region5: #{gsum_decoder_forward.14} parent=0 // loop_body
    %s20 = ssub.s32 %s15, 1
    %s21 = ssub.s32 %s15, 2
    %s22 = sadd.s32 %s15, 1
    %s23 = ssub.s32 %s15, %s22
    %p24 = scmp.eq.s32.totalorder %s23, 0
    %s26 = sadd.s32 %s25, 1
    %s27 = scalar_select %p24, %s25, %s26
    %p30 = pneg %p24
    %p31 = scmp.eq.s32.totalorder %s15, 1
    %p32 = por %p30, %p31
    %p33 = scmp.ne.s32.totalorder %s25, %s28
    %p34 = scmp.eq.s32.totalorder %s15, 0
    %p35 = por %p33, %p34
    %p36 = scmp.ne.s32.totalorder %s25, %s28
    %p37 = scmp.eq.s32.totalorder %s20, 1
    %p38 = por %p36, %p37
    %p39 = scmp.ne.s32.totalorder %s28, %s29
    %p40 = scmp.eq.s32.totalorder %s20, 0
    %p41 = por %p39, %p40
    %p42 = scmp.ne.s32.totalorder %s28, %s29
    %p43 = scmp.eq.s32.totalorder %s21, 1
    %p44 = por %p42, %p43
    %p46 = scmp.ne.s32.totalorder %s29, %s45
    %p47 = scmp.eq.s32.totalorder %s21, 0
    %p48 = por %p46, %p47
    %s49 = ssub.s32 %s15, %s22
    %p50 = scmp.eq.s32.totalorder %s49, 0
    %s52 = sadd.s32 %s51, 1
    %s53 = scalar_select %p50, %s51, %s52
    %p56 = pneg %p50
    %p57 = scmp.eq.s32.totalorder %s15, 1
    %p58 = por %p56, %p57
    %p59 = scmp.ne.s32.totalorder %s51, %s54
    %p60 = scmp.eq.s32.totalorder %s15, 0
    %p61 = por %p59, %p60
    %p62 = scmp.ne.s32.totalorder %s51, %s54
    %p63 = scmp.eq.s32.totalorder %s20, 1
    %p64 = por %p62, %p63
    %p65 = scmp.ne.s32.totalorder %s54, %s55
    %p66 = scmp.eq.s32.totalorder %s20, 0
    %p67 = por %p65, %p66
    %p68 = scmp.ne.s32.totalorder %s54, %s55
    %p69 = scmp.eq.s32.totalorder %s21, 1
    %p70 = por %p68, %p69
    %p72 = scmp.ne.s32.totalorder %s55, %s71
    %p73 = scmp.eq.s32.totalorder %s21, 0
    %p74 = por %p72, %p73
    %s75 = ssub.s32 %s15, %s22
    %p76 = scmp.eq.s32.totalorder %s75, 0
    %s78 = sadd.s32 %s77, 1
    %s79 = scalar_select %p76, %s77, %s78
    %p82 = pneg %p76
    %p83 = scmp.eq.s32.totalorder %s15, 1
    %p84 = por %p82, %p83
    %p85 = scmp.ne.s32.totalorder %s77, %s80
    %p86 = scmp.eq.s32.totalorder %s15, 0
    %p87 = por %p85, %p86
    %p88 = scmp.ne.s32.totalorder %s77, %s80
    %p89 = scmp.eq.s32.totalorder %s20, 1
    %p90 = por %p88, %p89
    %p91 = scmp.ne.s32.totalorder %s80, %s81
    %p92 = scmp.eq.s32.totalorder %s20, 0
    %p93 = por %p91, %p92
    %p94 = scmp.ne.s32.totalorder %s80, %s81
    %p95 = scmp.eq.s32.totalorder %s21, 1
    %p96 = por %p94, %p95
    %p98 = scmp.ne.s32.totalorder %s81, %s97
    %p99 = scmp.eq.s32.totalorder %s21, 0
    %p100 = por %p98, %p99
    %s102 = sadd.s32 %s101, 1
    %p105 = scmp.eq.s32.totalorder %s15, 1
    %p106 = scmp.ne.s32.totalorder %s101, %s103
    %p107 = scmp.eq.s32.totalorder %s15, 0
    %p108 = por %p106, %p107
    %p109 = scmp.ne.s32.totalorder %s101, %s103
    %p110 = scmp.eq.s32.totalorder %s20, 1
    %p111 = por %p109, %p110
    %p112 = scmp.ne.s32.totalorder %s103, %s104
    %p113 = scmp.eq.s32.totalorder %s20, 0
    %p114 = por %p112, %p113
    %p115 = scmp.ne.s32.totalorder %s103, %s104
    %p116 = scmp.eq.s32.totalorder %s21, 1
    %p117 = por %p115, %p116
    %p119 = scmp.ne.s32.totalorder %s104, %s118
    %p120 = scmp.eq.s32.totalorder %s21, 0
    %p121 = por %p119, %p120
    %s123 = sadd.s32 %s122, 1
    %p126 = scmp.eq.s32.totalorder %s15, 1
    %p127 = scmp.ne.s32.totalorder %s122, %s124
    %p128 = scmp.eq.s32.totalorder %s15, 0
    %p129 = por %p127, %p128
    %p130 = scmp.ne.s32.totalorder %s122, %s124
    %p131 = scmp.eq.s32.totalorder %s20, 1
    %p132 = por %p130, %p131
    %p133 = scmp.ne.s32.totalorder %s124, %s125
    %p134 = scmp.eq.s32.totalorder %s20, 0
    %p135 = por %p133, %p134
    %p136 = scmp.ne.s32.totalorder %s124, %s125
    %p137 = scmp.eq.s32.totalorder %s21, 1
    %p138 = por %p136, %p137
    %p140 = scmp.ne.s32.totalorder %s125, %s139
    %p141 = scmp.eq.s32.totalorder %s21, 0
    %p142 = por %p140, %p141
    %s144 = sadd.s32 %s143, 1
    %p147 = scmp.eq.s32.totalorder %s15, 1
    %p148 = scmp.ne.s32.totalorder %s143, %s145
    %p149 = scmp.eq.s32.totalorder %s15, 0
    %p150 = por %p148, %p149
    %p151 = scmp.ne.s32.totalorder %s143, %s145
    %p152 = scmp.eq.s32.totalorder %s20, 1
    %p153 = por %p151, %p152
    %p154 = scmp.ne.s32.totalorder %s145, %s146
    %p155 = scmp.eq.s32.totalorder %s20, 0
    %p156 = por %p154, %p155
    %p157 = scmp.ne.s32.totalorder %s145, %s146
    %p158 = scmp.eq.s32.totalorder %s21, 1
    %p159 = por %p157, %p158
    %p161 = scmp.ne.s32.totalorder %s146, %s160
    %p162 = scmp.eq.s32.totalorder %s21, 0
    %p163 = por %p161, %p162
    %s165 = sadd.s32 %s164, 1
    %p168 = scmp.eq.s32.totalorder %s15, 1
    %p169 = scmp.ne.s32.totalorder %s164, %s166
    %p170 = scmp.eq.s32.totalorder %s15, 0
    %p171 = por %p169, %p170
    %p172 = scmp.ne.s32.totalorder %s164, %s166
    %p173 = scmp.eq.s32.totalorder %s20, 1
    %p174 = por %p172, %p173
    %p175 = scmp.ne.s32.totalorder %s166, %s167
    %p176 = scmp.eq.s32.totalorder %s20, 0
    %p177 = por %p175, %p176
    %p178 = scmp.ne.s32.totalorder %s166, %s167
    %p179 = scmp.eq.s32.totalorder %s21, 1
    %p180 = por %p178, %p179
    %p182 = scmp.ne.s32.totalorder %s167, %s181
    %p183 = scmp.eq.s32.totalorder %s21, 0
    %p184 = por %p182, %p183
    %s186 = sadd.s32 %s185, 1
    %p189 = scmp.eq.s32.totalorder %s15, 1
    %p190 = scmp.ne.s32.totalorder %s185, %s187
    %p191 = scmp.eq.s32.totalorder %s15, 0
    %p192 = por %p190, %p191
    %p193 = scmp.ne.s32.totalorder %s185, %s187
    %p194 = scmp.eq.s32.totalorder %s20, 1
    %p195 = por %p193, %p194
    %p196 = scmp.ne.s32.totalorder %s187, %s188
    %p197 = scmp.eq.s32.totalorder %s20, 0
    %p198 = por %p196, %p197
    %p199 = scmp.ne.s32.totalorder %s187, %s188
    %p200 = scmp.eq.s32.totalorder %s21, 1
    %p201 = por %p199, %p200
    %p203 = scmp.ne.s32.totalorder %s188, %s202
    %p204 = scmp.eq.s32.totalorder %s21, 0
    %p205 = por %p203, %p204
    %s207 = sadd.s32 %s206, 1
    %p210 = scmp.eq.s32.totalorder %s15, 1
    %p211 = scmp.ne.s32.totalorder %s206, %s208
    %p212 = scmp.eq.s32.totalorder %s15, 0
    %p213 = por %p211, %p212
    %p214 = scmp.ne.s32.totalorder %s206, %s208
    %p215 = scmp.eq.s32.totalorder %s20, 1
    %p216 = por %p214, %p215
    %p217 = scmp.ne.s32.totalorder %s208, %s209
    %p218 = scmp.eq.s32.totalorder %s20, 0
    %p219 = por %p217, %p218
    %p220 = scmp.ne.s32.totalorder %s208, %s209
    %p221 = scmp.eq.s32.totalorder %s21, 1
    %p222 = por %p220, %p221
    %p224 = scmp.ne.s32.totalorder %s209, %s223
    %p225 = scmp.eq.s32.totalorder %s21, 0
    %p226 = por %p224, %p225
    %s227 = ssub.s32 %s15, %s22
    %p228 = scmp.eq.s32.totalorder %s227, 0
    %s230 = sadd.s32 %s229, 1
    %s231 = scalar_select %p228, %s229, %s230
    %p234 = pneg %p228
    %p235 = scmp.eq.s32.totalorder %s15, 1
    %p236 = por %p234, %p235
    %p237 = scmp.ne.s32.totalorder %s229, %s232
    %p238 = scmp.eq.s32.totalorder %s15, 0
    %p239 = por %p237, %p238
    %p240 = scmp.ne.s32.totalorder %s229, %s232
    %p241 = scmp.eq.s32.totalorder %s20, 1
    %p242 = por %p240, %p241
    %p243 = scmp.ne.s32.totalorder %s232, %s233
    %p244 = scmp.eq.s32.totalorder %s20, 0
    %p245 = por %p243, %p244
    %p246 = scmp.ne.s32.totalorder %s232, %s233
    %p247 = scmp.eq.s32.totalorder %s21, 1
    %p248 = por %p246, %p247
    %p250 = scmp.ne.s32.totalorder %s233, %s249
    %p251 = scmp.eq.s32.totalorder %s21, 0
    %p252 = por %p250, %p251
    %p253 = scmp.le.s32.totalorder 1, %s15
    %p254 = scmp.lt.s32.totalorder %s15, 3
    %p255 = pnand %p253, %p254
    %p256 = pneg %p255
    // Predicated region
    $region9: #{gsum_decoder_forward.14} parent=5 // pred_check
      _
    $region10: #{gsum_decoder_forward.14} parent=5 // pred_check_branch
      %258 = sbr.rel (%p255) target = $region12
    $region11: #{gsum_decoder_forward.14} parent=5 // pred_region
      %s259 = ssub.s32 %s15, 1
      // Predicated region
      $region13: #{gsum_decoder_forward.14} parent=11 // pred_check
        %p260 = pneg %p114
      $region14: #{gsum_decoder_forward.14} parent=11 // pred_check_branch
        %262 = sbr.rel (%p260) target = $region16
      $region15: #{gsum_decoder_forward.14} parent=11 // pred_region
        _
      $region16: #{gsum_decoder_forward.14} parent=11 // pred_fallthru
        _
      // Predicated region
      $region17: #{gsum_decoder_forward.14} parent=11 // pred_check
        %p263 = pneg %p135
      $region18: #{gsum_decoder_forward.14} parent=11 // pred_check_branch
        %265 = sbr.rel (%p263) target = $region20
      $region19: #{gsum_decoder_forward.14} parent=11 // pred_region
        _
      $region20: #{gsum_decoder_forward.14} parent=11 // pred_fallthru
        _
      // Predicated region
      $region21: #{gsum_decoder_forward.14} parent=11 // pred_check
        %p266 = pneg %p156
      $region22: #{gsum_decoder_forward.14} parent=11 // pred_check_branch
        %268 = sbr.rel (%p266) target = $region24
      $region23: #{gsum_decoder_forward.14} parent=11 // pred_region
        _
      $region24: #{gsum_decoder_forward.14} parent=11 // pred_fallthru
        _
      // Predicated region
      $region25: #{gsum_decoder_forward.14} parent=11 // pred_check
        %p269 = pneg %p177
      $region26: #{gsum_decoder_forward.14} parent=11 // pred_check_branch
        %271 = sbr.rel (%p269) target = $region28
      $region27: #{gsum_decoder_forward.14} parent=11 // pred_region
        _
      $region28: #{gsum_decoder_forward.14} parent=11 // pred_fallthru
        _
      // Predicated region
      $region29: #{gsum_decoder_forward.14} parent=11 // pred_check
        %p272 = pneg %p198
      $region30: #{gsum_decoder_forward.14} parent=11 // pred_check_branch
        %274 = sbr.rel (%p272) target = $region32
      $region31: #{gsum_decoder_forward.14} parent=11 // pred_region
        _
      $region32: #{gsum_decoder_forward.14} parent=11 // pred_fallthru
        _
      // Predicated region
      $region33: #{gsum_decoder_forward.14} parent=11 // pred_check
        %p275 = pneg %p219
      $region34: #{gsum_decoder_forward.14} parent=11 // pred_check_branch
        %277 = sbr.rel (%p275) target = $region36
      $region35: #{gsum_decoder_forward.14} parent=11 // pred_region
        _
      $region36: #{gsum_decoder_forward.14} parent=11 // pred_fallthru
        _
    $region12: #{gsum_decoder_forward.14} parent=5 // pred_fallthru
      _
    %p278 = scmp.lt.s32.totalorder %s15, 2
    // Predicated region
    $region37: #{gsum_decoder_forward.14} parent=5 // pred_check
      %p279 = pneg %p278
    $region38: #{gsum_decoder_forward.14} parent=5 // pred_check_branch
      %281 = sbr.rel (%p279) target = $region40
    $region39: #{gsum_decoder_forward.14} parent=5 // pred_region
      // Predicated region
      $region41: #{gsum_decoder_forward.14} parent=39 // pred_check
        %p282 = pneg %p35
      $region42: #{gsum_decoder_forward.14} parent=39 // pred_check_branch
        %284 = sbr.rel (%p282) target = $region44
      $region43: #{gsum_decoder_forward.14} parent=39 // pred_region
        %p285 = scmp.lt.s32.totalorder %s15, 1
        %s286 = scalar_select %p285, %s15, 1
        %s287 = smul.addr %s286, 4
        %s288 = scalar_lea.vmem %s0, %s287
      $region44: #{gsum_decoder_forward.14} parent=39 // pred_fallthru
        _
      // Predicated region
      $region45: #{gsum_decoder_forward.14} parent=39 // pred_check
        %p289 = pneg %p61
      $region46: #{gsum_decoder_forward.14} parent=39 // pred_check_branch
        %291 = sbr.rel (%p289) target = $region48
      $region47: #{gsum_decoder_forward.14} parent=39 // pred_region
        %p292 = scmp.lt.s32.totalorder %s15, 1
        %s293 = scalar_select %p292, %s15, 1
        %s294 = smul.addr %s293, 4
        %s295 = scalar_lea.vmem %s1, %s294
      $region48: #{gsum_decoder_forward.14} parent=39 // pred_fallthru
        _
      // Predicated region
      $region49: #{gsum_decoder_forward.14} parent=39 // pred_check
        %p296 = pneg %p87
      $region50: #{gsum_decoder_forward.14} parent=39 // pred_check_branch
        %298 = sbr.rel (%p296) target = $region52
      $region51: #{gsum_decoder_forward.14} parent=39 // pred_region
        %p299 = scmp.lt.s32.totalorder %s15, 1
        %s300 = scalar_select %p299, %s15, 1
        %s301 = scalar_lea.vmem %s2, %s300
      $region52: #{gsum_decoder_forward.14} parent=39 // pred_fallthru
        _
    $region40: #{gsum_decoder_forward.14} parent=5 // pred_fallthru
      _
    %p302 = scmp.le.s32.totalorder 1, %s15
    %p303 = scmp.lt.s32.totalorder %s15, 3
    %p304 = pnand %p302, %p303
    %p305 = pneg %p304
    // Predicated region
    $region53: #{gsum_decoder_forward.14} parent=5 // pred_check
      _
    $region54: #{gsum_decoder_forward.14} parent=5 // pred_check_branch
      %307 = sbr.rel (%p304) target = $region56
    $region55: #{gsum_decoder_forward.14} parent=5 // pred_region
      %s308 = ssub.s32 %s15, 1
      %p309 = scmp.lt.s32.totalorder %s20, 1
      %s310 = scalar_select %p309, %s20, 1
      %s311 = smul.addr %s310, 4
      %s312 = scalar_lea.vmem %s0, %s311
      %p313 = pneg %p41
      %p314 = pneg %p38
      %p315 = scmp.lt.s32.totalorder %s20, 1
      %s316 = scalar_select %p315, %s20, 1
      %s317 = smul.addr %s316, 4
      %s318 = scalar_lea.vmem %s1, %s317
      %p319 = pneg %p67
      %p320 = pneg %p64
      %p321 = scmp.lt.s32.totalorder %s20, 1
      %s322 = scalar_select %p321, %s20, 1
      %s323 = scalar_lea.vmem %s2, %s322
      %p324 = pneg %p93
      %p325 = pneg %p90
      %p326 = pneg %p114
      %p327 = pneg %p111
      %p328 = pneg %p135
      %p329 = pneg %p132
      %p330 = pneg %p156
      %p331 = pneg %p153
      %p332 = pneg %p177
      %p333 = pneg %p174
      %p334 = pneg %p198
      %p335 = pneg %p195
      %p336 = pneg %p219
      %p337 = pneg %p216
      %p338 = pneg %p245
      %p339 = pneg %p242
      %p340 = scmp.lt.s32.totalorder %s20, 1
      %s341 = scalar_select %p340, %s20, 1
      %s342 = smul.addr %s341, 4
      %s343 = scalar_lea.vmem %s9, %s342
      %p344 = scmp.lt.s32.totalorder %s20, 1
      %s345 = scalar_select %p344, %s20, 1
      %s346 = smul.addr %s345, 4
      %s347 = scalar_lea.vmem %s0, %s346
      %p348 = scmp.lt.s32.totalorder %s20, 1
      %s349 = scalar_select %p348, %s20, 1
      %s350 = smul.addr %s349, 4
      %s351 = scalar_lea.vmem %s1, %s350
      %p352 = scmp.lt.s32.totalorder %s20, 1
      %s353 = scalar_select %p352, %s20, 1
      %s354 = scalar_lea.vmem %s2, %s353
      %p355 = scmp.lt.s32.totalorder %s20, 1
      %s356 = scalar_select %p355, %s20, 1
      %s357 = smul.addr %s356, 4
      %s358 = scalar_lea.vmem %s9, %s357
      %v360 = vld [vmem:[%s347] sm:$0xf]
      %v361 = vld [vmem:[%s351] sm:$0xf]
      %v362 = vld [vmem:[%s354] sm:$0x1]
      %v363 = vld [vmem:[%s3] sm:$0xf]
      %v364 = vld [vmem:[%s3 + $0x4] sm:$0xf]
      %v365 = vld [vmem:[%s3 + $0x8] sm:$0xf]
      %v366 = vld [vmem:[%s3 + $0xc] sm:$0xf]
      %v367 = vld [vmem:[%s4] sm:$0x1]
      %v369 = vlaneseq
      %v370 = vshrl.u32 %v369, 7
      %v371 = vsub.s32 0, %v370
      %v372 = vrot.slane %v367, %v371
      %v378 = vunpack.c.l.b16 %v363
      %v379 = vunpack.c.l.b16 %v364
      %v380 = vunpack.c.l.b16 %v365
      %v381 = vunpack.c.l.b16 %v366
      %v382 = vpack.c.b16 %v379, %v378
      %v383 = vpack.c.b16 %v381, %v380
      %vm386 = vcmask 261120
      %v388 = vsel %vm386, %v360, 0
      %390 = vmatprep.subr.bf16.mxu0 0
      %391 = vmatpush1.bf16.msra.mxu0 %v382
      %392 = vmatprep.subr.bf16.mxu0 0
      %393 = vmatpush1.bf16.msra.mxu0 %v383
      %394 = vmatprep.subr.bf16.mxu0 0
      %395 = vmatpush1.bf16.msra.mxu0 0
      %396 = vmatprep.subr.bf16.mxu0 0
      %397 = vmatpush1.bf16.msra.mxu0 0
      %398 = vmatprep.subr.bf16.mxu0 0
      %399 = vmatpush1.bf16.msra.mxu0 0
      %400 = vmatprep.subr.bf16.mxu0 0
      %401 = vmatpush1.bf16.msra.mxu0 0
      %402 = vmatprep.subr.bf16.mxu0 0
      %403 = vmatpush1.bf16.msra.mxu0 0
      %404 = vmatprep.subr.bf16.mxu0 0
      %405 = vmatpush1.bf16.msra.mxu0 0
      %406 = vmatprep.subr.bf16.mxu0 0
      %407 = vmatpush1.bf16.msra.mxu0 0
      %408 = vmatprep.subr.bf16.mxu0 0
      %409 = vmatpush1.bf16.msra.mxu0 0
      %410 = vmatprep.subr.bf16.mxu0 0
      %411 = vmatpush1.bf16.msra.mxu0 0
      %412 = vmatprep.subr.bf16.mxu0 0
      %413 = vmatpush1.bf16.msra.mxu0 0
      %414 = vmatprep.subr.bf16.mxu0 0
      %415 = vmatpush1.bf16.msra.mxu0 0
      %416 = vmatprep.subr.bf16.mxu0 0
      %417 = vmatpush1.bf16.msra.mxu0 0
      %418 = vmatprep.subr.bf16.mxu0 0
      %419 = vmatpush1.bf16.msra.mxu0 0
      %420 = vmatprep.subr.bf16.mxu0 0
      %421 = vmatpush1.bf16.msra.mxu0 0
      %422 = vmatprep.mubr.bf16.mxu0 0
      %423 = vmatmul.mubr.bf16.gmra.mrb[0].mxu0 %v388
      %v424 = vpop.f32.mrb[0].mxu0
      %v425 = vadd.f32 %v372, %v424
      %v426 = vpop.f32.mrb[0].mxu0
      %v427 = vpop.f32.mrb[0].mxu0
      %v428 = vpop.f32.mrb[0].mxu0
      %429 = vdwg.mxu0
      %v430 = vmul.f32 %v425, 0.35355338
      %v431 = vpack.c.bf16 %v430, %v430
      %v433 = vlaneseq
      %v434 = vshrl.u32 %v433, 7
      %v435 = vsub.s32 0, %v434
      %v436 = vrot.slane %v362, %v435
      %vm438 = vcmask 64512
      %v440 = vsel %vm438, %v431, 0
      %v443 = vsel %vm438, %v361, 0
      %445 = vmatprep.subr.bf16.mxu0 0
      %446 = vmatpush1.bf16.xpose.msra.mxu0 %v443
      %447 = vmatprep.subr.bf16.mxu0 0
      %448 = vmatpush1.bf16.xpose.msra.mxu0 0
      %449 = vmatprep.subr.bf16.mxu0 0
      %450 = vmatpush1.bf16.xpose.msra.mxu0 0
      %451 = vmatprep.subr.bf16.mxu0 0
      %452 = vmatpush1.bf16.xpose.msra.mxu0 0
      %453 = vmatprep.subr.bf16.mxu0 0
      %454 = vmatpush1.bf16.xpose.msra.mxu0 0
      %455 = vmatprep.subr.bf16.mxu0 0
      %456 = vmatpush1.bf16.xpose.msra.mxu0 0
      %457 = vmatprep.subr.bf16.mxu0 0
      %458 = vmatpush1.bf16.xpose.msra.mxu0 0
      %459 = vmatprep.subr.bf16.mxu0 0
      %460 = vmatpush1.bf16.xpose.msra.mxu0 0
      %461 = vmatprep.subr.bf16.mxu0 0
      %462 = vmatpush1.bf16.xpose.msra.mxu0 0
      %463 = vmatprep.subr.bf16.mxu0 0
      %464 = vmatpush1.bf16.xpose.msra.mxu0 0
      %465 = vmatprep.subr.bf16.mxu0 0
      %466 = vmatpush1.bf16.xpose.msra.mxu0 0
      %467 = vmatprep.subr.bf16.mxu0 0
      %468 = vmatpush1.bf16.xpose.msra.mxu0 0
      %469 = vmatprep.subr.bf16.mxu0 0
      %470 = vmatpush1.bf16.xpose.msra.mxu0 0
      %471 = vmatprep.subr.bf16.mxu0 0
      %472 = vmatpush1.bf16.xpose.msra.mxu0 0
      %473 = vmatprep.subr.bf16.mxu0 0
      %474 = vmatpush1.bf16.xpose.msra.mxu0 0
      %475 = vmatprep.subr.bf16.mxu0 0
      %476 = vmatpush1.bf16.xpose.msra.mxu0 0
      %477 = vmatprep.mubr.bf16.mxu0 0
      %478 = vmatmul.mubr.bf16.gmra.mrb[0].mxu0 %v440
      %v479 = vpop.f32.mrb[0].mxu0
      %v480 = vadd.f32 %v436, %v479
      %v481 = vpop.f32.mrb[0].mxu0
      %v482 = vpop.f32.mrb[0].mxu0
      %v483 = vpop.f32.mrb[0].mxu0
      %484 = vdwg.mxu0
      %v485 = vsel %vm438, %v480, -inf
      %486 = vmax.xlane.f32.xlu0 %v485
      %v487 = vpop.xlane.xlu0 %486
      %v488 = vsub.f32 %v480, %v487
      %v489 = vmul.f32 %v488, 1.442695
      %v490 = vpow.pop %v489
      %v491 = vsel %vm438, %v490, 0.0
      %492 = vadd.xlane.f32.xlu0 %v491
      %v493 = vpop.xlane.xlu0 %492
      %v494 = vrcp.pop %v493
      %v495 = vmul.f32 %v490, %v494
      %v496 = vpack.c.bf16 %v495, %v495
      %v498 = vunpack.c.l.b16 %v361
      %v499 = vpack.c.b16 %v498, %v498
      %500 = vrot.lane.b32.xlu0 %v499, 96
      %v501 = vpop.permute.xlu0 %500
      %v503 = vsel %vm438, %v496, 0
      %vm505 = vcmask 1043456
      %v507 = vsel %vm505, %v501, 0
      %509 = vmatprep.subr.bf16.mxu0 0
      %510 = vmatpush1.bf16.msra.mxu0 %v507
      %511 = vmatprep.subr.bf16.mxu0 0
      %512 = vmatpush1.bf16.msra.mxu0 0
      %513 = vmatprep.subr.bf16.mxu0 0
      %514 = vmatpush1.bf16.msra.mxu0 0
      %515 = vmatprep.subr.bf16.mxu0 0
      %516 = vmatpush1.bf16.msra.mxu0 0
      %517 = vmatprep.subr.bf16.mxu0 0
      %518 = vmatpush1.bf16.msra.mxu0 0
      %519 = vmatprep.subr.bf16.mxu0 0
      %520 = vmatpush1.bf16.msra.mxu0 0
      %521 = vmatprep.subr.bf16.mxu0 0
      %522 = vmatpush1.bf16.msra.mxu0 0
      %523 = vmatprep.subr.bf16.mxu0 0
      %524 = vmatpush1.bf16.msra.mxu0 0
      %525 = vmatprep.subr.bf16.mxu0 0
      %526 = vmatpush1.bf16.msra.mxu0 0
      %527 = vmatprep.subr.bf16.mxu0 0
      %528 = vmatpush1.bf16.msra.mxu0 0
      %529 = vmatprep.subr.bf16.mxu0 0
      %530 = vmatpush1.bf16.msra.mxu0 0
      %531 = vmatprep.subr.bf16.mxu0 0
      %532 = vmatpush1.bf16.msra.mxu0 0
      %533 = vmatprep.subr.bf16.mxu0 0
      %534 = vmatpush1.bf16.msra.mxu0 0
      %535 = vmatprep.subr.bf16.mxu0 0
      %536 = vmatpush1.bf16.msra.mxu0 0
      %537 = vmatprep.subr.bf16.mxu0 0
      %538 = vmatpush1.bf16.msra.mxu0 0
      %539 = vmatprep.subr.bf16.mxu0 0
      %540 = vmatpush1.bf16.msra.mxu0 0
      %541 = vmatprep.mubr.bf16.mxu0 0
      %542 = vmatmul.mubr.bf16.gmra.mrb[0].mxu0 %v503
      %v543 = vpop.f32.mrb[0].mxu0
      %v544 = vadd.f32 0.0, %v543
      %v545 = vpop.f32.mrb[0].mxu0
      %v546 = vpop.f32.mrb[0].mxu0
      %v547 = vpop.f32.mrb[0].mxu0
      %548 = vdwg.mxu0
      %549 = vst.msk [vmem:[#allocation2] sm:$0xff] %vm438, %v544
      %551 = vrot.lane.b32.xlu0 %v431, 120
      %v552 = vpop.permute.xlu0 %551
      %553 = vrot.lane.b32.xlu0 %v499, 120
      %v554 = vpop.permute.xlu0 %553
      %v556 = vsel %vm438, %v552, 0
      %v559 = vsel %vm438, %v554, 0
      %561 = vmatprep.subr.bf16.mxu0 0
      %562 = vmatpush1.bf16.xpose.msra.mxu0 %v559
      %563 = vmatprep.subr.bf16.mxu0 0
      %564 = vmatpush1.bf16.xpose.msra.mxu0 0
      %565 = vmatprep.subr.bf16.mxu0 0
      %566 = vmatpush1.bf16.xpose.msra.mxu0 0
      %567 = vmatprep.subr.bf16.mxu0 0
      %568 = vmatpush1.bf16.xpose.msra.mxu0 0
      %569 = vmatprep.subr.bf16.mxu0 0
      %570 = vmatpush1.bf16.xpose.msra.mxu0 0
      %571 = vmatprep.subr.bf16.mxu0 0
      %572 = vmatpush1.bf16.xpose.msra.mxu0 0
      %573 = vmatprep.subr.bf16.mxu0 0
      %574 = vmatpush1.bf16.xpose.msra.mxu0 0
      %575 = vmatprep.subr.bf16.mxu0 0
      %576 = vmatpush1.bf16.xpose.msra.mxu0 0
      %577 = vmatprep.subr.bf16.mxu0 0
      %578 = vmatpush1.bf16.xpose.msra.mxu0 0
      %579 = vmatprep.subr.bf16.mxu0 0
      %580 = vmatpush1.bf16.xpose.msra.mxu0 0
      %581 = vmatprep.subr.bf16.mxu0 0
      %582 = vmatpush1.bf16.xpose.msra.mxu0 0
      %583 = vmatprep.subr.bf16.mxu0 0
      %584 = vmatpush1.bf16.xpose.msra.mxu0 0
      %585 = vmatprep.subr.bf16.mxu0 0
      %586 = vmatpush1.bf16.xpose.msra.mxu0 0
      %587 = vmatprep.subr.bf16.mxu0 0
      %588 = vmatpush1.bf16.xpose.msra.mxu0 0
      %589 = vmatprep.subr.bf16.mxu0 0
      %590 = vmatpush1.bf16.xpose.msra.mxu0 0
      %591 = vmatprep.subr.bf16.mxu0 0
      %592 = vmatpush1.bf16.xpose.msra.mxu0 0
      %593 = vmatprep.mubr.bf16.mxu0 0
      %594 = vmatmul.mubr.bf16.gmra.mrb[0].mxu0 %v556
      %v595 = vpop.f32.mrb[0].mxu0
      %v596 = vadd.f32 %v436, %v595
      %v597 = vpop.f32.mrb[0].mxu0
      %v598 = vpop.f32.mrb[0].mxu0
      %v599 = vpop.f32.mrb[0].mxu0
      %600 = vdwg.mxu0
      %v601 = vsel %vm438, %v596, -inf
      %602 = vmax.xlane.f32.xlu0 %v601
      %v603 = vpop.xlane.xlu0 %602
      %v604 = vsub.f32 %v596, %v603
      %v605 = vmul.f32 %v604, 1.442695
      %v606 = vpow.pop %v605
      %v607 = vsel %vm438, %v606, 0.0
      %608 = vadd.xlane.f32.xlu0 %v607
      %v609 = vpop.xlane.xlu0 %608
      %v610 = vrcp.pop %v609
      %v611 = vmul.f32 %v606, %v610
      %v612 = vpack.c.bf16 %v611, %v611
      %613 = vrot.lane.b32.xlu0 %v499, 88
      %v614 = vpop.permute.xlu0 %613
      %v616 = vsel %vm438, %v612, 0
      %v619 = vsel %vm505, %v614, 0
      %621 = vmatprep.subr.bf16.mxu0 0
      %622 = vmatpush1.bf16.msra.mxu0 %v619
      %623 = vmatprep.subr.bf16.mxu0 0
      %624 = vmatpush1.bf16.msra.mxu0 0
      %625 = vmatprep.subr.bf16.mxu0 0
      %626 = vmatpush1.bf16.msra.mxu0 0
      %627 = vmatprep.subr.bf16.mxu0 0
      %628 = vmatpush1.bf16.msra.mxu0 0
      %629 = vmatprep.subr.bf16.mxu0 0
      %630 = vmatpush1.bf16.msra.mxu0 0
      %631 = vmatprep.subr.bf16.mxu0 0
      %632 = vmatpush1.bf16.msra.mxu0 0
      %633 = vmatprep.subr.bf16.mxu0 0
      %634 = vmatpush1.bf16.msra.mxu0 0
      %635 = vmatprep.subr.bf16.mxu0 0
      %636 = vmatpush1.bf16.msra.mxu0 0
      %637 = vmatprep.subr.bf16.mxu0 0
      %638 = vmatpush1.bf16.msra.mxu0 0
      %639 = vmatprep.subr.bf16.mxu0 0
      %640 = vmatpush1.bf16.msra.mxu0 0
      %641 = vmatprep.subr.bf16.mxu0 0
      %642 = vmatpush1.bf16.msra.mxu0 0
      %643 = vmatprep.subr.bf16.mxu0 0
      %644 = vmatpush1.bf16.msra.mxu0 0
      %645 = vmatprep.subr.bf16.mxu0 0
      %646 = vmatpush1.bf16.msra.mxu0 0
      %647 = vmatprep.subr.bf16.mxu0 0
      %648 = vmatpush1.bf16.msra.mxu0 0
      %649 = vmatprep.subr.bf16.mxu0 0
      %650 = vmatpush1.bf16.msra.mxu0 0
      %651 = vmatprep.subr.bf16.mxu0 0
      %652 = vmatpush1.bf16.msra.mxu0 0
      %653 = vmatprep.mubr.bf16.mxu0 0
      %654 = vmatmul.mubr.bf16.gmra.mrb[0].mxu0 %v616
      %v655 = vpop.f32.mrb[0].mxu0
      %v656 = vadd.f32 0.0, %v655
      %v657 = vpop.f32.mrb[0].mxu0
      %v658 = vpop.f32.mrb[0].mxu0
      %v659 = vpop.f32.mrb[0].mxu0
      %660 = vdwg.mxu0
      %662 = vrot.lane.b32.xlu0 %v656, 8
      %v663 = vpop.permute.xlu0 %662
      %vm665 = vcmask 130112
      %666 = vst.msk [vmem:[#allocation2] sm:$0xff] %vm665, %v663
      %667 = vrot.lane.b32.xlu0 %v431, 112
      %v668 = vpop.permute.xlu0 %667
      %669 = vrot.lane.b32.xlu0 %v499, 112
      %v670 = vpop.permute.xlu0 %669
      %v672 = vsel %vm438, %v668, 0
      %v675 = vsel %vm438, %v670, 0
      %677 = vmatprep.subr.bf16.mxu0 0
      %678 = vmatpush1.bf16.xpose.msra.mxu0 %v675
      %679 = vmatprep.subr.bf16.mxu0 0
      %680 = vmatpush1.bf16.xpose.msra.mxu0 0
      %681 = vmatprep.subr.bf16.mxu0 0
      %682 = vmatpush1.bf16.xpose.msra.mxu0 0
      %683 = vmatprep.subr.bf16.mxu0 0
      %684 = vmatpush1.bf16.xpose.msra.mxu0 0
      %685 = vmatprep.subr.bf16.mxu0 0
      %686 = vmatpush1.bf16.xpose.msra.mxu0 0
      %687 = vmatprep.subr.bf16.mxu0 0
      %688 = vmatpush1.bf16.xpose.msra.mxu0 0
      %689 = vmatprep.subr.bf16.mxu0 0
      %690 = vmatpush1.bf16.xpose.msra.mxu0 0
      %691 = vmatprep.subr.bf16.mxu0 0
      %692 = vmatpush1.bf16.xpose.msra.mxu0 0
      %693 = vmatprep.subr.bf16.mxu0 0
      %694 = vmatpush1.bf16.xpose.msra.mxu0 0
      %695 = vmatprep.subr.bf16.mxu0 0
      %696 = vmatpush1.bf16.xpose.msra.mxu0 0
      %697 = vmatprep.subr.bf16.mxu0 0
      %698 = vmatpush1.bf16.xpose.msra.mxu0 0
      %699 = vmatprep.subr.bf16.mxu0 0
      %700 = vmatpush1.bf16.xpose.msra.mxu0 0
      %701 = vmatprep.subr.bf16.mxu0 0
      %702 = vmatpush1.bf16.xpose.msra.mxu0 0
      %703 = vmatprep.subr.bf16.mxu0 0
      %704 = vmatpush1.bf16.xpose.msra.mxu0 0
      %705 = vmatprep.subr.bf16.mxu0 0
      %706 = vmatpush1.bf16.xpose.msra.mxu0 0
      %707 = vmatprep.subr.bf16.mxu0 0
      %708 = vmatpush1.bf16.xpose.msra.mxu0 0
      %709 = vmatprep.mubr.bf16.mxu0 0
      %710 = vmatmul.mubr.bf16.gmra.mrb[0].mxu0 %v672
      %v711 = vpop.f32.mrb[0].mxu0
      %v712 = vadd.f32 %v436, %v711
      %v713 = vpop.f32.mrb[0].mxu0
      %v714 = vpop.f32.mrb[0].mxu0
      %v715 = vpop.f32.mrb[0].mxu0
      %716 = vdwg.mxu0
      %v717 = vsel %vm438, %v712, -inf
      %718 = vmax.xlane.f32.xlu0 %v717
      %v719 = vpop.xlane.xlu0 %718
      %v720 = vsub.f32 %v712, %v719
      %v721 = vmul.f32 %v720, 1.442695
      %v722 = vpow.pop %v721
      %v723 = vsel %vm438, %v722, 0.0
      %724 = vadd.xlane.f32.xlu0 %v723
      %v725 = vpop.xlane.xlu0 %724
      %v726 = vrcp.pop %v725
      %v727 = vmul.f32 %v722, %v726
      %v728 = vpack.c.bf16 %v727, %v727
      %729 = vrot.lane.b32.xlu0 %v499, 80
      %v730 = vpop.permute.xlu0 %729
      %v732 = vsel %vm438, %v728, 0
      %v735 = vsel %vm505, %v730, 0
      %737 = vmatprep.subr.bf16.mxu0 0
      %738 = vmatpush1.bf16.msra.mxu0 %v735
      %739 = vmatprep.subr.bf16.mxu0 0
      %740 = vmatpush1.bf16.msra.mxu0 0
      %741 = vmatprep.subr.bf16.mxu0 0
      %742 = vmatpush1.bf16.msra.mxu0 0
      %743 = vmatprep.subr.bf16.mxu0 0
      %744 = vmatpush1.bf16.msra.mxu0 0
      %745 = vmatprep.subr.bf16.mxu0 0
      %746 = vmatpush1.bf16.msra.mxu0 0
      %747 = vmatprep.subr.bf16.mxu0 0
      %748 = vmatpush1.bf16.msra.mxu0 0
      %749 = vmatprep.subr.bf16.mxu0 0
      %750 = vmatpush1.bf16.msra.mxu0 0
      %751 = vmatprep.subr.bf16.mxu0 0
      %752 = vmatpush1.bf16.msra.mxu0 0
      %753 = vmatprep.subr.bf16.mxu0 0
      %754 = vmatpush1.bf16.msra.mxu0 0
      %755 = vmatprep.subr.bf16.mxu0 0
      %756 = vmatpush1.bf16.msra.mxu0 0
      %757 = vmatprep.subr.bf16.mxu0 0
      %758 = vmatpush1.bf16.msra.mxu0 0
      %759 = vmatprep.subr.bf16.mxu0 0
      %760 = vmatpush1.bf16.msra.mxu0 0
      %761 = vmatprep.subr.bf16.mxu0 0
      %762 = vmatpush1.bf16.msra.mxu0 0
      %763 = vmatprep.subr.bf16.mxu0 0
      %764 = vmatpush1.bf16.msra.mxu0 0
      %765 = vmatprep.subr.bf16.mxu0 0
      %766 = vmatpush1.bf16.msra.mxu0 0
      %767 = vmatprep.subr.bf16.mxu0 0
      %768 = vmatpush1.bf16.msra.mxu0 0
      %769 = vmatprep.mubr.bf16.mxu0 0
      %770 = vmatmul.mubr.bf16.gmra.mrb[0].mxu0 %v732
      %v771 = vpop.f32.mrb[0].mxu0
      %v772 = vadd.f32 0.0, %v771
      %v773 = vpop.f32.mrb[0].mxu0
      %v774 = vpop.f32.mrb[0].mxu0
      %v775 = vpop.f32.mrb[0].mxu0
      %776 = vdwg.mxu0
      %778 = vrot.lane.b32.xlu0 %v772, 16
      %v779 = vpop.permute.xlu0 %778
      %vm781 = vcmask 195712
      %782 = vst.msk [vmem:[#allocation2] sm:$0xff] %vm781, %v779
      %783 = vrot.lane.b32.xlu0 %v431, 104
      %v784 = vpop.permute.xlu0 %783
      %785 = vrot.lane.b32.xlu0 %v499, 104
      %v786 = vpop.permute.xlu0 %785
      %v788 = vsel %vm438, %v784, 0
      %v791 = vsel %vm438, %v786, 0
      %793 = vmatprep.subr.bf16.mxu0 0
      %794 = vmatpush1.bf16.xpose.msra.mxu0 %v791
      %795 = vmatprep.subr.bf16.mxu0 0
      %796 = vmatpush1.bf16.xpose.msra.mxu0 0
      %797 = vmatprep.subr.bf16.mxu0 0
      %798 = vmatpush1.bf16.xpose.msra.mxu0 0
      %799 = vmatprep.subr.bf16.mxu0 0
      %800 = vmatpush1.bf16.xpose.msra.mxu0 0
      %801 = vmatprep.subr.bf16.mxu0 0
      %802 = vmatpush1.bf16.xpose.msra.mxu0 0
      %803 = vmatprep.subr.bf16.mxu0 0
      %804 = vmatpush1.bf16.xpose.msra.mxu0 0
      %805 = vmatprep.subr.bf16.mxu0 0
      %806 = vmatpush1.bf16.xpose.msra.mxu0 0
      %807 = vmatprep.subr.bf16.mxu0 0
      %808 = vmatpush1.bf16.xpose.msra.mxu0 0
      %809 = vmatprep.subr.bf16.mxu0 0
      %810 = vmatpush1.bf16.xpose.msra.mxu0 0
      %811 = vmatprep.subr.bf16.mxu0 0
      %812 = vmatpush1.bf16.xpose.msra.mxu0 0
      %813 = vmatprep.subr.bf16.mxu0 0
      %814 = vmatpush1.bf16.xpose.msra.mxu0 0
      %815 = vmatprep.subr.bf16.mxu0 0
      %816 = vmatpush1.bf16.xpose.msra.mxu0 0
      %817 = vmatprep.subr.bf16.mxu0 0
      %818 = vmatpush1.bf16.xpose.msra.mxu0 0
      %819 = vmatprep.subr.bf16.mxu0 0
      %820 = vmatpush1.bf16.xpose.msra.mxu0 0
      %821 = vmatprep.subr.bf16.mxu0 0
      %822 = vmatpush1.bf16.xpose.msra.mxu0 0
      %823 = vmatprep.subr.bf16.mxu0 0
      %824 = vmatpush1.bf16.xpose.msra.mxu0 0
      %825 = vmatprep.mubr.bf16.mxu0 0
      %826 = vmatmul.mubr.bf16.gmra.mrb[0].mxu0 %v788
      %v827 = vpop.f32.mrb[0].mxu0
      %v828 = vadd.f32 %v436, %v827
      %v829 = vpop.f32.mrb[0].mxu0
      %v830 = vpop.f32.mrb[0].mxu0
      %v831 = vpop.f32.mrb[0].mxu0
      %832 = vdwg.mxu0
      %v833 = vsel %vm438, %v828, -inf
      %834 = vmax.xlane.f32.xlu0 %v833
      %v835 = vpop.xlane.xlu0 %834
      %v836 = vsub.f32 %v828, %v835
      %v837 = vmul.f32 %v836, 1.442695
      %v838 = vpow.pop %v837
      %v839 = vsel %vm438, %v838, 0.0
      %840 = vadd.xlane.f32.xlu0 %v839
      %v841 = vpop.xlane.xlu0 %840
      %v842 = vrcp.pop %v841
      %v843 = vmul.f32 %v838, %v842
      %v844 = vpack.c.bf16 %v843, %v843
      %845 = vrot.lane.b32.xlu0 %v499, 72
      %v846 = vpop.permute.xlu0 %845
      %v848 = vsel %vm438, %v844, 0
      %v851 = vsel %vm505, %v846, 0
      %853 = vmatprep.subr.bf16.mxu0 0
      %854 = vmatpush1.bf16.msra.mxu0 %v851
      %855 = vmatprep.subr.bf16.mxu0 0
      %856 = vmatpush1.bf16.msra.mxu0 0
      %857 = vmatprep.subr.bf16.mxu0 0
      %858 = vmatpush1.bf16.msra.mxu0 0
      %859 = vmatprep.subr.bf16.mxu0 0
      %860 = vmatpush1.bf16.msra.mxu0 0
      %861 = vmatprep.subr.bf16.mxu0 0
      %862 = vmatpush1.bf16.msra.mxu0 0
      %863 = vmatprep.subr.bf16.mxu0 0
      %864 = vmatpush1.bf16.msra.mxu0 0
      %865 = vmatprep.subr.bf16.mxu0 0
      %866 = vmatpush1.bf16.msra.mxu0 0
      %867 = vmatprep.subr.bf16.mxu0 0
      %868 = vmatpush1.bf16.msra.mxu0 0
      %869 = vmatprep.subr.bf16.mxu0 0
      %870 = vmatpush1.bf16.msra.mxu0 0
      %871 = vmatprep.subr.bf16.mxu0 0
      %872 = vmatpush1.bf16.msra.mxu0 0
      %873 = vmatprep.subr.bf16.mxu0 0
      %874 = vmatpush1.bf16.msra.mxu0 0
      %875 = vmatprep.subr.bf16.mxu0 0
      %876 = vmatpush1.bf16.msra.mxu0 0
      %877 = vmatprep.subr.bf16.mxu0 0
      %878 = vmatpush1.bf16.msra.mxu0 0
      %879 = vmatprep.subr.bf16.mxu0 0
      %880 = vmatpush1.bf16.msra.mxu0 0
      %881 = vmatprep.subr.bf16.mxu0 0
      %882 = vmatpush1.bf16.msra.mxu0 0
      %883 = vmatprep.subr.bf16.mxu0 0
      %884 = vmatpush1.bf16.msra.mxu0 0
      %885 = vmatprep.mubr.bf16.mxu0 0
      %886 = vmatmul.mubr.bf16.gmra.mrb[0].mxu0 %v848
      %v887 = vpop.f32.mrb[0].mxu0
      %v888 = vadd.f32 0.0, %v887
      %v889 = vpop.f32.mrb[0].mxu0
      %v890 = vpop.f32.mrb[0].mxu0
      %v891 = vpop.f32.mrb[0].mxu0
      %892 = vdwg.mxu0
      %894 = vrot.lane.b32.xlu0 %v888, 24
      %v895 = vpop.permute.xlu0 %894
      %vm897 = vcmask 261312
      %898 = vst.msk [vmem:[#allocation2] sm:$0xff] %vm897, %v895
      %v899 = vld [vmem:[#allocation2] sm:$0xff]
      %v900 = vpack.c.bf16 %v899, %v899
      %v901 = vld [vmem:[%s5] sm:$0xf]
      %v902 = vld [vmem:[%s5 + $0x4] sm:$0xf]
      %v903 = vld [vmem:[%s5 + $0x8] sm:$0xf]
      %v904 = vld [vmem:[%s5 + $0xc] sm:$0xf]
      %v905 = vld [vmem:[%s6] sm:$0x1]
      %v907 = vlaneseq
      %v908 = vshrl.u32 %v907, 7
      %v909 = vsub.s32 0, %v908
      %v910 = vrot.slane %v905, %v909
      %v916 = vunpack.c.l.b16 %v901
      %v917 = vunpack.c.l.b16 %v902
      %v918 = vunpack.c.l.b16 %v903
      %v919 = vunpack.c.l.b16 %v904
      %v920 = vpack.c.b16 %v917, %v916
      %v921 = vpack.c.b16 %v919, %v918
      %v925 = vsel %vm386, %v900, 0
      %927 = vmatprep.subr.bf16.mxu0 0
      %928 = vmatpush1.bf16.msra.mxu0 %v920
      %929 = vmatprep.subr.bf16.mxu0 0
      %930 = vmatpush1.bf16.msra.mxu0 %v921
      %931 = vmatprep.subr.bf16.mxu0 0
      %932 = vmatpush1.bf16.msra.mxu0 0
      %933 = vmatprep.subr.bf16.mxu0 0
      %934 = vmatpush1.bf16.msra.mxu0 0
      %935 = vmatprep.subr.bf16.mxu0 0
      %936 = vmatpush1.bf16.msra.mxu0 0
      %937 = vmatprep.subr.bf16.mxu0 0
      %938 = vmatpush1.bf16.msra.mxu0 0
      %939 = vmatprep.subr.bf16.mxu0 0
      %940 = vmatpush1.bf16.msra.mxu0 0
      %941 = vmatprep.subr.bf16.mxu0 0
      %942 = vmatpush1.bf16.msra.mxu0 0
      %943 = vmatprep.subr.bf16.mxu0 0
      %944 = vmatpush1.bf16.msra.mxu0 0
      %945 = vmatprep.subr.bf16.mxu0 0
      %946 = vmatpush1.bf16.msra.mxu0 0
      %947 = vmatprep.subr.bf16.mxu0 0
      %948 = vmatpush1.bf16.msra.mxu0 0
      %949 = vmatprep.subr.bf16.mxu0 0
      %950 = vmatpush1.bf16.msra.mxu0 0
      %951 = vmatprep.subr.bf16.mxu0 0
      %952 = vmatpush1.bf16.msra.mxu0 0
      %953 = vmatprep.subr.bf16.mxu0 0
      %954 = vmatpush1.bf16.msra.mxu0 0
      %955 = vmatprep.subr.bf16.mxu0 0
      %956 = vmatpush1.bf16.msra.mxu0 0
      %957 = vmatprep.subr.bf16.mxu0 0
      %958 = vmatpush1.bf16.msra.mxu0 0
      %959 = vmatprep.mubr.bf16.mxu0 0
      %960 = vmatmul.mubr.bf16.gmra.mrb[0].mxu0 %v925
      %v961 = vpop.f32.mrb[0].mxu0
      %v962 = vadd.f32 %v910, %v961
      %v963 = vpop.f32.mrb[0].mxu0
      %v964 = vpop.f32.mrb[0].mxu0
      %v965 = vpop.f32.mrb[0].mxu0
      %966 = vdwg.mxu0
      %v967 = vunpack.c.l.bf16 %v360
      %v968 = vadd.f32 %v967, %v962
      %v969 = vsel %vm386, %v968, 0.0
      %970 = vadd.xlane.f32.xlu0 %v969
      %v971 = vpop.xlane.xlu0 %970
      %v972 = vrcp.pop 32.0
      %v973 = vmul.f32 %v971, %v972
      %v974 = vsub.f32 %v968, %v973
      %v975 = vmul.f32 %v974, %v974
      %v976 = vsel %vm386, %v975, 0.0
      %977 = vadd.xlane.f32.xlu0 %v976
      %v978 = vpop.xlane.xlu0 %977
      %v979 = vmul.f32 %v978, %v972
      %v980 = vadd.f32 %v979, 1e-05
      %v981 = vrsqrt.pop %v980
      %v982 = vmul.f32 %v974, %v981
      %v983 = vld [vmem:[%s7] sm:$0x1]
      %v985 = vlaneseq
      %v986 = vshrl.u32 %v985, 7
      %v987 = vsub.s32 0, %v986
      %v988 = vrot.slane %v983, %v987
      %v990 = vmul.f32 %v982, %v988
      %v991 = vld [vmem:[%s8] sm:$0x1]
      %v993 = vlaneseq
      %v994 = vshrl.u32 %v993, 7
      %v995 = vsub.s32 0, %v994
      %v996 = vrot.slane %v991, %v995
      %v998 = vadd.f32 %v990, %v996
      %v999 = vpack.c.bf16 %v998, %v998
      %vm1000 = vcmask 257024
      %1001 = vst.msk [vmem:[%s358] sm:$0xf] %vm1000, %v999
      %p1002 = scmp.lt.s32.totalorder %s20, 1
      %s1003 = scalar_select %p1002, %s20, 1
      %s1004 = smul.addr %s1003, 4
      %s1005 = scalar_lea.vmem %s9, %s1004
      // Predicated region
      $region57: #{gsum_decoder_forward.14} parent=55 // pred_check
        %p1006 = pneg %p242
      $region58: #{gsum_decoder_forward.14} parent=55 // pred_check_branch
        %1008 = sbr.rel (%p1006) target = $region60
      $region59: #{gsum_decoder_forward.14} parent=55 // pred_region
        _
      $region60: #{gsum_decoder_forward.14} parent=55 // pred_fallthru
        _
    $region56: #{gsum_decoder_forward.14} parent=5 // pred_fallthru
      _
    %p1009 = scmp.le.s32.totalorder 2, %s15
    // Predicated region
    $region61: #{gsum_decoder_forward.14} parent=5 // pred_check
      %p1010 = pneg %p1009
    $region62: #{gsum_decoder_forward.14} parent=5 // pred_check_branch
      %1012 = sbr.rel (%p1010) target = $region64
    $region63: #{gsum_decoder_forward.14} parent=5 // pred_region
      %s1013 = ssub.s32 %s15, 2
      // Predicated region
      $region65: #{gsum_decoder_forward.14} parent=63 // pred_check
        %p1014 = pneg %p248
      $region66: #{gsum_decoder_forward.14} parent=63 // pred_check_branch
        %1016 = sbr.rel (%p1014) target = $region68
      $region67: #{gsum_decoder_forward.14} parent=63 // pred_region
        %p1017 = scmp.lt.s32.totalorder %s21, 1
        %s1018 = scalar_select %p1017, %s21, 1
        %s1019 = smul.addr %s1018, 4
        %s1020 = scalar_lea.vmem %s9, %s1019
      $region68: #{gsum_decoder_forward.14} parent=63 // pred_fallthru
        _
    $region64: #{gsum_decoder_forward.14} parent=5 // pred_fallthru
      _
  $region6: #{gsum_decoder_forward.14} parent=0 // loop_footer
    %s19 = sadd.s32 1, %s15
  $region7: #{gsum_decoder_forward.14} parent=0 // loop_footer_branch
    %14 = sbr.rel target = $region3
  $region8: #{gsum_decoder_forward.14} parent=0 // loop_exit
    _

// kernel: gsum_decoder_forward.19
$region0: #{gsum_decoder_forward.19}
  #allocation0 [shape = 'u32[]', space=smem, size = 0x4, offset = 0x4, fixed_abs, tag = 'smem constant byte address 0x4 - core index']
  #allocation1 [shape = 'u32[144,128]{1,0:T(1,128)}', space=vmem, size = 0x12000, scoped, tag = 'internal scratch']
  %s0 = inlined_call_operand.vmem [shape: bf16[16,32], index: 0, kind: input, shape index: {}]
  %s1 = inlined_call_operand.vmem [shape: bf16[32,64], index: 1, kind: input, shape index: {}]
  %s2 = inlined_call_operand.vmem [shape: f32[1,64], index: 2, kind: input, shape index: {}]
  %s3 = inlined_call_operand.vmem [shape: bf16[64,32], index: 3, kind: input, shape index: {}]
  %s4 = inlined_call_operand.vmem [shape: f32[1,32], index: 4, kind: input, shape index: {}]
  %s5 = inlined_call_operand.vmem [shape: f32[1,32], index: 5, kind: input, shape index: {}]
  %s6 = inlined_call_operand.vmem [shape: f32[1,32], index: 6, kind: input, shape index: {}]
  %s7 = inlined_call_operand.vmem [shape: f32[1,32], index: 7, kind: input, shape index: {}]
  %s8 = inlined_call_operand.vmem [shape: f32[1,32], index: 8, kind: input, shape index: {}]
  %s9 = inlined_call_operand.hbm [shape: f32[16,32], index: 9, kind: output, shape index: {}]
  %s10 = sld [smem:[#allocation0]]
  $region46: #{gsum_decoder_forward.19} parent=0
    _
  %s12 = ssub.s32 1, %s10
  %s13 = scalar_select 0, %s12, %s10
  $region1: #{gsum_decoder_forward.19} parent=0
    #allocation2 [shape = 'u8[8192]{0}', space=vmem, size = 0x2000, scoped, tag = 'output window, operand 0, single buffered']
    #allocation3 [shape = 's32[1]{0}', space=sflag, size = 0x4, scoped, tag = 'scoped memory for gsum_decoder_forward.19']
    %14 = vsyncpa [#allocation3], 0
    // Predicated region
    $region2: #{gsum_decoder_forward.19} parent=1 // pred_check
      _
    $region3: #{gsum_decoder_forward.19} parent=1 // pred_check_branch
      %16 = sbr.rel (0) target = $region5
    $region4: #{gsum_decoder_forward.19} parent=1 // pred_region
      _
    $region5: #{gsum_decoder_forward.19} parent=1 // pred_fallthru
      _
    // Predicated region
    $region6: #{gsum_decoder_forward.19} parent=1 // pred_check
      _
    $region7: #{gsum_decoder_forward.19} parent=1 // pred_check_branch
      %18 = sbr.rel (0) target = $region9
    $region8: #{gsum_decoder_forward.19} parent=1 // pred_region
      _
    $region9: #{gsum_decoder_forward.19} parent=1 // pred_fallthru
      _
    // Predicated region
    $region10: #{gsum_decoder_forward.19} parent=1 // pred_check
      _
    $region11: #{gsum_decoder_forward.19} parent=1 // pred_check_branch
      %20 = sbr.rel (0) target = $region13
    $region12: #{gsum_decoder_forward.19} parent=1 // pred_region
      _
    $region13: #{gsum_decoder_forward.19} parent=1 // pred_fallthru
      _
    // Predicated region
    $region14: #{gsum_decoder_forward.19} parent=1 // pred_check
      _
    $region15: #{gsum_decoder_forward.19} parent=1 // pred_check_branch
      %22 = sbr.rel (0) target = $region17
    $region16: #{gsum_decoder_forward.19} parent=1 // pred_region
      _
    $region17: #{gsum_decoder_forward.19} parent=1 // pred_fallthru
      _
    // Predicated region
    $region18: #{gsum_decoder_forward.19} parent=1 // pred_check
      _
    $region19: #{gsum_decoder_forward.19} parent=1 // pred_check_branch
      %24 = sbr.rel (0) target = $region21
    $region20: #{gsum_decoder_forward.19} parent=1 // pred_region
      _
    $region21: #{gsum_decoder_forward.19} parent=1 // pred_fallthru
      _
    // Predicated region
    $region22: #{gsum_decoder_forward.19} parent=1 // pred_check
      _
    $region23: #{gsum_decoder_forward.19} parent=1 // pred_check_branch
      %26 = sbr.rel (0) target = $region25
    $region24: #{gsum_decoder_forward.19} parent=1 // pred_region
      _
    $region25: #{gsum_decoder_forward.19} parent=1 // pred_fallthru
      _
    // Predicated region
    $region26: #{gsum_decoder_forward.19} parent=1 // pred_check
      _
    $region27: #{gsum_decoder_forward.19} parent=1 // pred_check_branch
      %28 = sbr.rel (0) target = $region29
    $region28: #{gsum_decoder_forward.19} parent=1 // pred_region
      _
    $region29: #{gsum_decoder_forward.19} parent=1 // pred_fallthru
      _
    // Predicated region
    $region30: #{gsum_decoder_forward.19} parent=1 // pred_check
      _
    $region31: #{gsum_decoder_forward.19} parent=1 // pred_check_branch
      %30 = sbr.rel (0) target = $region33
    $region32: #{gsum_decoder_forward.19} parent=1 // pred_region
      _
    $region33: #{gsum_decoder_forward.19} parent=1 // pred_fallthru
      _
    // Predicated region
    $region34: #{gsum_decoder_forward.19} parent=1 // pred_check
      _
    $region35: #{gsum_decoder_forward.19} parent=1 // pred_check_branch
      %32 = sbr.rel (0) target = $region37
    $region36: #{gsum_decoder_forward.19} parent=1 // pred_region
      _
    $region37: #{gsum_decoder_forward.19} parent=1 // pred_fallthru
      _
    %v34 = vld [vmem:[%s0] sm:$0xf]
    %v35 = vld [vmem:[%s0 + $0x4] sm:$0xf]
    %v36 = vld [vmem:[%s1] sm:$0xf]
    %v37 = vld [vmem:[%s1 + $0x4] sm:$0xf]
    %v38 = vld [vmem:[%s1 + $0x8] sm:$0xf]
    %v39 = vld [vmem:[%s1 + $0xc] sm:$0xf]
    %v40 = vld [vmem:[%s2] sm:$0x1]
    %v42 = vlaneseq
    %v43 = vshrl.u32 %v42, 7
    %v44 = vsub.s32 0, %v43
    %v45 = vrot.slane %v40, %v44
    %v49 = vunpack.c.l.b16 %v34
    %v50 = vunpack.c.l.b16 %v35
    %v51 = vpack.c.b16 %v50, %v49
    %v56 = vunpack.c.l.b16 %v36
    %v57 = vunpack.c.l.b16 %v37
    %v58 = vunpack.c.l.b16 %v38
    %v59 = vunpack.c.l.b16 %v39
    %v60 = vpack.c.b16 %v57, %v56
    %v61 = vpack.c.b16 %v59, %v58
    %vm64 = vcmask 261120
    %v66 = vsel %vm64, %v51, 0
    %68 = vmatprep.subr.bf16.mxu0 0
    %69 = vmatpush1.bf16.msra.mxu0 %v60
    %70 = vmatprep.subr.bf16.mxu0 0
    %71 = vmatpush1.bf16.msra.mxu0 %v61
    %72 = vmatprep.subr.bf16.mxu0 0
    %73 = vmatpush1.bf16.msra.mxu0 0
    %74 = vmatprep.subr.bf16.mxu0 0
    %75 = vmatpush1.bf16.msra.mxu0 0
    %76 = vmatprep.subr.bf16.mxu0 0
    %77 = vmatpush1.bf16.msra.mxu0 0
    %78 = vmatprep.subr.bf16.mxu0 0
    %79 = vmatpush1.bf16.msra.mxu0 0
    %80 = vmatprep.subr.bf16.mxu0 0
    %81 = vmatpush1.bf16.msra.mxu0 0
    %82 = vmatprep.subr.bf16.mxu0 0
    %83 = vmatpush1.bf16.msra.mxu0 0
    %84 = vmatprep.subr.bf16.mxu0 0
    %85 = vmatpush1.bf16.msra.mxu0 0
    %86 = vmatprep.subr.bf16.mxu0 0
    %87 = vmatpush1.bf16.msra.mxu0 0
    %88 = vmatprep.subr.bf16.mxu0 0
    %89 = vmatpush1.bf16.msra.mxu0 0
    %90 = vmatprep.subr.bf16.mxu0 0
    %91 = vmatpush1.bf16.msra.mxu0 0
    %92 = vmatprep.subr.bf16.mxu0 0
    %93 = vmatpush1.bf16.msra.mxu0 0
    %94 = vmatprep.subr.bf16.mxu0 0
    %95 = vmatpush1.bf16.msra.mxu0 0
    %96 = vmatprep.subr.bf16.mxu0 0
    %97 = vmatpush1.bf16.msra.mxu0 0
    %98 = vmatprep.subr.bf16.mxu0 0
    %99 = vmatpush1.bf16.msra.mxu0 0
    %100 = vmatprep.mubr.bf16.mxu0 0
    %101 = vmatmul.mubr.bf16.gmra.mrb[0].mxu0 %v66
    %v102 = vpop.f32.mrb[0].mxu0
    %v103 = vadd.f32 %v45, %v102
    %v104 = vpop.f32.mrb[0].mxu0
    %v105 = vpop.f32.mrb[0].mxu0
    %v106 = vadd.f32 %v45, %v105
    %v107 = vpop.f32.mrb[0].mxu0
    %108 = vdwg.mxu0
    %v109 = vmax.f32 %v103, 0.0
    %v110 = vmax.f32 %v106, 0.0
    %v111 = vpack.c.bf16 %v110, %v109
    %v112 = vld [vmem:[%s3] sm:$0xf]
    %v113 = vld [vmem:[%s3 + $0x4] sm:$0xf]
    %v114 = vld [vmem:[%s3 + $0x8] sm:$0xf]
    %v115 = vld [vmem:[%s3 + $0xc] sm:$0xf]
    %v116 = vld [vmem:[%s3 + $0x10] sm:$0xf]
    %v117 = vld [vmem:[%s3 + $0x14] sm:$0xf]
    %v118 = vld [vmem:[%s3 + $0x18] sm:$0xf]
    %v119 = vld [vmem:[%s3 + $0x1c] sm:$0xf]
    %v120 = vld [vmem:[%s4] sm:$0x1]
    %v122 = vlaneseq
    %v123 = vshrl.u32 %v122, 7
    %v124 = vsub.s32 0, %v123
    %v125 = vrot.slane %v120, %v124
    %v135 = vunpack.c.l.b16 %v112
    %v136 = vunpack.c.l.b16 %v113
    %v137 = vunpack.c.l.b16 %v114
    %v138 = vunpack.c.l.b16 %v115
    %v139 = vunpack.c.l.b16 %v116
    %v140 = vunpack.c.l.b16 %v117
    %v141 = vunpack.c.l.b16 %v118
    %v142 = vunpack.c.l.b16 %v119
    %v143 = vpack.c.b16 %v136, %v135
    %v144 = vpack.c.b16 %v138, %v137
    %v145 = vpack.c.b16 %v140, %v139
    %v146 = vpack.c.b16 %v142, %v141
    %vm151 = vcmask 523264
    %v153 = vsel %vm151, %v111, 0
    %155 = vmatprep.subr.bf16.mxu0 0
    %156 = vmatpush1.bf16.msra.mxu0 %v143
    %157 = vmatprep.subr.bf16.mxu0 0
    %158 = vmatpush1.bf16.msra.mxu0 %v144
    %159 = vmatprep.subr.bf16.mxu0 0
    %160 = vmatpush1.bf16.msra.mxu0 %v145
    %161 = vmatprep.subr.bf16.mxu0 0
    %162 = vmatpush1.bf16.msra.mxu0 %v146
    %163 = vmatprep.subr.bf16.mxu0 0
    %164 = vmatpush1.bf16.msra.mxu0 0
    %165 = vmatprep.subr.bf16.mxu0 0
    %166 = vmatpush1.bf16.msra.mxu0 0
    %167 = vmatprep.subr.bf16.mxu0 0
    %168 = vmatpush1.bf16.msra.mxu0 0
    %169 = vmatprep.subr.bf16.mxu0 0
    %170 = vmatpush1.bf16.msra.mxu0 0
    %171 = vmatprep.subr.bf16.mxu0 0
    %172 = vmatpush1.bf16.msra.mxu0 0
    %173 = vmatprep.subr.bf16.mxu0 0
    %174 = vmatpush1.bf16.msra.mxu0 0
    %175 = vmatprep.subr.bf16.mxu0 0
    %176 = vmatpush1.bf16.msra.mxu0 0
    %177 = vmatprep.subr.bf16.mxu0 0
    %178 = vmatpush1.bf16.msra.mxu0 0
    %179 = vmatprep.subr.bf16.mxu0 0
    %180 = vmatpush1.bf16.msra.mxu0 0
    %181 = vmatprep.subr.bf16.mxu0 0
    %182 = vmatpush1.bf16.msra.mxu0 0
    %183 = vmatprep.subr.bf16.mxu0 0
    %184 = vmatpush1.bf16.msra.mxu0 0
    %185 = vmatprep.subr.bf16.mxu0 0
    %186 = vmatpush1.bf16.msra.mxu0 0
    %187 = vmatprep.mubr.bf16.mxu0 0
    %188 = vmatmul.mubr.bf16.gmra.mrb[0].mxu0 %v153
    %v189 = vpop.f32.mrb[0].mxu0
    %v190 = vadd.f32 %v125, %v189
    %v191 = vpop.f32.mrb[0].mxu0
    %v192 = vpop.f32.mrb[0].mxu0
    %v193 = vadd.f32 %v125, %v192
    %v194 = vpop.f32.mrb[0].mxu0
    %195 = vdwg.mxu0
    %v196 = vunpack.c.l.bf16 %v34
    %v197 = vunpack.c.l.bf16 %v35
    %v198 = vadd.f32 %v196, %v190
    %v199 = vadd.f32 %v197, %v193
    %v200 = vsel %vm64, %v198, 0.0
    %201 = vadd.xlane.f32.xlu0 %v200
    %v202 = vpop.xlane.xlu0 %201
    %v203 = vsel %vm64, %v199, 0.0
    %204 = vadd.xlane.f32.xlu0 %v203
    %v205 = vpop.xlane.xlu0 %204
    %v206 = vrcp.pop 32.0
    %v207 = vmul.f32 %v202, %v206
    %v208 = vmul.f32 %v205, %v206
    %v209 = vsub.f32 %v198, %v207
    %v210 = vsub.f32 %v199, %v208
    %v211 = vmul.f32 %v209, %v209
    %v212 = vmul.f32 %v210, %v210
    %v213 = vsel %vm64, %v211, 0.0
    %214 = vadd.xlane.f32.xlu0 %v213
    %v215 = vpop.xlane.xlu0 %214
    %v216 = vsel %vm64, %v212, 0.0
    %217 = vadd.xlane.f32.xlu0 %v216
    %v218 = vpop.xlane.xlu0 %217
    %v219 = vmul.f32 %v215, %v206
    %v220 = vmul.f32 %v218, %v206
    %v221 = vadd.f32 %v219, 1e-05
    %v222 = vadd.f32 %v220, 1e-05
    %v223 = vrsqrt.pop %v221
    %v224 = vrsqrt.pop %v222
    %v225 = vmul.f32 %v209, %v223
    %v226 = vmul.f32 %v210, %v224
    %v227 = vld [vmem:[%s5] sm:$0x1]
    %v229 = vlaneseq
    %v230 = vshrl.u32 %v229, 7
    %v231 = vsub.s32 0, %v230
    %v232 = vrot.slane %v227, %v231
    %v234 = vmul.f32 %v225, %v232
    %v235 = vmul.f32 %v226, %v232
    %v236 = vld [vmem:[%s6] sm:$0x1]
    %v238 = vlaneseq
    %v239 = vshrl.u32 %v238, 7
    %v240 = vsub.s32 0, %v239
    %v241 = vrot.slane %v236, %v240
    %v243 = vadd.f32 %v234, %v241
    %v244 = vadd.f32 %v235, %v241
    %v245 = vsel %vm64, %v243, 0.0
    %246 = vadd.xlane.f32.xlu0 %v245
    %v247 = vpop.xlane.xlu0 %246
    %v248 = vsel %vm64, %v244, 0.0
    %249 = vadd.xlane.f32.xlu0 %v248
    %v250 = vpop.xlane.xlu0 %249
    %v251 = vmul.f32 %v247, %v206
    %v252 = vmul.f32 %v250, %v206
    %v253 = vsub.f32 %v243, %v251
    %v254 = vsub.f32 %v244, %v252
    %v255 = vmul.f32 %v253, %v253
    %v256 = vmul.f32 %v254, %v254
    %v257 = vsel %vm64, %v255, 0.0
    %258 = vadd.xlane.f32.xlu0 %v257
    %v259 = vpop.xlane.xlu0 %258
    %v260 = vsel %vm64, %v256, 0.0
    %261 = vadd.xlane.f32.xlu0 %v260
    %v262 = vpop.xlane.xlu0 %261
    %v263 = vmul.f32 %v259, %v206
    %v264 = vmul.f32 %v262, %v206
    %v265 = vadd.f32 %v263, 1e-05
    %v266 = vadd.f32 %v264, 1e-05
    %v267 = vrsqrt.pop %v265
    %v268 = vrsqrt.pop %v266
    %v269 = vmul.f32 %v253, %v267
    %v270 = vmul.f32 %v254, %v268
    %v271 = vld [vmem:[%s7] sm:$0x1]
    %v273 = vlaneseq
    %v274 = vshrl.u32 %v273, 7
    %v275 = vsub.s32 0, %v274
    %v276 = vrot.slane %v271, %v275
    %v278 = vmul.f32 %v269, %v276
    %v279 = vmul.f32 %v270, %v276
    %v280 = vld [vmem:[%s8] sm:$0x1]
    %v282 = vlaneseq
    %v283 = vshrl.u32 %v282, 7
    %v284 = vsub.s32 0, %v283
    %v285 = vrot.slane %v280, %v284
    %v287 = vadd.f32 %v278, %v285
    %v288 = vadd.f32 %v279, %v285
    %289 = vst.msk [vmem:[#allocation2] sm:$0xff] %vm64, %v287
    %290 = vst.msk [vmem:[#allocation2 + $0x8] sm:$0xff] %vm64, %v288
    // Predicated region
    $region38: #{gsum_decoder_forward.19} parent=1 // pred_check
      _
    $region39: #{gsum_decoder_forward.19} parent=1 // pred_check_branch
      %292 = sbr.rel (0) target = $region41
    $region40: #{gsum_decoder_forward.19} parent=1 // pred_region
      %s294 = ssub.s32 256, 256
      %295 = vsyncadd [#allocation3], %s294
      %s296 = sshll.u32 [#allocation2], 4
      %s297 = int_to_ptr.vmem [resolvable:$true] %s296
      %302 = dma.vmem_to_hbm [thread:$0]  %s297, 256, %s9, [#allocation3], 128, 128, 8
    $region41: #{gsum_decoder_forward.19} parent=1 // pred_fallthru
      _
    // Predicated region
    $region42: #{gsum_decoder_forward.19} parent=1 // pred_check
      _
    $region43: #{gsum_decoder_forward.19} parent=1 // pred_check_branch
      %304 = sbr.rel (0) target = $region45
    $region44: #{gsum_decoder_forward.19} parent=1 // pred_region
      %305 = dma.done [#allocation3], 256
    $region45: #{gsum_decoder_forward.19} parent=1 // pred_fallthru
      _
    %306 = vsyncpa [#allocation3], 1

</llo_original>
